<compile_context>
chip_gen: v6e
topology: v6e:2x2x1
jax: 0.10.0
libtpu: 0.0.40
codegen_flags: <defaults>
</compile_context>

<pallas_src>
import functools

import jax
import jax.numpy as jnp
from jax import lax
from jax.experimental import pallas as pl
from jax.experimental.pallas import tpu as pltpu


# ---------------------------------------------------------------------------
# Fused decoder kernel (single invocation, everything resident in VMEM)
# ---------------------------------------------------------------------------
def _decoder_kernel(
    # inputs
    inv_temp_ref,   # SMEM (1,)            1 / temp
    acts_ref,       # VMEM (3, S*BP, K)    [q_mu | q_lv | eps], time-major,
                    #                      batch padded to BP with zeros
    h0_ref,         # VMEM (BP, H)         initial hidden state (padded)
    w_ref,          # VMEM (RP, H)         packed weight slab (see init)
    # outputs
    out_ref,        # VMEM (3, S*BP, K)    [z | z_tilde | p_mu]
    hT_ref,         # VMEM (BP, H)         final hidden state
    # scratch
    gi_r, gi_z, gi_n,   # VMEM (S*BP, H)   shifted per-gate input pre-activations
    h_all,              # VMEM (S*BP, H)   per-step hidden states
    *, S, BP, H, K,
):
    f32 = jnp.float32

    # ---- unpack the packed weight slab (static slices, loaded once) --------
    o = 0
    wh_r = w_ref[o:o + H, :]; o += H        # (H, H)  W_hr^T
    wh_z = w_ref[o:o + H, :]; o += H        # (H, H)  W_hz^T
    wh_n = w_ref[o:o + H, :]; o += H        # (H, H)  W_hn^T
    wi_r = w_ref[o:o + K, :]; o += K        # (K, H)  W_ir^T
    wi_z = w_ref[o:o + K, :]; o += K        # (K, H)  W_iz^T
    wi_n = w_ref[o:o + K, :]; o += K        # (K, H)  W_in^T
    wmuT = w_ref[o:o + K, :]; o += K        # (K, H)  l_mu.weight (out, in)
    bi_r = w_ref[o:o + 1, :]; o += 1        # (1, H)  b_ir + b_hr
    bi_z = w_ref[o:o + 1, :]; o += 1        # (1, H)  b_iz + b_hz
    bi_n = w_ref[o:o + 1, :]; o += 1        # (1, H)  b_in
    bhn = w_ref[o:o + 1, :]; o += 1         # (1, H)  b_hn (gated by r)
    bmu = w_ref[o:o + 1, :K]                # (1, K)  l_mu bias

    # ---- reparameterization + tempered softmax (whole sequence at once) ----
    z = acts_ref[2] * jnp.exp(acts_ref[1] * 0.5) + acts_ref[0]     # (S*BP, K)
    out_ref[0] = z
    s = z * inv_temp_ref[0]
    s = s - jnp.max(s, axis=-1, keepdims=True)
    p = jnp.exp(s)
    out_ref[1] = p * pl.reciprocal(jnp.sum(p, axis=-1, keepdims=True),
                                   approx=True)

    # ---- hoisted input-gate matmuls, causal shift baked into the layout ----
    # Row-block t of gi_* holds gates(z[t-1]); block 0 is bias only (x_0 = 0).
    # All operands / stores are multiples of 8 sublanes -> fully aligned.
    for gref, wi_g, bi_g in ((gi_r, wi_r, bi_r),
                             (gi_z, wi_z, bi_z),
                             (gi_n, wi_n, bi_n)):
        gref[0:BP, :] = jnp.broadcast_to(bi_g, (BP, H))
        if S > 1:
            gref[BP:, :] = (
                jnp.dot(z[: (S - 1) * BP, :], wi_g, preferred_element_type=f32)
                + bi_g
            )

    # ---- serial GRU recurrence (critical path) ------------------------------
    # Aligned (BP, H) tiles per step; gates in separate buffers so there are
    # no sub-128 lane slices inside the loop.
    def step(t, h):
        off = pl.multiple_of(t * BP, BP)
        gh_r = jnp.dot(h, wh_r, preferred_element_type=f32)
        gh_z = jnp.dot(h, wh_z, preferred_element_type=f32)
        gh_n = jnp.dot(h, wh_n, preferred_element_type=f32)
        r = jax.nn.sigmoid(gi_r[pl.ds(off, BP), :] + gh_r)
        u = jax.nn.sigmoid(gi_z[pl.ds(off, BP), :] + gh_z)
        n = jnp.tanh(gi_n[pl.ds(off, BP), :] + r * (gh_n + bhn))
        h_new = (1.0 - u) * n + u * h
        h_all[pl.ds(off, BP), :] = h_new
        return h_new

    h_last = lax.fori_loop(0, S, step, h0_ref[...], unroll=True)
    hT_ref[...] = h_last                                       # written once

    # ---- prior mean head: one batched matmul over all timesteps -------------
    out_ref[2] = lax.dot_general(
        h_all[...], wmuT, dimension_numbers=(((1,), (1,)), ((), ())),
        preferred_element_type=f32,
    ) + bmu


def _fused_decoder_call(inv_temp, acts, h0, wslab, *, S, BP, H, K):
    SB = S * BP
    vmem = pl.BlockSpec(memory_space=pltpu.MemorySpace.VMEM)
    smem = pl.BlockSpec(memory_space=pltpu.MemorySpace.SMEM)
    return pl.pallas_call(
        functools.partial(_decoder_kernel, S=S, BP=BP, H=H, K=K),
        out_shape=(
            jax.ShapeDtypeStruct((3, SB, K), jnp.float32),   # z | z_tilde | p_mu
            jax.ShapeDtypeStruct((BP, H), jnp.float32),      # h_T
        ),
        in_specs=[smem, vmem, vmem, vmem],
        out_specs=(vmem, vmem),
        scratch_shapes=[
            pltpu.VMEM((SB, H), jnp.float32),   # gi_r
            pltpu.VMEM((SB, H), jnp.float32),   # gi_z
            pltpu.VMEM((SB, H), jnp.float32),   # gi_n
            pltpu.VMEM((SB, H), jnp.float32),   # h_all
        ],
        compiler_params=pltpu.CompilerParams(
            vmem_limit_bytes=32 * 1024 * 1024,
        ),
    )(inv_temp, acts, h0, wslab)


# ---------------------------------------------------------------------------
# Decoder forward (thin jitted wrapper: layout plumbing + covariance in XLA)
# ---------------------------------------------------------------------------
def decoder_forward(params, q_mu, q_lv, h, eps):
    bsz, S, K = q_mu.shape
    H = params["gru_wh"].shape[0]
    BP = ((bsz + 7) // 8) * 8          # pad batch to a full sublane tile

    inv_temp = (jnp.float32(1.0) /
                jnp.asarray(params["temp"], jnp.float32)).reshape(1)

    def to_tm(x):   # (B, S, K) -> time-major flat (S*BP, K), zero-padded batch
        x = jnp.transpose(x, (1, 0, 2))
        if BP != bsz:
            x = jnp.pad(x, ((0, 0), (0, BP - bsz), (0, 0)))
        return x.reshape(S * BP, K)

    acts = jnp.stack([to_tm(q_mu), to_tm(q_lv), to_tm(eps)], axis=0)
    h0 = h[0]
    if BP != bsz:
        h0 = jnp.pad(h0, ((0, BP - bsz), (0, 0)))

    out3, hT = _fused_decoder_call(inv_temp, acts, h0, params["wslab"],
                                   S=S, BP=BP, H=H, K=K)

    def from_tm(x):  # (S*BP, K) -> (B, S, K)
        return jnp.transpose(x.reshape(S, BP, K)[:, :bsz, :], (1, 0, 2))

    z = from_tm(out3[0])
    z_tilde = from_tm(out3[1])
    p_mu = from_tm(out3[2])
    h_new = hT[:bsz][None]

    # Covariance is independent of the GRU path; keep it in plain XLA so it
    # can overlap with the Pallas kernel (and use the second core on v7x).
    m = jnp.dot(params["W"], params["B"], preferred_element_type=jnp.float32)
    c = (jnp.dot(m, m.T, preferred_element_type=jnp.float32)
         + 1e-4 * jnp.eye(m.shape[0], dtype=jnp.float32))

    return c, z, z_tilde, p_mu, params["p_lv"], h_new


# ---------------------------------------------------------------------------
# Deterministic parameter init.  Packs the kernel weight slab ONCE here so the
# fused call sees a single weight operand (one DMA).  Unpacked copies are kept
# only for the pure-JAX reference.
# ---------------------------------------------------------------------------
def init_decoder_params(key, n_latent, n_hidden, n_dims, temp):
    ks = jax.random.split(key, 8)
    H, K, D = n_hidden, n_latent, n_dims
    assert K <= H, "weight-slab packing assumes n_latent <= n_hidden"

    def xavier_normal(k, shape):          # torch layout: (out, in)
        fan_out, fan_in = shape
        std = (2.0 / (fan_in + fan_out)) ** 0.5
        return (jax.random.normal(k, shape) * std).astype(jnp.float32)

    def xavier_uniform(k, shape):
        fan_out, fan_in = shape
        a = (6.0 / (fan_in + fan_out)) ** 0.5
        return jax.random.uniform(k, shape, jnp.float32, -a, a)

    # torch-layout GRU / linear params (gate order r | z | n)
    w_ih = xavier_normal(ks[0], (3 * H, K))
    w_hh = xavier_normal(ks[1], (3 * H, H))
    bound = 1.0 / (H ** 0.5)
    b_ih = jax.random.uniform(ks[2], (3 * H,), jnp.float32, -bound, bound)
    b_hh = jax.random.uniform(ks[3], (3 * H,), jnp.float32, -bound, bound)
    w_lmu = xavier_uniform(ks[4], (K, H))
    b_lmu = jax.random.uniform(ks[5], (K,), jnp.float32, -bound, bound)

    # ---- single packed weight slab (lane width H), gate-major blocks -------
    rows = []
    for g in range(3):                                        # W_hh^T per gate
        rows.append(jnp.transpose(w_hh[g * H:(g + 1) * H, :]))   # (H, H)
    for g in range(3):                                        # W_ih^T per gate
        rows.append(jnp.transpose(w_ih[g * H:(g + 1) * H, :]))   # (K, H)
    rows.append(w_lmu)                                        # (K, H)
    rows.append((b_ih[:H] + b_hh[:H]).reshape(1, H))          # bi_r
    rows.append((b_ih[H:2 * H] + b_hh[H:2 * H]).reshape(1, H))  # bi_z
    rows.append(b_ih[2 * H:].reshape(1, H))                   # bi_n
    rows.append(b_hh[2 * H:].reshape(1, H))                   # b_hn
    rows.append(jnp.pad(b_lmu, (0, H - K)).reshape(1, H))     # b_mu (padded)
    wslab = jnp.concatenate(rows, axis=0)
    pad = (-wslab.shape[0]) % 8
    if pad:
        wslab = jnp.pad(wslab, ((0, pad), (0, 0)))

    params = {
        "temp": float(temp),
        "wslab": wslab,                                       # kernel operand
        # reference-only unpacked copies (never passed to the kernel):
        "gru_wi": jnp.transpose(w_ih),                        # (K, 3H)
        "gru_wh": jnp.transpose(w_hh),                        # (H, 3H)
        "gru_bi": jnp.concatenate(
            [b_ih[:2 * H] + b_hh[:2 * H], b_ih[2 * H:]]).reshape(1, 3 * H),
        "gru_bhn": b_hh[2 * H:].reshape(1, H),
        "w_mu": jnp.transpose(w_lmu),                         # (H, K)
        "b_mu": b_lmu.reshape(1, K),
        "p_lv": jnp.zeros((K,), jnp.float32),
        "W": (jax.random.normal(ks[6], (D, K)) * 0.1).astype(jnp.float32),
        "B": (jax.random.normal(ks[7], (K, D)) * 0.1).astype(jnp.float32),
    }
    return params


# ---------------------------------------------------------------------------
# Pure-JAX reference of the same forward math (for numerical validation)
# ---------------------------------------------------------------------------
def _reference_forward(params, q_mu, q_lv, h, eps):
    temp = params["temp"]
    z = eps * jnp.exp(q_lv * 0.5) + q_mu
    z_tilde = jax.nn.softmax(z / temp, axis=-1)
    z_off = jnp.concatenate([jnp.zeros_like(z[:, :1]), z[:, :-1]], axis=1)
    wi, wh = params["gru_wi"], params["gru_wh"]
    bi, bhn = params["gru_bi"][0], params["gru_bhn"][0]
    H = wh.shape[0]

    def cell(hc, x_t):
        gi = x_t @ wi + bi
        gh = hc @ wh
        r = jax.nn.sigmoid(gi[:, :H] + gh[:, :H])
        u = jax.nn.sigmoid(gi[:, H:2 * H] + gh[:, H:2 * H])
        n = jnp.tanh(gi[:, 2 * H:] + r * (gh[:, 2 * H:] + bhn))
        hn = (1.0 - u) * n + u * hc
        return hn, hn

    hT, outs = lax.scan(cell, h[0], jnp.transpose(z_off, (1, 0, 2)))
    out = jnp.transpose(outs, (1, 0, 2))
    p_mu = out @ params["w_mu"] + params["b_mu"][0]
    m = params["W"] @ params["B"]
    c = m @ m.T + 1e-4 * jnp.eye(m.shape[0], dtype=jnp.float32)
    return c, z, z_tilde, p_mu, params["p_lv"], hT[None]


if __name__ == "__main__":
    batch, seq = 2, 8
    n_latent, n_hidden, n_layers, n_dims = 8, 32, 1, 32
    temp = 0.5

    root = jax.random.PRNGKey(0)
    k_param, k_mu, k_lv, k_eps = jax.random.split(root, 4)

    params = init_decoder_params(k_param, n_latent, n_hidden, n_dims, temp)

    q_mu = jax.random.normal(k_mu, (batch, seq, n_latent), jnp.float32)
    q_lv = jax.random.normal(k_lv, (batch, seq, n_latent), jnp.float32) * 0.1
    h0 = jnp.zeros((n_layers, batch, n_hidden), jnp.float32)   # init_hidden
    eps = jax.random.normal(k_eps, (batch, seq, n_latent), jnp.float32)

    fwd = jax.jit(decoder_forward)
    c, z, z_tilde, p_mu, p_lv, h_new = fwd(params, q_mu, q_lv, h0, eps)
    jax.block_until_ready((c, z, z_tilde, p_mu, p_lv, h_new))

    assert c.shape == (n_dims, n_dims)
    assert z.shape == (batch, seq, n_latent)
    assert z_tilde.shape == (batch, seq, n_latent)
    assert p_mu.shape == (batch, seq, n_latent)
    assert p_lv.shape == (n_latent,)
    assert h_new.shape == (n_layers, batch, n_hidden)

    rc, rz, rzt, rpmu, _, rh = _reference_forward(params, q_mu, q_lv, h0, eps)
    checks = (
        ("c", c, rc, 2e-4),
        ("z", z, rz, 2e-4),
        ("z_tilde", z_tilde, rzt, 1e-2),   # EUP approx reciprocal in softmax
        ("p_mu", p_mu, rpmu, 2e-4),
        ("h", h_new, rh, 2e-4),
    )
    for name, got, ref, tol in checks:
        assert jnp.allclose(got, ref, atol=tol, rtol=tol), (
            f"mismatch vs reference: {name}")

    print("KERNEL_OK")
</pallas_src>

<mosaic_0001>
module attributes {stable_mosaic.version = 11 : i64} {
  func.func @_decoder_kernel(%arg0: memref<1xf32, #tpu.memory_space<smem>>, %arg1: memref<3x64x8xf32, #tpu.memory_space<vmem>>, %arg2: memref<8x32xf32, #tpu.memory_space<vmem>>, %arg3: memref<136x32xf32, #tpu.memory_space<vmem>>, %arg4: memref<3x64x8xf32, #tpu.memory_space<vmem>>, %arg5: memref<8x32xf32, #tpu.memory_space<vmem>>, %arg6: memref<64x32xf32, #tpu.memory_space<vmem>>, %arg7: memref<64x32xf32, #tpu.memory_space<vmem>>, %arg8: memref<64x32xf32, #tpu.memory_space<vmem>>, %arg9: memref<64x32xf32, #tpu.memory_space<vmem>>) attributes {dimension_semantics = [], scalar_prefetch = 0 : i64, scratch_operands = 4 : i64, tpu.core_type = #tpu.core_type<tc>} {
    %c0 = arith.constant 0 : index
    %c0_0 = arith.constant 0 : index
    %0 = vector.load %arg3[%c0, %c0_0] : memref<136x32xf32, #tpu.memory_space<vmem>>, vector<32x32xf32>
    %c32 = arith.constant 32 : index
    %c0_1 = arith.constant 0 : index
    %1 = vector.load %arg3[%c32, %c0_1] : memref<136x32xf32, #tpu.memory_space<vmem>>, vector<32x32xf32>
    %c64 = arith.constant 64 : index
    %c0_2 = arith.constant 0 : index
    %2 = vector.load %arg3[%c64, %c0_2] : memref<136x32xf32, #tpu.memory_space<vmem>>, vector<32x32xf32>
    %c96 = arith.constant 96 : index
    %c0_3 = arith.constant 0 : index
    %3 = vector.load %arg3[%c96, %c0_3] : memref<136x32xf32, #tpu.memory_space<vmem>>, vector<8x32xf32>
    %c104 = arith.constant 104 : index
    %c0_4 = arith.constant 0 : index
    %4 = vector.load %arg3[%c104, %c0_4] : memref<136x32xf32, #tpu.memory_space<vmem>>, vector<8x32xf32>
    %c112 = arith.constant 112 : index
    %c0_5 = arith.constant 0 : index
    %5 = vector.load %arg3[%c112, %c0_5] : memref<136x32xf32, #tpu.memory_space<vmem>>, vector<8x32xf32>
    %c120 = arith.constant 120 : index
    %c0_6 = arith.constant 0 : index
    %6 = vector.load %arg3[%c120, %c0_6] : memref<136x32xf32, #tpu.memory_space<vmem>>, vector<8x32xf32>
    %c128 = arith.constant 128 : index
    %c0_7 = arith.constant 0 : index
    %7 = vector.load %arg3[%c128, %c0_7] : memref<136x32xf32, #tpu.memory_space<vmem>>, vector<1x32xf32>
    %c129 = arith.constant 129 : index
    %c0_8 = arith.constant 0 : index
    %8 = vector.load %arg3[%c129, %c0_8] : memref<136x32xf32, #tpu.memory_space<vmem>>, vector<1x32xf32>
    %c130 = arith.constant 130 : index
    %c0_9 = arith.constant 0 : index
    %9 = vector.load %arg3[%c130, %c0_9] : memref<136x32xf32, #tpu.memory_space<vmem>>, vector<1x32xf32>
    %c131 = arith.constant 131 : index
    %c0_10 = arith.constant 0 : index
    %10 = vector.load %arg3[%c131, %c0_10] : memref<136x32xf32, #tpu.memory_space<vmem>>, vector<1x32xf32>
    %c132 = arith.constant 132 : index
    %c0_11 = arith.constant 0 : index
    %11 = vector.load %arg3[%c132, %c0_11] : memref<136x32xf32, #tpu.memory_space<vmem>>, vector<1x8xf32>
    %c2 = arith.constant 2 : index
    %c0_12 = arith.constant 0 : index
    %c0_13 = arith.constant 0 : index
    %12 = vector.load %arg1[%c2, %c0_12, %c0_13] : memref<3x64x8xf32, #tpu.memory_space<vmem>>, vector<1x64x8xf32>
    %13 = vector.shape_cast %12 : vector<1x64x8xf32> to vector<64x8xf32>
    %c1 = arith.constant 1 : index
    %c0_14 = arith.constant 0 : index
    %c0_15 = arith.constant 0 : index
    %14 = vector.load %arg1[%c1, %c0_14, %c0_15] : memref<3x64x8xf32, #tpu.memory_space<vmem>>, vector<1x64x8xf32>
    %15 = vector.shape_cast %14 : vector<1x64x8xf32> to vector<64x8xf32>
    %cst = arith.constant 5.000000e-01 : f32
    %16 = vector.broadcast %cst : f32 to vector<64x8xf32>
    %17 = arith.mulf %15, %16 : vector<64x8xf32>
    %18 = math.exp %17 : vector<64x8xf32>
    %19 = arith.mulf %13, %18 : vector<64x8xf32>
    %c0_16 = arith.constant 0 : index
    %c0_17 = arith.constant 0 : index
    %c0_18 = arith.constant 0 : index
    %20 = vector.load %arg1[%c0_16, %c0_17, %c0_18] : memref<3x64x8xf32, #tpu.memory_space<vmem>>, vector<1x64x8xf32>
    %21 = vector.shape_cast %20 : vector<1x64x8xf32> to vector<64x8xf32>
    %22 = arith.addf %19, %21 : vector<64x8xf32>
    %c0_19 = arith.constant 0 : index
    %c0_20 = arith.constant 0 : index
    %c0_21 = arith.constant 0 : index
    %23 = vector.load %arg4[%c0_19, %c0_20, %c0_21] : memref<3x64x8xf32, #tpu.memory_space<vmem>>, vector<1x64x8xf32>
    %24 = vector.shape_cast %23 : vector<1x64x8xf32> to vector<64x8xf32>
    %25 = vector.shape_cast %22 : vector<64x8xf32> to vector<1x64x8xf32>
    tpu.vector_store %arg4[%c0_19, %c0_20, %c0_21], %25 {strides = array<i32>} : memref<3x64x8xf32, #tpu.memory_space<vmem>>, vector<1x64x8xf32>,
    %c0_22 = arith.constant 0 : index
    %26 = memref.load %arg0[%c0_22] : memref<1xf32, #tpu.memory_space<smem>>
    %27 = vector.broadcast %26 : f32 to vector<64x8xf32>
    %28 = arith.mulf %22, %27 : vector<64x8xf32>
    %cst_23 = arith.constant dense<0xFF800000> : vector<64xf32>
    %29 = vector.multi_reduction <maximumf>, %28, %cst_23 [1] : vector<64x8xf32> to vector<64xf32>
    %30 = vector.shape_cast %29 : vector<64xf32> to vector<64x1xf32>
    %31 = vector.broadcast %30 : vector<64x1xf32> to vector<64x8xf32>
    %32 = arith.subf %28, %31 : vector<64x8xf32>
    %33 = math.exp %32 : vector<64x8xf32>
    %cst_24 = arith.constant dense<0.000000e+00> : vector<64xf32>
    %34 = vector.multi_reduction <add>, %33, %cst_24 [1] : vector<64x8xf32> to vector<64xf32>
    %35 = vector.shape_cast %34 : vector<64xf32> to vector<64x1xf32>
    %36 = tpu.reciprocal %35 {approx = true} : vector<64x1xf32> -> vector<64x1xf32>
    %37 = vector.broadcast %36 : vector<64x1xf32> to vector<64x8xf32>
    %38 = arith.mulf %33, %37 : vector<64x8xf32>
    %c1_25 = arith.constant 1 : index
    %c0_26 = arith.constant 0 : index
    %c0_27 = arith.constant 0 : index
    %39 = vector.load %arg4[%c1_25, %c0_26, %c0_27] : memref<3x64x8xf32, #tpu.memory_space<vmem>>, vector<1x64x8xf32>
    %40 = vector.shape_cast %39 : vector<1x64x8xf32> to vector<64x8xf32>
    %41 = vector.shape_cast %38 : vector<64x8xf32> to vector<1x64x8xf32>
    tpu.vector_store %arg4[%c1_25, %c0_26, %c0_27], %41 {strides = array<i32>} : memref<3x64x8xf32, #tpu.memory_space<vmem>>, vector<1x64x8xf32>,
    %42 = vector.shape_cast %7 : vector<1x32xf32> to vector<1x32xf32>
    %43 = vector.broadcast %42 : vector<1x32xf32> to vector<8x32xf32>
    %c0_28 = arith.constant 0 : index
    %c0_29 = arith.constant 0 : index
    %44 = vector.load %arg6[%c0_28, %c0_29] : memref<64x32xf32, #tpu.memory_space<vmem>>, vector<8x32xf32>
    tpu.vector_store %arg6[%c0_28, %c0_29], %43 {strides = array<i32>} : memref<64x32xf32, #tpu.memory_space<vmem>>, vector<8x32xf32>,
    %45 = vector.extract_strided_slice %22 {offsets = [0, 0], sizes = [56, 8], strides = [1, 1]} : vector<64x8xf32> to vector<56x8xf32>
    %cst_30 = arith.constant dense<0.000000e+00> : vector<56x32xf32>
    %46 = tpu.matmul %45, %3, %cst_30 {dimension_numbers = #tpu.dot_dimension_numbers<[1], [0], [0], [1], [0, 0, 1, 1], [], []>} : vector<56x8xf32>, vector<8x32xf32>, vector<56x32xf32> -> vector<56x32xf32>
    %47 = vector.broadcast %7 : vector<1x32xf32> to vector<56x32xf32>
    %48 = arith.addf %46, %47 : vector<56x32xf32>
    %c8 = arith.constant 8 : index
    %c0_31 = arith.constant 0 : index
    %49 = vector.load %arg6[%c8, %c0_31] : memref<64x32xf32, #tpu.memory_space<vmem>>, vector<56x32xf32>
    tpu.vector_store %arg6[%c8, %c0_31], %48 {strides = array<i32>} : memref<64x32xf32, #tpu.memory_space<vmem>>, vector<56x32xf32>,
    %50 = vector.shape_cast %8 : vector<1x32xf32> to vector<1x32xf32>
    %51 = vector.broadcast %50 : vector<1x32xf32> to vector<8x32xf32>
    %c0_32 = arith.constant 0 : index
    %c0_33 = arith.constant 0 : index
    %52 = vector.load %arg7[%c0_32, %c0_33] : memref<64x32xf32, #tpu.memory_space<vmem>>, vector<8x32xf32>
    tpu.vector_store %arg7[%c0_32, %c0_33], %51 {strides = array<i32>} : memref<64x32xf32, #tpu.memory_space<vmem>>, vector<8x32xf32>,
    %53 = vector.extract_strided_slice %22 {offsets = [0, 0], sizes = [56, 8], strides = [1, 1]} : vector<64x8xf32> to vector<56x8xf32>
    %cst_34 = arith.constant dense<0.000000e+00> : vector<56x32xf32>
    %54 = tpu.matmul %53, %4, %cst_34 {dimension_numbers = #tpu.dot_dimension_numbers<[1], [0], [0], [1], [0, 0, 1, 1], [], []>} : vector<56x8xf32>, vector<8x32xf32>, vector<56x32xf32> -> vector<56x32xf32>
    %55 = vector.broadcast %8 : vector<1x32xf32> to vector<56x32xf32>
    %56 = arith.addf %54, %55 : vector<56x32xf32>
    %c8_35 = arith.constant 8 : index
    %c0_36 = arith.constant 0 : index
    %57 = vector.load %arg7[%c8_35, %c0_36] : memref<64x32xf32, #tpu.memory_space<vmem>>, vector<56x32xf32>
    tpu.vector_store %arg7[%c8_35, %c0_36], %56 {strides = array<i32>} : memref<64x32xf32, #tpu.memory_space<vmem>>, vector<56x32xf32>,
    %58 = vector.shape_cast %9 : vector<1x32xf32> to vector<1x32xf32>
    %59 = vector.broadcast %58 : vector<1x32xf32> to vector<8x32xf32>
    %c0_37 = arith.constant 0 : index
    %c0_38 = arith.constant 0 : index
    %60 = vector.load %arg8[%c0_37, %c0_38] : memref<64x32xf32, #tpu.memory_space<vmem>>, vector<8x32xf32>
    tpu.vector_store %arg8[%c0_37, %c0_38], %59 {strides = array<i32>} : memref<64x32xf32, #tpu.memory_space<vmem>>, vector<8x32xf32>,
    %61 = vector.extract_strided_slice %22 {offsets = [0, 0], sizes = [56, 8], strides = [1, 1]} : vector<64x8xf32> to vector<56x8xf32>
    %cst_39 = arith.constant dense<0.000000e+00> : vector<56x32xf32>
    %62 = tpu.matmul %61, %5, %cst_39 {dimension_numbers = #tpu.dot_dimension_numbers<[1], [0], [0], [1], [0, 0, 1, 1], [], []>} : vector<56x8xf32>, vector<8x32xf32>, vector<56x32xf32> -> vector<56x32xf32>
    %63 = vector.broadcast %9 : vector<1x32xf32> to vector<56x32xf32>
    %64 = arith.addf %62, %63 : vector<56x32xf32>
    %c8_40 = arith.constant 8 : index
    %c0_41 = arith.constant 0 : index
    %65 = vector.load %arg8[%c8_40, %c0_41] : memref<64x32xf32, #tpu.memory_space<vmem>>, vector<56x32xf32>
    tpu.vector_store %arg8[%c8_40, %c0_41], %64 {strides = array<i32>} : memref<64x32xf32, #tpu.memory_space<vmem>>, vector<56x32xf32>,
    %c0_42 = arith.constant 0 : index
    %c0_43 = arith.constant 0 : index
    %66 = vector.load %arg2[%c0_42, %c0_43] : memref<8x32xf32, #tpu.memory_space<vmem>>, vector<8x32xf32>
    %c0_i32 = arith.constant 0 : i32
    %c8_i32 = arith.constant 8 : i32
    %67 = arith.muli %c0_i32, %c8_i32 : i32
    %68 = tpu.assume_multiple %67, 8 : i32
    %cst_44 = arith.constant dense<0.000000e+00> : vector<8x32xf32>
    %69 = tpu.matmul %66, %0, %cst_44 {dimension_numbers = #tpu.dot_dimension_numbers<[1], [0], [0], [1], [0, 0, 1, 1], [], []>} : vector<8x32xf32>, vector<32x32xf32>, vector<8x32xf32> -> vector<8x32xf32>
    %cst_45 = arith.constant dense<0.000000e+00> : vector<8x32xf32>
    %70 = tpu.matmul %66, %1, %cst_45 {dimension_numbers = #tpu.dot_dimension_numbers<[1], [0], [0], [1], [0, 0, 1, 1], [], []>} : vector<8x32xf32>, vector<32x32xf32>, vector<8x32xf32> -> vector<8x32xf32>
    %cst_46 = arith.constant dense<0.000000e+00> : vector<8x32xf32>
    %71 = tpu.matmul %66, %2, %cst_46 {dimension_numbers = #tpu.dot_dimension_numbers<[1], [0], [0], [1], [0, 0, 1, 1], [], []>} : vector<8x32xf32>, vector<32x32xf32>, vector<8x32xf32> -> vector<8x32xf32>
    %72 = arith.index_cast %68 : i32 to index
    %c0_47 = arith.constant 0 : index
    %73 = vector.load %arg6[%72, %c0_47] : memref<64x32xf32, #tpu.memory_space<vmem>>, vector<8x32xf32>
    %74 = arith.addf %73, %69 : vector<8x32xf32>
    %75 = arith.negf %74 : vector<8x32xf32>
    %76 = math.exp %75 : vector<8x32xf32>
    %cst_48 = arith.constant 1.000000e+00 : f32
    %77 = vector.broadcast %cst_48 : f32 to vector<8x32xf32>
    %78 = arith.addf %77, %76 : vector<8x32xf32>
    %79 = arith.divf %77, %78 : vector<8x32xf32>
    %80 = arith.index_cast %68 : i32 to index
    %c0_49 = arith.constant 0 : index
    %81 = vector.load %arg7[%80, %c0_49] : memref<64x32xf32, #tpu.memory_space<vmem>>, vector<8x32xf32>
    %82 = arith.addf %81, %70 : vector<8x32xf32>
    %83 = arith.negf %82 : vector<8x32xf32>
    %84 = math.exp %83 : vector<8x32xf32>
    %cst_50 = arith.constant 1.000000e+00 : f32
    %85 = vector.broadcast %cst_50 : f32 to vector<8x32xf32>
    %86 = arith.addf %85, %84 : vector<8x32xf32>
    %87 = arith.divf %85, %86 : vector<8x32xf32>
    %88 = arith.index_cast %68 : i32 to index
    %c0_51 = arith.constant 0 : index
    %89 = vector.load %arg8[%88, %c0_51] : memref<64x32xf32, #tpu.memory_space<vmem>>, vector<8x32xf32>
    %90 = vector.broadcast %10 : vector<1x32xf32> to vector<8x32xf32>
    %91 = arith.addf %71, %90 : vector<8x32xf32>
    %92 = arith.mulf %79, %91 : vector<8x32xf32>
    %93 = arith.addf %89, %92 : vector<8x32xf32>
    %94 = math.tanh %93 : vector<8x32xf32>
    %cst_52 = arith.constant 1.000000e+00 : f32
    %95 = vector.broadcast %cst_52 : f32 to vector<8x32xf32>
    %96 = arith.subf %95, %87 : vector<8x32xf32>
    %97 = arith.mulf %96, %94 : vector<8x32xf32>
    %98 = arith.mulf %87, %66 : vector<8x32xf32>
    %99 = arith.addf %97, %98 : vector<8x32xf32>
    %100 = arith.index_cast %68 : i32 to index
    %c0_53 = arith.constant 0 : index
    %101 = vector.load %arg9[%100, %c0_53] : memref<64x32xf32, #tpu.memory_space<vmem>>, vector<8x32xf32>
    tpu.vector_store %arg9[%100, %c0_53], %99 {strides = array<i32>} : memref<64x32xf32, #tpu.memory_space<vmem>>, vector<8x32xf32>,
    %c1_i32 = arith.constant 1 : i32
    %c8_i32_54 = arith.constant 8 : i32
    %102 = arith.muli %c1_i32, %c8_i32_54 : i32
    %103 = tpu.assume_multiple %102, 8 : i32
    %cst_55 = arith.constant dense<0.000000e+00> : vector<8x32xf32>
    %104 = tpu.matmul %99, %0, %cst_55 {dimension_numbers = #tpu.dot_dimension_numbers<[1], [0], [0], [1], [0, 0, 1, 1], [], []>} : vector<8x32xf32>, vector<32x32xf32>, vector<8x32xf32> -> vector<8x32xf32>
    %cst_56 = arith.constant dense<0.000000e+00> : vector<8x32xf32>
    %105 = tpu.matmul %99, %1, %cst_56 {dimension_numbers = #tpu.dot_dimension_numbers<[1], [0], [0], [1], [0, 0, 1, 1], [], []>} : vector<8x32xf32>, vector<32x32xf32>, vector<8x32xf32> -> vector<8x32xf32>
    %cst_57 = arith.constant dense<0.000000e+00> : vector<8x32xf32>
    %106 = tpu.matmul %99, %2, %cst_57 {dimension_numbers = #tpu.dot_dimension_numbers<[1], [0], [0], [1], [0, 0, 1, 1], [], []>} : vector<8x32xf32>, vector<32x32xf32>, vector<8x32xf32> -> vector<8x32xf32>
    %107 = arith.index_cast %103 : i32 to index
    %c0_58 = arith.constant 0 : index
    %108 = vector.load %arg6[%107, %c0_58] : memref<64x32xf32, #tpu.memory_space<vmem>>, vector<8x32xf32>
    %109 = arith.addf %108, %104 : vector<8x32xf32>
    %110 = arith.negf %109 : vector<8x32xf32>
    %111 = math.exp %110 : vector<8x32xf32>
    %cst_59 = arith.constant 1.000000e+00 : f32
    %112 = vector.broadcast %cst_59 : f32 to vector<8x32xf32>
    %113 = arith.addf %112, %111 : vector<8x32xf32>
    %114 = arith.divf %112, %113 : vector<8x32xf32>
    %115 = arith.index_cast %103 : i32 to index
    %c0_60 = arith.constant 0 : index
    %116 = vector.load %arg7[%115, %c0_60] : memref<64x32xf32, #tpu.memory_space<vmem>>, vector<8x32xf32>
    %117 = arith.addf %116, %105 : vector<8x32xf32>
    %118 = arith.negf %117 : vector<8x32xf32>
    %119 = math.exp %118 : vector<8x32xf32>
    %cst_61 = arith.constant 1.000000e+00 : f32
    %120 = vector.broadcast %cst_61 : f32 to vector<8x32xf32>
    %121 = arith.addf %120, %119 : vector<8x32xf32>
    %122 = arith.divf %120, %121 : vector<8x32xf32>
    %123 = arith.index_cast %103 : i32 to index
    %c0_62 = arith.constant 0 : index
    %124 = vector.load %arg8[%123, %c0_62] : memref<64x32xf32, #tpu.memory_space<vmem>>, vector<8x32xf32>
    %125 = vector.broadcast %10 : vector<1x32xf32> to vector<8x32xf32>
    %126 = arith.addf %106, %125 : vector<8x32xf32>
    %127 = arith.mulf %114, %126 : vector<8x32xf32>
    %128 = arith.addf %124, %127 : vector<8x32xf32>
    %129 = math.tanh %128 : vector<8x32xf32>
    %cst_63 = arith.constant 1.000000e+00 : f32
    %130 = vector.broadcast %cst_63 : f32 to vector<8x32xf32>
    %131 = arith.subf %130, %122 : vector<8x32xf32>
    %132 = arith.mulf %131, %129 : vector<8x32xf32>
    %133 = arith.mulf %122, %99 : vector<8x32xf32>
    %134 = arith.addf %132, %133 : vector<8x32xf32>
    %135 = arith.index_cast %103 : i32 to index
    %c0_64 = arith.constant 0 : index
    %136 = vector.load %arg9[%135, %c0_64] : memref<64x32xf32, #tpu.memory_space<vmem>>, vector<8x32xf32>
    tpu.vector_store %arg9[%135, %c0_64], %134 {strides = array<i32>} : memref<64x32xf32, #tpu.memory_space<vmem>>, vector<8x32xf32>,
    %c2_i32 = arith.constant 2 : i32
    %c8_i32_65 = arith.constant 8 : i32
    %137 = arith.muli %c2_i32, %c8_i32_65 : i32
    %138 = tpu.assume_multiple %137, 8 : i32
    %cst_66 = arith.constant dense<0.000000e+00> : vector<8x32xf32>
    %139 = tpu.matmul %134, %0, %cst_66 {dimension_numbers = #tpu.dot_dimension_numbers<[1], [0], [0], [1], [0, 0, 1, 1], [], []>} : vector<8x32xf32>, vector<32x32xf32>, vector<8x32xf32> -> vector<8x32xf32>
    %cst_67 = arith.constant dense<0.000000e+00> : vector<8x32xf32>
    %140 = tpu.matmul %134, %1, %cst_67 {dimension_numbers = #tpu.dot_dimension_numbers<[1], [0], [0], [1], [0, 0, 1, 1], [], []>} : vector<8x32xf32>, vector<32x32xf32>, vector<8x32xf32> -> vector<8x32xf32>
    %cst_68 = arith.constant dense<0.000000e+00> : vector<8x32xf32>
    %141 = tpu.matmul %134, %2, %cst_68 {dimension_numbers = #tpu.dot_dimension_numbers<[1], [0], [0], [1], [0, 0, 1, 1], [], []>} : vector<8x32xf32>, vector<32x32xf32>, vector<8x32xf32> -> vector<8x32xf32>
    %142 = arith.index_cast %138 : i32 to index
    %c0_69 = arith.constant 0 : index
    %143 = vector.load %arg6[%142, %c0_69] : memref<64x32xf32, #tpu.memory_space<vmem>>, vector<8x32xf32>
    %144 = arith.addf %143, %139 : vector<8x32xf32>
    %145 = arith.negf %144 : vector<8x32xf32>
    %146 = math.exp %145 : vector<8x32xf32>
    %cst_70 = arith.constant 1.000000e+00 : f32
    %147 = vector.broadcast %cst_70 : f32 to vector<8x32xf32>
    %148 = arith.addf %147, %146 : vector<8x32xf32>
    %149 = arith.divf %147, %148 : vector<8x32xf32>
    %150 = arith.index_cast %138 : i32 to index
    %c0_71 = arith.constant 0 : index
    %151 = vector.load %arg7[%150, %c0_71] : memref<64x32xf32, #tpu.memory_space<vmem>>, vector<8x32xf32>
    %152 = arith.addf %151, %140 : vector<8x32xf32>
    %153 = arith.negf %152 : vector<8x32xf32>
    %154 = math.exp %153 : vector<8x32xf32>
    %cst_72 = arith.constant 1.000000e+00 : f32
    %155 = vector.broadcast %cst_72 : f32 to vector<8x32xf32>
    %156 = arith.addf %155, %154 : vector<8x32xf32>
    %157 = arith.divf %155, %156 : vector<8x32xf32>
    %158 = arith.index_cast %138 : i32 to index
    %c0_73 = arith.constant 0 : index
    %159 = vector.load %arg8[%158, %c0_73] : memref<64x32xf32, #tpu.memory_space<vmem>>, vector<8x32xf32>
    %160 = vector.broadcast %10 : vector<1x32xf32> to vector<8x32xf32>
    %161 = arith.addf %141, %160 : vector<8x32xf32>
    %162 = arith.mulf %149, %161 : vector<8x32xf32>
    %163 = arith.addf %159, %162 : vector<8x32xf32>
    %164 = math.tanh %163 : vector<8x32xf32>
    %cst_74 = arith.constant 1.000000e+00 : f32
    %165 = vector.broadcast %cst_74 : f32 to vector<8x32xf32>
    %166 = arith.subf %165, %157 : vector<8x32xf32>
    %167 = arith.mulf %166, %164 : vector<8x32xf32>
    %168 = arith.mulf %157, %134 : vector<8x32xf32>
    %169 = arith.addf %167, %168 : vector<8x32xf32>
    %170 = arith.index_cast %138 : i32 to index
    %c0_75 = arith.constant 0 : index
    %171 = vector.load %arg9[%170, %c0_75] : memref<64x32xf32, #tpu.memory_space<vmem>>, vector<8x32xf32>
    tpu.vector_store %arg9[%170, %c0_75], %169 {strides = array<i32>} : memref<64x32xf32, #tpu.memory_space<vmem>>, vector<8x32xf32>,
    %c3_i32 = arith.constant 3 : i32
    %c8_i32_76 = arith.constant 8 : i32
    %172 = arith.muli %c3_i32, %c8_i32_76 : i32
    %173 = tpu.assume_multiple %172, 8 : i32
    %cst_77 = arith.constant dense<0.000000e+00> : vector<8x32xf32>
    %174 = tpu.matmul %169, %0, %cst_77 {dimension_numbers = #tpu.dot_dimension_numbers<[1], [0], [0], [1], [0, 0, 1, 1], [], []>} : vector<8x32xf32>, vector<32x32xf32>, vector<8x32xf32> -> vector<8x32xf32>
    %cst_78 = arith.constant dense<0.000000e+00> : vector<8x32xf32>
    %175 = tpu.matmul %169, %1, %cst_78 {dimension_numbers = #tpu.dot_dimension_numbers<[1], [0], [0], [1], [0, 0, 1, 1], [], []>} : vector<8x32xf32>, vector<32x32xf32>, vector<8x32xf32> -> vector<8x32xf32>
    %cst_79 = arith.constant dense<0.000000e+00> : vector<8x32xf32>
    %176 = tpu.matmul %169, %2, %cst_79 {dimension_numbers = #tpu.dot_dimension_numbers<[1], [0], [0], [1], [0, 0, 1, 1], [], []>} : vector<8x32xf32>, vector<32x32xf32>, vector<8x32xf32> -> vector<8x32xf32>
    %177 = arith.index_cast %173 : i32 to index
    %c0_80 = arith.constant 0 : index
    %178 = vector.load %arg6[%177, %c0_80] : memref<64x32xf32, #tpu.memory_space<vmem>>, vector<8x32xf32>
    %179 = arith.addf %178, %174 : vector<8x32xf32>
    %180 = arith.negf %179 : vector<8x32xf32>
    %181 = math.exp %180 : vector<8x32xf32>
    %cst_81 = arith.constant 1.000000e+00 : f32
    %182 = vector.broadcast %cst_81 : f32 to vector<8x32xf32>
    %183 = arith.addf %182, %181 : vector<8x32xf32>
    %184 = arith.divf %182, %183 : vector<8x32xf32>
    %185 = arith.index_cast %173 : i32 to index
    %c0_82 = arith.constant 0 : index
    %186 = vector.load %arg7[%185, %c0_82] : memref<64x32xf32, #tpu.memory_space<vmem>>, vector<8x32xf32>
    %187 = arith.addf %186, %175 : vector<8x32xf32>
    %188 = arith.negf %187 : vector<8x32xf32>
    %189 = math.exp %188 : vector<8x32xf32>
    %cst_83 = arith.constant 1.000000e+00 : f32
    %190 = vector.broadcast %cst_83 : f32 to vector<8x32xf32>
    %191 = arith.addf %190, %189 : vector<8x32xf32>
    %192 = arith.divf %190, %191 : vector<8x32xf32>
    %193 = arith.index_cast %173 : i32 to index
    %c0_84 = arith.constant 0 : index
    %194 = vector.load %arg8[%193, %c0_84] : memref<64x32xf32, #tpu.memory_space<vmem>>, vector<8x32xf32>
    %195 = vector.broadcast %10 : vector<1x32xf32> to vector<8x32xf32>
    %196 = arith.addf %176, %195 : vector<8x32xf32>
    %197 = arith.mulf %184, %196 : vector<8x32xf32>
    %198 = arith.addf %194, %197 : vector<8x32xf32>
    %199 = math.tanh %198 : vector<8x32xf32>
    %cst_85 = arith.constant 1.000000e+00 : f32
    %200 = vector.broadcast %cst_85 : f32 to vector<8x32xf32>
    %201 = arith.subf %200, %192 : vector<8x32xf32>
    %202 = arith.mulf %201, %199 : vector<8x32xf32>
    %203 = arith.mulf %192, %169 : vector<8x32xf32>
    %204 = arith.addf %202, %203 : vector<8x32xf32>
    %205 = arith.index_cast %173 : i32 to index
    %c0_86 = arith.constant 0 : index
    %206 = vector.load %arg9[%205, %c0_86] : memref<64x32xf32, #tpu.memory_space<vmem>>, vector<8x32xf32>
    tpu.vector_store %arg9[%205, %c0_86], %204 {strides = array<i32>} : memref<64x32xf32, #tpu.memory_space<vmem>>, vector<8x32xf32>,
    %c4_i32 = arith.constant 4 : i32
    %c8_i32_87 = arith.constant 8 : i32
    %207 = arith.muli %c4_i32, %c8_i32_87 : i32
    %208 = tpu.assume_multiple %207, 8 : i32
    %cst_88 = arith.constant dense<0.000000e+00> : vector<8x32xf32>
    %209 = tpu.matmul %204, %0, %cst_88 {dimension_numbers = #tpu.dot_dimension_numbers<[1], [0], [0], [1], [0, 0, 1, 1], [], []>} : vector<8x32xf32>, vector<32x32xf32>, vector<8x32xf32> -> vector<8x32xf32>
    %cst_89 = arith.constant dense<0.000000e+00> : vector<8x32xf32>
    %210 = tpu.matmul %204, %1, %cst_89 {dimension_numbers = #tpu.dot_dimension_numbers<[1], [0], [0], [1], [0, 0, 1, 1], [], []>} : vector<8x32xf32>, vector<32x32xf32>, vector<8x32xf32> -> vector<8x32xf32>
    %cst_90 = arith.constant dense<0.000000e+00> : vector<8x32xf32>
    %211 = tpu.matmul %204, %2, %cst_90 {dimension_numbers = #tpu.dot_dimension_numbers<[1], [0], [0], [1], [0, 0, 1, 1], [], []>} : vector<8x32xf32>, vector<32x32xf32>, vector<8x32xf32> -> vector<8x32xf32>
    %212 = arith.index_cast %208 : i32 to index
    %c0_91 = arith.constant 0 : index
    %213 = vector.load %arg6[%212, %c0_91] : memref<64x32xf32, #tpu.memory_space<vmem>>, vector<8x32xf32>
    %214 = arith.addf %213, %209 : vector<8x32xf32>
    %215 = arith.negf %214 : vector<8x32xf32>
    %216 = math.exp %215 : vector<8x32xf32>
    %cst_92 = arith.constant 1.000000e+00 : f32
    %217 = vector.broadcast %cst_92 : f32 to vector<8x32xf32>
    %218 = arith.addf %217, %216 : vector<8x32xf32>
    %219 = arith.divf %217, %218 : vector<8x32xf32>
    %220 = arith.index_cast %208 : i32 to index
    %c0_93 = arith.constant 0 : index
    %221 = vector.load %arg7[%220, %c0_93] : memref<64x32xf32, #tpu.memory_space<vmem>>, vector<8x32xf32>
    %222 = arith.addf %221, %210 : vector<8x32xf32>
    %223 = arith.negf %222 : vector<8x32xf32>
    %224 = math.exp %223 : vector<8x32xf32>
    %cst_94 = arith.constant 1.000000e+00 : f32
    %225 = vector.broadcast %cst_94 : f32 to vector<8x32xf32>
    %226 = arith.addf %225, %224 : vector<8x32xf32>
    %227 = arith.divf %225, %226 : vector<8x32xf32>
    %228 = arith.index_cast %208 : i32 to index
    %c0_95 = arith.constant 0 : index
    %229 = vector.load %arg8[%228, %c0_95] : memref<64x32xf32, #tpu.memory_space<vmem>>, vector<8x32xf32>
    %230 = vector.broadcast %10 : vector<1x32xf32> to vector<8x32xf32>
    %231 = arith.addf %211, %230 : vector<8x32xf32>
    %232 = arith.mulf %219, %231 : vector<8x32xf32>
    %233 = arith.addf %229, %232 : vector<8x32xf32>
    %234 = math.tanh %233 : vector<8x32xf32>
    %cst_96 = arith.constant 1.000000e+00 : f32
    %235 = vector.broadcast %cst_96 : f32 to vector<8x32xf32>
    %236 = arith.subf %235, %227 : vector<8x32xf32>
    %237 = arith.mulf %236, %234 : vector<8x32xf32>
    %238 = arith.mulf %227, %204 : vector<8x32xf32>
    %239 = arith.addf %237, %238 : vector<8x32xf32>
    %240 = arith.index_cast %208 : i32 to index
    %c0_97 = arith.constant 0 : index
    %241 = vector.load %arg9[%240, %c0_97] : memref<64x32xf32, #tpu.memory_space<vmem>>, vector<8x32xf32>
    tpu.vector_store %arg9[%240, %c0_97], %239 {strides = array<i32>} : memref<64x32xf32, #tpu.memory_space<vmem>>, vector<8x32xf32>,
    %c5_i32 = arith.constant 5 : i32
    %c8_i32_98 = arith.constant 8 : i32
    %242 = arith.muli %c5_i32, %c8_i32_98 : i32
    %243 = tpu.assume_multiple %242, 8 : i32
    %cst_99 = arith.constant dense<0.000000e+00> : vector<8x32xf32>
    %244 = tpu.matmul %239, %0, %cst_99 {dimension_numbers = #tpu.dot_dimension_numbers<[1], [0], [0], [1], [0, 0, 1, 1], [], []>} : vector<8x32xf32>, vector<32x32xf32>, vector<8x32xf32> -> vector<8x32xf32>
    %cst_100 = arith.constant dense<0.000000e+00> : vector<8x32xf32>
    %245 = tpu.matmul %239, %1, %cst_100 {dimension_numbers = #tpu.dot_dimension_numbers<[1], [0], [0], [1], [0, 0, 1, 1], [], []>} : vector<8x32xf32>, vector<32x32xf32>, vector<8x32xf32> -> vector<8x32xf32>
    %cst_101 = arith.constant dense<0.000000e+00> : vector<8x32xf32>
    %246 = tpu.matmul %239, %2, %cst_101 {dimension_numbers = #tpu.dot_dimension_numbers<[1], [0], [0], [1], [0, 0, 1, 1], [], []>} : vector<8x32xf32>, vector<32x32xf32>, vector<8x32xf32> -> vector<8x32xf32>
    %247 = arith.index_cast %243 : i32 to index
    %c0_102 = arith.constant 0 : index
    %248 = vector.load %arg6[%247, %c0_102] : memref<64x32xf32, #tpu.memory_space<vmem>>, vector<8x32xf32>
    %249 = arith.addf %248, %244 : vector<8x32xf32>
    %250 = arith.negf %249 : vector<8x32xf32>
    %251 = math.exp %250 : vector<8x32xf32>
    %cst_103 = arith.constant 1.000000e+00 : f32
    %252 = vector.broadcast %cst_103 : f32 to vector<8x32xf32>
    %253 = arith.addf %252, %251 : vector<8x32xf32>
    %254 = arith.divf %252, %253 : vector<8x32xf32>
    %255 = arith.index_cast %243 : i32 to index
    %c0_104 = arith.constant 0 : index
    %256 = vector.load %arg7[%255, %c0_104] : memref<64x32xf32, #tpu.memory_space<vmem>>, vector<8x32xf32>
    %257 = arith.addf %256, %245 : vector<8x32xf32>
    %258 = arith.negf %257 : vector<8x32xf32>
    %259 = math.exp %258 : vector<8x32xf32>
    %cst_105 = arith.constant 1.000000e+00 : f32
    %260 = vector.broadcast %cst_105 : f32 to vector<8x32xf32>
    %261 = arith.addf %260, %259 : vector<8x32xf32>
    %262 = arith.divf %260, %261 : vector<8x32xf32>
    %263 = arith.index_cast %243 : i32 to index
    %c0_106 = arith.constant 0 : index
    %264 = vector.load %arg8[%263, %c0_106] : memref<64x32xf32, #tpu.memory_space<vmem>>, vector<8x32xf32>
    %265 = vector.broadcast %10 : vector<1x32xf32> to vector<8x32xf32>
    %266 = arith.addf %246, %265 : vector<8x32xf32>
    %267 = arith.mulf %254, %266 : vector<8x32xf32>
    %268 = arith.addf %264, %267 : vector<8x32xf32>
    %269 = math.tanh %268 : vector<8x32xf32>
    %cst_107 = arith.constant 1.000000e+00 : f32
    %270 = vector.broadcast %cst_107 : f32 to vector<8x32xf32>
    %271 = arith.subf %270, %262 : vector<8x32xf32>
    %272 = arith.mulf %271, %269 : vector<8x32xf32>
    %273 = arith.mulf %262, %239 : vector<8x32xf32>
    %274 = arith.addf %272, %273 : vector<8x32xf32>
    %275 = arith.index_cast %243 : i32 to index
    %c0_108 = arith.constant 0 : index
    %276 = vector.load %arg9[%275, %c0_108] : memref<64x32xf32, #tpu.memory_space<vmem>>, vector<8x32xf32>
    tpu.vector_store %arg9[%275, %c0_108], %274 {strides = array<i32>} : memref<64x32xf32, #tpu.memory_space<vmem>>, vector<8x32xf32>,
    %c6_i32 = arith.constant 6 : i32
    %c8_i32_109 = arith.constant 8 : i32
    %277 = arith.muli %c6_i32, %c8_i32_109 : i32
    %278 = tpu.assume_multiple %277, 8 : i32
    %cst_110 = arith.constant dense<0.000000e+00> : vector<8x32xf32>
    %279 = tpu.matmul %274, %0, %cst_110 {dimension_numbers = #tpu.dot_dimension_numbers<[1], [0], [0], [1], [0, 0, 1, 1], [], []>} : vector<8x32xf32>, vector<32x32xf32>, vector<8x32xf32> -> vector<8x32xf32>
    %cst_111 = arith.constant dense<0.000000e+00> : vector<8x32xf32>
    %280 = tpu.matmul %274, %1, %cst_111 {dimension_numbers = #tpu.dot_dimension_numbers<[1], [0], [0], [1], [0, 0, 1, 1], [], []>} : vector<8x32xf32>, vector<32x32xf32>, vector<8x32xf32> -> vector<8x32xf32>
    %cst_112 = arith.constant dense<0.000000e+00> : vector<8x32xf32>
    %281 = tpu.matmul %274, %2, %cst_112 {dimension_numbers = #tpu.dot_dimension_numbers<[1], [0], [0], [1], [0, 0, 1, 1], [], []>} : vector<8x32xf32>, vector<32x32xf32>, vector<8x32xf32> -> vector<8x32xf32>
    %282 = arith.index_cast %278 : i32 to index
    %c0_113 = arith.constant 0 : index
    %283 = vector.load %arg6[%282, %c0_113] : memref<64x32xf32, #tpu.memory_space<vmem>>, vector<8x32xf32>
    %284 = arith.addf %283, %279 : vector<8x32xf32>
    %285 = arith.negf %284 : vector<8x32xf32>
    %286 = math.exp %285 : vector<8x32xf32>
    %cst_114 = arith.constant 1.000000e+00 : f32
    %287 = vector.broadcast %cst_114 : f32 to vector<8x32xf32>
    %288 = arith.addf %287, %286 : vector<8x32xf32>
    %289 = arith.divf %287, %288 : vector<8x32xf32>
    %290 = arith.index_cast %278 : i32 to index
    %c0_115 = arith.constant 0 : index
    %291 = vector.load %arg7[%290, %c0_115] : memref<64x32xf32, #tpu.memory_space<vmem>>, vector<8x32xf32>
    %292 = arith.addf %291, %280 : vector<8x32xf32>
    %293 = arith.negf %292 : vector<8x32xf32>
    %294 = math.exp %293 : vector<8x32xf32>
    %cst_116 = arith.constant 1.000000e+00 : f32
    %295 = vector.broadcast %cst_116 : f32 to vector<8x32xf32>
    %296 = arith.addf %295, %294 : vector<8x32xf32>
    %297 = arith.divf %295, %296 : vector<8x32xf32>
    %298 = arith.index_cast %278 : i32 to index
    %c0_117 = arith.constant 0 : index
    %299 = vector.load %arg8[%298, %c0_117] : memref<64x32xf32, #tpu.memory_space<vmem>>, vector<8x32xf32>
    %300 = vector.broadcast %10 : vector<1x32xf32> to vector<8x32xf32>
    %301 = arith.addf %281, %300 : vector<8x32xf32>
    %302 = arith.mulf %289, %301 : vector<8x32xf32>
    %303 = arith.addf %299, %302 : vector<8x32xf32>
    %304 = math.tanh %303 : vector<8x32xf32>
    %cst_118 = arith.constant 1.000000e+00 : f32
    %305 = vector.broadcast %cst_118 : f32 to vector<8x32xf32>
    %306 = arith.subf %305, %297 : vector<8x32xf32>
    %307 = arith.mulf %306, %304 : vector<8x32xf32>
    %308 = arith.mulf %297, %274 : vector<8x32xf32>
    %309 = arith.addf %307, %308 : vector<8x32xf32>
    %310 = arith.index_cast %278 : i32 to index
    %c0_119 = arith.constant 0 : index
    %311 = vector.load %arg9[%310, %c0_119] : memref<64x32xf32, #tpu.memory_space<vmem>>, vector<8x32xf32>
    tpu.vector_store %arg9[%310, %c0_119], %309 {strides = array<i32>} : memref<64x32xf32, #tpu.memory_space<vmem>>, vector<8x32xf32>,
    %c7_i32 = arith.constant 7 : i32
    %c8_i32_120 = arith.constant 8 : i32
    %312 = arith.muli %c7_i32, %c8_i32_120 : i32
    %313 = tpu.assume_multiple %312, 8 : i32
    %cst_121 = arith.constant dense<0.000000e+00> : vector<8x32xf32>
    %314 = tpu.matmul %309, %0, %cst_121 {dimension_numbers = #tpu.dot_dimension_numbers<[1], [0], [0], [1], [0, 0, 1, 1], [], []>} : vector<8x32xf32>, vector<32x32xf32>, vector<8x32xf32> -> vector<8x32xf32>
    %cst_122 = arith.constant dense<0.000000e+00> : vector<8x32xf32>
    %315 = tpu.matmul %309, %1, %cst_122 {dimension_numbers = #tpu.dot_dimension_numbers<[1], [0], [0], [1], [0, 0, 1, 1], [], []>} : vector<8x32xf32>, vector<32x32xf32>, vector<8x32xf32> -> vector<8x32xf32>
    %cst_123 = arith.constant dense<0.000000e+00> : vector<8x32xf32>
    %316 = tpu.matmul %309, %2, %cst_123 {dimension_numbers = #tpu.dot_dimension_numbers<[1], [0], [0], [1], [0, 0, 1, 1], [], []>} : vector<8x32xf32>, vector<32x32xf32>, vector<8x32xf32> -> vector<8x32xf32>
    %317 = arith.index_cast %313 : i32 to index
    %c0_124 = arith.constant 0 : index
    %318 = vector.load %arg6[%317, %c0_124] : memref<64x32xf32, #tpu.memory_space<vmem>>, vector<8x32xf32>
    %319 = arith.addf %318, %314 : vector<8x32xf32>
    %320 = arith.negf %319 : vector<8x32xf32>
    %321 = math.exp %320 : vector<8x32xf32>
    %cst_125 = arith.constant 1.000000e+00 : f32
    %322 = vector.broadcast %cst_125 : f32 to vector<8x32xf32>
    %323 = arith.addf %322, %321 : vector<8x32xf32>
    %324 = arith.divf %322, %323 : vector<8x32xf32>
    %325 = arith.index_cast %313 : i32 to index
    %c0_126 = arith.constant 0 : index
    %326 = vector.load %arg7[%325, %c0_126] : memref<64x32xf32, #tpu.memory_space<vmem>>, vector<8x32xf32>
    %327 = arith.addf %326, %315 : vector<8x32xf32>
    %328 = arith.negf %327 : vector<8x32xf32>
    %329 = math.exp %328 : vector<8x32xf32>
    %cst_127 = arith.constant 1.000000e+00 : f32
    %330 = vector.broadcast %cst_127 : f32 to vector<8x32xf32>
    %331 = arith.addf %330, %329 : vector<8x32xf32>
    %332 = arith.divf %330, %331 : vector<8x32xf32>
    %333 = arith.index_cast %313 : i32 to index
    %c0_128 = arith.constant 0 : index
    %334 = vector.load %arg8[%333, %c0_128] : memref<64x32xf32, #tpu.memory_space<vmem>>, vector<8x32xf32>
    %335 = vector.broadcast %10 : vector<1x32xf32> to vector<8x32xf32>
    %336 = arith.addf %316, %335 : vector<8x32xf32>
    %337 = arith.mulf %324, %336 : vector<8x32xf32>
    %338 = arith.addf %334, %337 : vector<8x32xf32>
    %339 = math.tanh %338 : vector<8x32xf32>
    %cst_129 = arith.constant 1.000000e+00 : f32
    %340 = vector.broadcast %cst_129 : f32 to vector<8x32xf32>
    %341 = arith.subf %340, %332 : vector<8x32xf32>
    %342 = arith.mulf %341, %339 : vector<8x32xf32>
    %343 = arith.mulf %332, %309 : vector<8x32xf32>
    %344 = arith.addf %342, %343 : vector<8x32xf32>
    %345 = arith.index_cast %313 : i32 to index
    %c0_130 = arith.constant 0 : index
    %346 = vector.load %arg9[%345, %c0_130] : memref<64x32xf32, #tpu.memory_space<vmem>>, vector<8x32xf32>
    tpu.vector_store %arg9[%345, %c0_130], %344 {strides = array<i32>} : memref<64x32xf32, #tpu.memory_space<vmem>>, vector<8x32xf32>,
    %c8_i32_131 = arith.constant 8 : i32
    %c0_132 = arith.constant 0 : index
    %c0_133 = arith.constant 0 : index
    %347 = vector.load %arg5[%c0_132, %c0_133] : memref<8x32xf32, #tpu.memory_space<vmem>>, vector<8x32xf32>
    tpu.vector_store %arg5[%c0_132, %c0_133], %344 {strides = array<i32>} : memref<8x32xf32, #tpu.memory_space<vmem>>, vector<8x32xf32>,
    %c0_134 = arith.constant 0 : index
    %c0_135 = arith.constant 0 : index
    %348 = vector.load %arg9[%c0_134, %c0_135] : memref<64x32xf32, #tpu.memory_space<vmem>>, vector<64x32xf32>
    %cst_136 = arith.constant dense<0.000000e+00> : vector<64x8xf32>
    %349 = tpu.matmul %348, %6, %cst_136 {dimension_numbers = #tpu.dot_dimension_numbers<[1], [1], [0], [0], [0, 0, 1, 0], [], []>} : vector<64x32xf32>, vector<8x32xf32>, vector<64x8xf32> -> vector<64x8xf32>
    %350 = vector.broadcast %11 : vector<1x8xf32> to vector<64x8xf32>
    %351 = arith.addf %349, %350 : vector<64x8xf32>
    %c2_137 = arith.constant 2 : index
    %c0_138 = arith.constant 0 : index
    %c0_139 = arith.constant 0 : index
    %352 = vector.load %arg4[%c2_137, %c0_138, %c0_139] : memref<3x64x8xf32, #tpu.memory_space<vmem>>, vector<1x64x8xf32>
    %353 = vector.shape_cast %352 : vector<1x64x8xf32> to vector<64x8xf32>
    %354 = vector.shape_cast %351 : vector<64x8xf32> to vector<1x64x8xf32>
    tpu.vector_store %arg4[%c2_137, %c0_138, %c0_139], %354 {strides = array<i32>} : memref<3x64x8xf32, #tpu.memory_space<vmem>>, vector<1x64x8xf32>,
    return
  }
}

</mosaic_0001>

<llo_original>
// kernel: decoder_forward.1
$region0: #{decoder_forward.1}
  #allocation0 [shape = 'u32[]', space=smem, size = 0x4, offset = 0x4, fixed_abs, tag = 'smem constant byte address 0x4 - core index']
  #allocation1 [shape = 'u32[144,128]{1,0:T(1,128)}', space=vmem, size = 0x12000, scoped, tag = 'internal scratch']
  #allocation2 [shape = 'f32[64,32]{1,0:T(8,128)}', space=vmem, size = 0x8000, scoped, tag = 'scratch operand']
  #allocation3 [shape = 'f32[64,32]{1,0:T(8,128)}', space=vmem, size = 0x8000, scoped, tag = 'scratch operand']
  #allocation4 [shape = 'f32[64,32]{1,0:T(8,128)}', space=vmem, size = 0x8000, scoped, tag = 'scratch operand']
  #allocation5 [shape = 'f32[64,32]{1,0:T(8,128)}', space=vmem, size = 0x8000, scoped, tag = 'scratch operand']
  #allocation6 [shape = 'f32[1]{0:T(128)S(6)}', space=smem, size = 0x200, scoped, tag = 'scoped memory for decoder_forward.1']
  %s0 = inlined_call_operand.<no memory space> [shape: f32[1], index: 0, kind: input, shape index: {}]
  %s1 = inlined_call_operand.vmem [shape: f32[3,64,8], index: 1, kind: input, shape index: {}]
  %s2 = inlined_call_operand.vmem [shape: f32[8,32], index: 2, kind: input, shape index: {}]
  %s3 = inlined_call_operand.vmem [shape: f32[136,32], index: 3, kind: input, shape index: {}]
  %s4 = inlined_call_operand.vmem [shape: f32[3,64,8], index: 4, kind: output, shape index: {0}]
  %s5 = inlined_call_operand.vmem [shape: f32[8,32], index: 5, kind: output, shape index: {1}]
  %6 = xla_tuple %s4, %s5
  %s7 = sld [smem:[#allocation0]]
  $region34: #{decoder_forward.1} parent=0
    _
  %s9 = ssub.s32 1, %s7
  %s10 = scalar_select 0, %s9, %s7
  %11 = sst [smem:[#allocation6]] %s0
  // Predicated region
  $region2: #{decoder_forward.1} parent=0 // pred_check
    _
  $region3: #{decoder_forward.1} parent=0 // pred_check_branch
    %13 = sbr.rel (0) target = $region5
  $region4: #{decoder_forward.1} parent=0 // pred_region
    _
  $region5: #{decoder_forward.1} parent=0 // pred_fallthru
    _
  // Predicated region
  $region6: #{decoder_forward.1} parent=0 // pred_check
    _
  $region7: #{decoder_forward.1} parent=0 // pred_check_branch
    %15 = sbr.rel (0) target = $region9
  $region8: #{decoder_forward.1} parent=0 // pred_region
    _
  $region9: #{decoder_forward.1} parent=0 // pred_fallthru
    _
  // Predicated region
  $region10: #{decoder_forward.1} parent=0 // pred_check
    _
  $region11: #{decoder_forward.1} parent=0 // pred_check_branch
    %17 = sbr.rel (0) target = $region13
  $region12: #{decoder_forward.1} parent=0 // pred_region
    _
  $region13: #{decoder_forward.1} parent=0 // pred_fallthru
    _
  // Predicated region
  $region14: #{decoder_forward.1} parent=0 // pred_check
    _
  $region15: #{decoder_forward.1} parent=0 // pred_check_branch
    %19 = sbr.rel (0) target = $region17
  $region16: #{decoder_forward.1} parent=0 // pred_region
    _
  $region17: #{decoder_forward.1} parent=0 // pred_fallthru
    _
  %v20 = vld [vmem:[%s3] sm:$0xff]
  %v21 = vld [vmem:[%s3 + $0x8] sm:$0xff]
  %v22 = vld [vmem:[%s3 + $0x10] sm:$0xff]
  %v23 = vld [vmem:[%s3 + $0x18] sm:$0xff]
  %v24 = vld [vmem:[%s3 + $0x20] sm:$0xff]
  %v25 = vld [vmem:[%s3 + $0x28] sm:$0xff]
  %v26 = vld [vmem:[%s3 + $0x30] sm:$0xff]
  %v27 = vld [vmem:[%s3 + $0x38] sm:$0xff]
  %v28 = vld [vmem:[%s3 + $0x40] sm:$0xff]
  %v29 = vld [vmem:[%s3 + $0x48] sm:$0xff]
  %v30 = vld [vmem:[%s3 + $0x50] sm:$0xff]
  %v31 = vld [vmem:[%s3 + $0x58] sm:$0xff]
  %v32 = vld [vmem:[%s3 + $0x60] sm:$0xff]
  %v33 = vld [vmem:[%s3 + $0x68] sm:$0xff]
  %v34 = vld [vmem:[%s3 + $0x70] sm:$0xff]
  %v35 = vld [vmem:[%s3 + $0x78] sm:$0xff]
  %v36 = vld [vmem:[%s3 + $0x80] sm:$0x1]
  %v37 = vld [vmem:[%s3 + $0x81] sm:$0x1]
  %v38 = vld [vmem:[%s3 + $0x82] sm:$0x1]
  %v39 = vld [vmem:[%s3 + $0x83] sm:$0x1]
  %v40 = vld [vmem:[%s3 + $0x84] sm:$0x1]
  %s41 = scalar_lea.vmem %s1, 128
  %v42 = vld [vmem:[%s41] sm:$0xff]
  %v43 = vld [vmem:[%s41 + $0x8] sm:$0xff]
  %v44 = vld [vmem:[%s41 + $0x10] sm:$0xff]
  %v45 = vld [vmem:[%s41 + $0x18] sm:$0xff]
  %v46 = vld [vmem:[%s41 + $0x20] sm:$0xff]
  %v47 = vld [vmem:[%s41 + $0x28] sm:$0xff]
  %v48 = vld [vmem:[%s41 + $0x30] sm:$0xff]
  %v49 = vld [vmem:[%s41 + $0x38] sm:$0xff]
  %s50 = scalar_lea.vmem %s1, 64
  %v51 = vld [vmem:[%s50] sm:$0xff]
  %v52 = vld [vmem:[%s50 + $0x8] sm:$0xff]
  %v53 = vld [vmem:[%s50 + $0x10] sm:$0xff]
  %v54 = vld [vmem:[%s50 + $0x18] sm:$0xff]
  %v55 = vld [vmem:[%s50 + $0x20] sm:$0xff]
  %v56 = vld [vmem:[%s50 + $0x28] sm:$0xff]
  %v57 = vld [vmem:[%s50 + $0x30] sm:$0xff]
  %v58 = vld [vmem:[%s50 + $0x38] sm:$0xff]
  %v59 = vmul.f32 %v51, 0.5
  %v60 = vmul.f32 %v52, 0.5
  %v61 = vmul.f32 %v53, 0.5
  %v62 = vmul.f32 %v54, 0.5
  %v63 = vmul.f32 %v55, 0.5
  %v64 = vmul.f32 %v56, 0.5
  %v65 = vmul.f32 %v57, 0.5
  %v66 = vmul.f32 %v58, 0.5
  %v67 = vmul.f32 %v59, 1.442695
  %v68 = vpow.pop %v67
  %v69 = vmul.f32 %v60, 1.442695
  %v70 = vpow.pop %v69
  %v71 = vmul.f32 %v61, 1.442695
  %v72 = vpow.pop %v71
  %v73 = vmul.f32 %v62, 1.442695
  %v74 = vpow.pop %v73
  %v75 = vmul.f32 %v63, 1.442695
  %v76 = vpow.pop %v75
  %v77 = vmul.f32 %v64, 1.442695
  %v78 = vpow.pop %v77
  %v79 = vmul.f32 %v65, 1.442695
  %v80 = vpow.pop %v79
  %v81 = vmul.f32 %v66, 1.442695
  %v82 = vpow.pop %v81
  %v83 = vmul.f32 %v42, %v68
  %v84 = vmul.f32 %v43, %v70
  %v85 = vmul.f32 %v44, %v72
  %v86 = vmul.f32 %v45, %v74
  %v87 = vmul.f32 %v46, %v76
  %v88 = vmul.f32 %v47, %v78
  %v89 = vmul.f32 %v48, %v80
  %v90 = vmul.f32 %v49, %v82
  %v91 = vld [vmem:[%s1] sm:$0xff]
  %v92 = vld [vmem:[%s1 + $0x8] sm:$0xff]
  %v93 = vld [vmem:[%s1 + $0x10] sm:$0xff]
  %v94 = vld [vmem:[%s1 + $0x18] sm:$0xff]
  %v95 = vld [vmem:[%s1 + $0x20] sm:$0xff]
  %v96 = vld [vmem:[%s1 + $0x28] sm:$0xff]
  %v97 = vld [vmem:[%s1 + $0x30] sm:$0xff]
  %v98 = vld [vmem:[%s1 + $0x38] sm:$0xff]
  %v99 = vadd.f32 %v83, %v91
  %v100 = vadd.f32 %v84, %v92
  %v101 = vadd.f32 %v85, %v93
  %v102 = vadd.f32 %v86, %v94
  %v103 = vadd.f32 %v87, %v95
  %v104 = vadd.f32 %v88, %v96
  %v105 = vadd.f32 %v89, %v97
  %v106 = vadd.f32 %v90, %v98
  %vm107 = vcmask 64512
  %108 = vst.msk [vmem:[%s4] sm:$0xff] %vm107, %v99
  %109 = vst.msk [vmem:[%s4 + $0x8] sm:$0xff] %vm107, %v100
  %110 = vst.msk [vmem:[%s4 + $0x10] sm:$0xff] %vm107, %v101
  %111 = vst.msk [vmem:[%s4 + $0x18] sm:$0xff] %vm107, %v102
  %112 = vst.msk [vmem:[%s4 + $0x20] sm:$0xff] %vm107, %v103
  %113 = vst.msk [vmem:[%s4 + $0x28] sm:$0xff] %vm107, %v104
  %114 = vst.msk [vmem:[%s4 + $0x30] sm:$0xff] %vm107, %v105
  %115 = vst.msk [vmem:[%s4 + $0x38] sm:$0xff] %vm107, %v106
  %s116 = sld [smem:[#allocation6]]
  %v117 = vstv %s116
  %v118 = vmul.f32 %v99, %v117
  %v119 = vmul.f32 %v100, %v117
  %v120 = vmul.f32 %v101, %v117
  %v121 = vmul.f32 %v102, %v117
  %v122 = vmul.f32 %v103, %v117
  %v123 = vmul.f32 %v104, %v117
  %v124 = vmul.f32 %v105, %v117
  %v125 = vmul.f32 %v106, %v117
  %v126 = vsel %vm107, %v118, -inf
  %127 = vmax.xlane.f32.xlu0 %v126
  %v128 = vpop.xlane.xlu0 %127
  %v129 = vsel %vm107, %v119, -inf
  %130 = vmax.xlane.f32.xlu0 %v129
  %v131 = vpop.xlane.xlu0 %130
  %v132 = vsel %vm107, %v120, -inf
  %133 = vmax.xlane.f32.xlu0 %v132
  %v134 = vpop.xlane.xlu0 %133
  %v135 = vsel %vm107, %v121, -inf
  %136 = vmax.xlane.f32.xlu0 %v135
  %v137 = vpop.xlane.xlu0 %136
  %v138 = vsel %vm107, %v122, -inf
  %139 = vmax.xlane.f32.xlu0 %v138
  %v140 = vpop.xlane.xlu0 %139
  %v141 = vsel %vm107, %v123, -inf
  %142 = vmax.xlane.f32.xlu0 %v141
  %v143 = vpop.xlane.xlu0 %142
  %v144 = vsel %vm107, %v124, -inf
  %145 = vmax.xlane.f32.xlu0 %v144
  %v146 = vpop.xlane.xlu0 %145
  %v147 = vsel %vm107, %v125, -inf
  %148 = vmax.xlane.f32.xlu0 %v147
  %v149 = vpop.xlane.xlu0 %148
  %v150 = vsub.f32 %v118, %v128
  %v151 = vsub.f32 %v119, %v131
  %v152 = vsub.f32 %v120, %v134
  %v153 = vsub.f32 %v121, %v137
  %v154 = vsub.f32 %v122, %v140
  %v155 = vsub.f32 %v123, %v143
  %v156 = vsub.f32 %v124, %v146
  %v157 = vsub.f32 %v125, %v149
  %v158 = vmul.f32 %v150, 1.442695
  %v159 = vpow.pop %v158
  %v160 = vmul.f32 %v151, 1.442695
  %v161 = vpow.pop %v160
  %v162 = vmul.f32 %v152, 1.442695
  %v163 = vpow.pop %v162
  %v164 = vmul.f32 %v153, 1.442695
  %v165 = vpow.pop %v164
  %v166 = vmul.f32 %v154, 1.442695
  %v167 = vpow.pop %v166
  %v168 = vmul.f32 %v155, 1.442695
  %v169 = vpow.pop %v168
  %v170 = vmul.f32 %v156, 1.442695
  %v171 = vpow.pop %v170
  %v172 = vmul.f32 %v157, 1.442695
  %v173 = vpow.pop %v172
  %v174 = vsel %vm107, %v159, 0.0
  %175 = vadd.xlane.f32.xlu0 %v174
  %v176 = vpop.xlane.xlu0 %175
  %v177 = vsel %vm107, %v161, 0.0
  %178 = vadd.xlane.f32.xlu0 %v177
  %v179 = vpop.xlane.xlu0 %178
  %v180 = vsel %vm107, %v163, 0.0
  %181 = vadd.xlane.f32.xlu0 %v180
  %v182 = vpop.xlane.xlu0 %181
  %v183 = vsel %vm107, %v165, 0.0
  %184 = vadd.xlane.f32.xlu0 %v183
  %v185 = vpop.xlane.xlu0 %184
  %v186 = vsel %vm107, %v167, 0.0
  %187 = vadd.xlane.f32.xlu0 %v186
  %v188 = vpop.xlane.xlu0 %187
  %v189 = vsel %vm107, %v169, 0.0
  %190 = vadd.xlane.f32.xlu0 %v189
  %v191 = vpop.xlane.xlu0 %190
  %v192 = vsel %vm107, %v171, 0.0
  %193 = vadd.xlane.f32.xlu0 %v192
  %v194 = vpop.xlane.xlu0 %193
  %v195 = vsel %vm107, %v173, 0.0
  %196 = vadd.xlane.f32.xlu0 %v195
  %v197 = vpop.xlane.xlu0 %196
  %v198 = vrcp.pop %v176
  %v199 = vrcp.pop %v179
  %v200 = vrcp.pop %v182
  %v201 = vrcp.pop %v185
  %v202 = vrcp.pop %v188
  %v203 = vrcp.pop %v191
  %v204 = vrcp.pop %v194
  %v205 = vrcp.pop %v197
  %v206 = vmul.f32 %v159, %v198
  %v207 = vmul.f32 %v161, %v199
  %v208 = vmul.f32 %v163, %v200
  %v209 = vmul.f32 %v165, %v201
  %v210 = vmul.f32 %v167, %v202
  %v211 = vmul.f32 %v169, %v203
  %v212 = vmul.f32 %v171, %v204
  %v213 = vmul.f32 %v173, %v205
  %s214 = scalar_lea.vmem %s4, 64
  %215 = vst.msk [vmem:[%s214] sm:$0xff] %vm107, %v206
  %216 = vst.msk [vmem:[%s214 + $0x8] sm:$0xff] %vm107, %v207
  %217 = vst.msk [vmem:[%s214 + $0x10] sm:$0xff] %vm107, %v208
  %218 = vst.msk [vmem:[%s214 + $0x18] sm:$0xff] %vm107, %v209
  %219 = vst.msk [vmem:[%s214 + $0x20] sm:$0xff] %vm107, %v210
  %220 = vst.msk [vmem:[%s214 + $0x28] sm:$0xff] %vm107, %v211
  %221 = vst.msk [vmem:[%s214 + $0x30] sm:$0xff] %vm107, %v212
  %222 = vst.msk [vmem:[%s214 + $0x38] sm:$0xff] %vm107, %v213
  %v223 = vlaneseq
  %v224 = vshrl.u32 %v223, 7
  %v225 = vsub.s32 0, %v224
  %v226 = vrot.slane %v36, %v225
  %vm227 = vcmask 261120
  %228 = vst.msk [vmem:[#allocation2] sm:$0xff] %vm227, %v226
  %v230 = vsel %vm107, %v99, 0
  %v233 = vsel %vm107, %v100, 0
  %v236 = vsel %vm107, %v101, 0
  %v239 = vsel %vm107, %v102, 0
  %v242 = vsel %vm107, %v103, 0
  %v245 = vsel %vm107, %v104, 0
  %v248 = vsel %vm107, %v105, 0
  %250 = vmatprep.subr.mxu0 0.0
  %251 = vmatpush1.msra.mxu0 0.0
  %252 = vmatprep.subr.mxu0 0.0
  %253 = vmatpush1.msra.mxu0 0.0
  %254 = vmatprep.subr.mxu0 0.0
  %255 = vmatpush1.msra.mxu0 0.0
  %256 = vmatprep.subr.mxu0 0.0
  %257 = vmatpush1.msra.mxu0 0.0
  %258 = vmatprep.subr.mxu0 0.0
  %259 = vmatpush1.msra.mxu0 0.0
  %260 = vmatprep.subr.mxu0 0.0
  %261 = vmatpush1.msra.mxu0 0.0
  %262 = vmatprep.subr.mxu0 0.0
  %263 = vmatpush1.msra.mxu0 0.0
  %264 = vmatprep.subr.mxu0 0.0
  %265 = vmatpush1.msra.mxu0 0.0
  %266 = vmatprep.subr.mxu0 0.0
  %267 = vmatpush1.msra.mxu0 0.0
  %268 = vmatprep.subr.mxu0 0.0
  %269 = vmatpush1.msra.mxu0 0.0
  %270 = vmatprep.subr.mxu0 0.0
  %271 = vmatpush1.msra.mxu0 0.0
  %272 = vmatprep.subr.mxu0 0.0
  %273 = vmatpush1.msra.mxu0 0.0
  %274 = vmatprep.subr.mxu0 0.0
  %275 = vmatpush1.msra.mxu0 0.0
  %276 = vmatprep.subr.mxu0 0.0
  %277 = vmatpush1.msra.mxu0 0.0
  %278 = vmatprep.subr.mxu0 0.0
  %279 = vmatpush1.msra.mxu0 0.0
  %280 = vmatprep.subr.mxu0 0.0
  %281 = vmatpush1.msra.mxu0 %v32
  %282 = vmatprep.subr.mxu0 0.0
  %283 = vmatpush2.msra.mxu0 0.0
  %284 = vmatprep.subr.mxu0 0.0
  %285 = vmatpush2.msra.mxu0 0.0
  %286 = vmatprep.subr.mxu0 0.0
  %287 = vmatpush2.msra.mxu0 0.0
  %288 = vmatprep.subr.mxu0 0.0
  %289 = vmatpush2.msra.mxu0 0.0
  %290 = vmatprep.subr.mxu0 0.0
  %291 = vmatpush2.msra.mxu0 0.0
  %292 = vmatprep.subr.mxu0 0.0
  %293 = vmatpush2.msra.mxu0 0.0
  %294 = vmatprep.subr.mxu0 0.0
  %295 = vmatpush2.msra.mxu0 0.0
  %296 = vmatprep.subr.mxu0 0.0
  %297 = vmatpush2.msra.mxu0 0.0
  %298 = vmatprep.subr.mxu0 0.0
  %299 = vmatpush2.msra.mxu0 0.0
  %300 = vmatprep.subr.mxu0 0.0
  %301 = vmatpush2.msra.mxu0 0.0
  %302 = vmatprep.subr.mxu0 0.0
  %303 = vmatpush2.msra.mxu0 0.0
  %304 = vmatprep.subr.mxu0 0.0
  %305 = vmatpush2.msra.mxu0 0.0
  %306 = vmatprep.subr.mxu0 0.0
  %307 = vmatpush2.msra.mxu0 0.0
  %308 = vmatprep.subr.mxu0 0.0
  %309 = vmatpush2.msra.mxu0 0.0
  %310 = vmatprep.subr.mxu0 0.0
  %311 = vmatpush2.msra.mxu0 0.0
  %312 = vmatprep.subr.mxu0 0.0
  %313 = vmatpush2.msra.mxu0 0.0
  %314 = vmatprep.mubr.f32.mxu0 0.0
  %315 = vmatmul.mubr.f32.gmra.mxu0 %v230
  %v316 = vpop.f32.mrf.mxu0
  %v317 = vadd.f32 %v226, %v316
  %v318 = vpop.f32.mrf.mxu0
  %319 = vmatprep.mubr.f32.mxu0 0.0
  %320 = vmatmul.mubr.f32.gmra.mxu0 %v233
  %v321 = vpop.f32.mrf.mxu0
  %v322 = vadd.f32 %v226, %v321
  %v323 = vpop.f32.mrf.mxu0
  %324 = vmatprep.mubr.f32.mxu0 0.0
  %325 = vmatmul.mubr.f32.gmra.mxu0 %v236
  %v326 = vpop.f32.mrf.mxu0
  %v327 = vadd.f32 %v226, %v326
  %v328 = vpop.f32.mrf.mxu0
  %329 = vmatprep.mubr.f32.mxu0 0.0
  %330 = vmatmul.mubr.f32.gmra.mxu0 %v239
  %v331 = vpop.f32.mrf.mxu0
  %v332 = vadd.f32 %v226, %v331
  %v333 = vpop.f32.mrf.mxu0
  %334 = vmatprep.mubr.f32.mxu0 0.0
  %335 = vmatmul.mubr.f32.gmra.mxu0 %v242
  %v336 = vpop.f32.mrf.mxu0
  %v337 = vadd.f32 %v226, %v336
  %v338 = vpop.f32.mrf.mxu0
  %339 = vmatprep.mubr.f32.mxu0 0.0
  %340 = vmatmul.mubr.f32.gmra.mxu0 %v245
  %v341 = vpop.f32.mrf.mxu0
  %v342 = vadd.f32 %v226, %v341
  %v343 = vpop.f32.mrf.mxu0
  %344 = vmatprep.mubr.f32.mxu0 0.0
  %345 = vmatmul.mubr.f32.gmra.mxu0 %v248
  %v346 = vpop.f32.mrf.mxu0
  %v347 = vadd.f32 %v226, %v346
  %v348 = vpop.f32.mrf.mxu0
  %349 = vdwg.mxu0
  %350 = vst.msk [vmem:[#allocation2 + $0x8] sm:$0xff] %vm227, %v317
  %351 = vst.msk [vmem:[#allocation2 + $0x10] sm:$0xff] %vm227, %v322
  %352 = vst.msk [vmem:[#allocation2 + $0x18] sm:$0xff] %vm227, %v327
  %353 = vst.msk [vmem:[#allocation2 + $0x20] sm:$0xff] %vm227, %v332
  %354 = vst.msk [vmem:[#allocation2 + $0x28] sm:$0xff] %vm227, %v337
  %355 = vst.msk [vmem:[#allocation2 + $0x30] sm:$0xff] %vm227, %v342
  %356 = vst.msk [vmem:[#allocation2 + $0x38] sm:$0xff] %vm227, %v347
  %v357 = vlaneseq
  %v358 = vshrl.u32 %v357, 7
  %v359 = vsub.s32 0, %v358
  %v360 = vrot.slane %v37, %v359
  %361 = vst.msk [vmem:[#allocation3] sm:$0xff] %vm227, %v360
  %362 = vmatprep.subr.mxu0 0.0
  %363 = vmatpush1.msra.mxu0 0.0
  %364 = vmatprep.subr.mxu0 0.0
  %365 = vmatpush1.msra.mxu0 0.0
  %366 = vmatprep.subr.mxu0 0.0
  %367 = vmatpush1.msra.mxu0 0.0
  %368 = vmatprep.subr.mxu0 0.0
  %369 = vmatpush1.msra.mxu0 0.0
  %370 = vmatprep.subr.mxu0 0.0
  %371 = vmatpush1.msra.mxu0 0.0
  %372 = vmatprep.subr.mxu0 0.0
  %373 = vmatpush1.msra.mxu0 0.0
  %374 = vmatprep.subr.mxu0 0.0
  %375 = vmatpush1.msra.mxu0 0.0
  %376 = vmatprep.subr.mxu0 0.0
  %377 = vmatpush1.msra.mxu0 0.0
  %378 = vmatprep.subr.mxu0 0.0
  %379 = vmatpush1.msra.mxu0 0.0
  %380 = vmatprep.subr.mxu0 0.0
  %381 = vmatpush1.msra.mxu0 0.0
  %382 = vmatprep.subr.mxu0 0.0
  %383 = vmatpush1.msra.mxu0 0.0
  %384 = vmatprep.subr.mxu0 0.0
  %385 = vmatpush1.msra.mxu0 0.0
  %386 = vmatprep.subr.mxu0 0.0
  %387 = vmatpush1.msra.mxu0 0.0
  %388 = vmatprep.subr.mxu0 0.0
  %389 = vmatpush1.msra.mxu0 0.0
  %390 = vmatprep.subr.mxu0 0.0
  %391 = vmatpush1.msra.mxu0 0.0
  %392 = vmatprep.subr.mxu0 0.0
  %393 = vmatpush1.msra.mxu0 %v33
  %394 = vmatprep.subr.mxu0 0.0
  %395 = vmatpush2.msra.mxu0 0.0
  %396 = vmatprep.subr.mxu0 0.0
  %397 = vmatpush2.msra.mxu0 0.0
  %398 = vmatprep.subr.mxu0 0.0
  %399 = vmatpush2.msra.mxu0 0.0
  %400 = vmatprep.subr.mxu0 0.0
  %401 = vmatpush2.msra.mxu0 0.0
  %402 = vmatprep.subr.mxu0 0.0
  %403 = vmatpush2.msra.mxu0 0.0
  %404 = vmatprep.subr.mxu0 0.0
  %405 = vmatpush2.msra.mxu0 0.0
  %406 = vmatprep.subr.mxu0 0.0
  %407 = vmatpush2.msra.mxu0 0.0
  %408 = vmatprep.subr.mxu0 0.0
  %409 = vmatpush2.msra.mxu0 0.0
  %410 = vmatprep.subr.mxu0 0.0
  %411 = vmatpush2.msra.mxu0 0.0
  %412 = vmatprep.subr.mxu0 0.0
  %413 = vmatpush2.msra.mxu0 0.0
  %414 = vmatprep.subr.mxu0 0.0
  %415 = vmatpush2.msra.mxu0 0.0
  %416 = vmatprep.subr.mxu0 0.0
  %417 = vmatpush2.msra.mxu0 0.0
  %418 = vmatprep.subr.mxu0 0.0
  %419 = vmatpush2.msra.mxu0 0.0
  %420 = vmatprep.subr.mxu0 0.0
  %421 = vmatpush2.msra.mxu0 0.0
  %422 = vmatprep.subr.mxu0 0.0
  %423 = vmatpush2.msra.mxu0 0.0
  %424 = vmatprep.subr.mxu0 0.0
  %425 = vmatpush2.msra.mxu0 0.0
  %426 = vmatprep.mubr.f32.mxu0 0.0
  %427 = vmatmul.mubr.f32.gmra.mxu0 %v230
  %v428 = vpop.f32.mrf.mxu0
  %v429 = vadd.f32 %v360, %v428
  %v430 = vpop.f32.mrf.mxu0
  %431 = vmatprep.mubr.f32.mxu0 0.0
  %432 = vmatmul.mubr.f32.gmra.mxu0 %v233
  %v433 = vpop.f32.mrf.mxu0
  %v434 = vadd.f32 %v360, %v433
  %v435 = vpop.f32.mrf.mxu0
  %436 = vmatprep.mubr.f32.mxu0 0.0
  %437 = vmatmul.mubr.f32.gmra.mxu0 %v236
  %v438 = vpop.f32.mrf.mxu0
  %v439 = vadd.f32 %v360, %v438
  %v440 = vpop.f32.mrf.mxu0
  %441 = vmatprep.mubr.f32.mxu0 0.0
  %442 = vmatmul.mubr.f32.gmra.mxu0 %v239
  %v443 = vpop.f32.mrf.mxu0
  %v444 = vadd.f32 %v360, %v443
  %v445 = vpop.f32.mrf.mxu0
  %446 = vmatprep.mubr.f32.mxu0 0.0
  %447 = vmatmul.mubr.f32.gmra.mxu0 %v242
  %v448 = vpop.f32.mrf.mxu0
  %v449 = vadd.f32 %v360, %v448
  %v450 = vpop.f32.mrf.mxu0
  %451 = vmatprep.mubr.f32.mxu0 0.0
  %452 = vmatmul.mubr.f32.gmra.mxu0 %v245
  %v453 = vpop.f32.mrf.mxu0
  %v454 = vadd.f32 %v360, %v453
  %v455 = vpop.f32.mrf.mxu0
  %456 = vmatprep.mubr.f32.mxu0 0.0
  %457 = vmatmul.mubr.f32.gmra.mxu0 %v248
  %v458 = vpop.f32.mrf.mxu0
  %v459 = vadd.f32 %v360, %v458
  %v460 = vpop.f32.mrf.mxu0
  %461 = vdwg.mxu0
  %462 = vst.msk [vmem:[#allocation3 + $0x8] sm:$0xff] %vm227, %v429
  %463 = vst.msk [vmem:[#allocation3 + $0x10] sm:$0xff] %vm227, %v434
  %464 = vst.msk [vmem:[#allocation3 + $0x18] sm:$0xff] %vm227, %v439
  %465 = vst.msk [vmem:[#allocation3 + $0x20] sm:$0xff] %vm227, %v444
  %466 = vst.msk [vmem:[#allocation3 + $0x28] sm:$0xff] %vm227, %v449
  %467 = vst.msk [vmem:[#allocation3 + $0x30] sm:$0xff] %vm227, %v454
  %468 = vst.msk [vmem:[#allocation3 + $0x38] sm:$0xff] %vm227, %v459
  %v469 = vlaneseq
  %v470 = vshrl.u32 %v469, 7
  %v471 = vsub.s32 0, %v470
  %v472 = vrot.slane %v38, %v471
  %473 = vst.msk [vmem:[#allocation4] sm:$0xff] %vm227, %v472
  %474 = vmatprep.subr.mxu0 0.0
  %475 = vmatpush1.msra.mxu0 0.0
  %476 = vmatprep.subr.mxu0 0.0
  %477 = vmatpush1.msra.mxu0 0.0
  %478 = vmatprep.subr.mxu0 0.0
  %479 = vmatpush1.msra.mxu0 0.0
  %480 = vmatprep.subr.mxu0 0.0
  %481 = vmatpush1.msra.mxu0 0.0
  %482 = vmatprep.subr.mxu0 0.0
  %483 = vmatpush1.msra.mxu0 0.0
  %484 = vmatprep.subr.mxu0 0.0
  %485 = vmatpush1.msra.mxu0 0.0
  %486 = vmatprep.subr.mxu0 0.0
  %487 = vmatpush1.msra.mxu0 0.0
  %488 = vmatprep.subr.mxu0 0.0
  %489 = vmatpush1.msra.mxu0 0.0
  %490 = vmatprep.subr.mxu0 0.0
  %491 = vmatpush1.msra.mxu0 0.0
  %492 = vmatprep.subr.mxu0 0.0
  %493 = vmatpush1.msra.mxu0 0.0
  %494 = vmatprep.subr.mxu0 0.0
  %495 = vmatpush1.msra.mxu0 0.0
  %496 = vmatprep.subr.mxu0 0.0
  %497 = vmatpush1.msra.mxu0 0.0
  %498 = vmatprep.subr.mxu0 0.0
  %499 = vmatpush1.msra.mxu0 0.0
  %500 = vmatprep.subr.mxu0 0.0
  %501 = vmatpush1.msra.mxu0 0.0
  %502 = vmatprep.subr.mxu0 0.0
  %503 = vmatpush1.msra.mxu0 0.0
  %504 = vmatprep.subr.mxu0 0.0
  %505 = vmatpush1.msra.mxu0 %v34
  %506 = vmatprep.subr.mxu0 0.0
  %507 = vmatpush2.msra.mxu0 0.0
  %508 = vmatprep.subr.mxu0 0.0
  %509 = vmatpush2.msra.mxu0 0.0
  %510 = vmatprep.subr.mxu0 0.0
  %511 = vmatpush2.msra.mxu0 0.0
  %512 = vmatprep.subr.mxu0 0.0
  %513 = vmatpush2.msra.mxu0 0.0
  %514 = vmatprep.subr.mxu0 0.0
  %515 = vmatpush2.msra.mxu0 0.0
  %516 = vmatprep.subr.mxu0 0.0
  %517 = vmatpush2.msra.mxu0 0.0
  %518 = vmatprep.subr.mxu0 0.0
  %519 = vmatpush2.msra.mxu0 0.0
  %520 = vmatprep.subr.mxu0 0.0
  %521 = vmatpush2.msra.mxu0 0.0
  %522 = vmatprep.subr.mxu0 0.0
  %523 = vmatpush2.msra.mxu0 0.0
  %524 = vmatprep.subr.mxu0 0.0
  %525 = vmatpush2.msra.mxu0 0.0
  %526 = vmatprep.subr.mxu0 0.0
  %527 = vmatpush2.msra.mxu0 0.0
  %528 = vmatprep.subr.mxu0 0.0
  %529 = vmatpush2.msra.mxu0 0.0
  %530 = vmatprep.subr.mxu0 0.0
  %531 = vmatpush2.msra.mxu0 0.0
  %532 = vmatprep.subr.mxu0 0.0
  %533 = vmatpush2.msra.mxu0 0.0
  %534 = vmatprep.subr.mxu0 0.0
  %535 = vmatpush2.msra.mxu0 0.0
  %536 = vmatprep.subr.mxu0 0.0
  %537 = vmatpush2.msra.mxu0 0.0
  %538 = vmatprep.mubr.f32.mxu0 0.0
  %539 = vmatmul.mubr.f32.gmra.mxu0 %v230
  %v540 = vpop.f32.mrf.mxu0
  %v541 = vadd.f32 %v472, %v540
  %v542 = vpop.f32.mrf.mxu0
  %543 = vmatprep.mubr.f32.mxu0 0.0
  %544 = vmatmul.mubr.f32.gmra.mxu0 %v233
  %v545 = vpop.f32.mrf.mxu0
  %v546 = vadd.f32 %v472, %v545
  %v547 = vpop.f32.mrf.mxu0
  %548 = vmatprep.mubr.f32.mxu0 0.0
  %549 = vmatmul.mubr.f32.gmra.mxu0 %v236
  %v550 = vpop.f32.mrf.mxu0
  %v551 = vadd.f32 %v472, %v550
  %v552 = vpop.f32.mrf.mxu0
  %553 = vmatprep.mubr.f32.mxu0 0.0
  %554 = vmatmul.mubr.f32.gmra.mxu0 %v239
  %v555 = vpop.f32.mrf.mxu0
  %v556 = vadd.f32 %v472, %v555
  %v557 = vpop.f32.mrf.mxu0
  %558 = vmatprep.mubr.f32.mxu0 0.0
  %559 = vmatmul.mubr.f32.gmra.mxu0 %v242
  %v560 = vpop.f32.mrf.mxu0
  %v561 = vadd.f32 %v472, %v560
  %v562 = vpop.f32.mrf.mxu0
  %563 = vmatprep.mubr.f32.mxu0 0.0
  %564 = vmatmul.mubr.f32.gmra.mxu0 %v245
  %v565 = vpop.f32.mrf.mxu0
  %v566 = vadd.f32 %v472, %v565
  %v567 = vpop.f32.mrf.mxu0
  %568 = vmatprep.mubr.f32.mxu0 0.0
  %569 = vmatmul.mubr.f32.gmra.mxu0 %v248
  %v570 = vpop.f32.mrf.mxu0
  %v571 = vadd.f32 %v472, %v570
  %v572 = vpop.f32.mrf.mxu0
  %573 = vdwg.mxu0
  %574 = vst.msk [vmem:[#allocation4 + $0x8] sm:$0xff] %vm227, %v541
  %575 = vst.msk [vmem:[#allocation4 + $0x10] sm:$0xff] %vm227, %v546
  %576 = vst.msk [vmem:[#allocation4 + $0x18] sm:$0xff] %vm227, %v551
  %577 = vst.msk [vmem:[#allocation4 + $0x20] sm:$0xff] %vm227, %v556
  %578 = vst.msk [vmem:[#allocation4 + $0x28] sm:$0xff] %vm227, %v561
  %579 = vst.msk [vmem:[#allocation4 + $0x30] sm:$0xff] %vm227, %v566
  %580 = vst.msk [vmem:[#allocation4 + $0x38] sm:$0xff] %vm227, %v571
  %v581 = vld [vmem:[%s2] sm:$0xff]
  %v583 = vsel %vm227, %v581, 0
  %585 = vmatprep.subr.mxu0 0.0
  %586 = vmatpush1.msra.mxu0 0.0
  %587 = vmatprep.subr.mxu0 0.0
  %588 = vmatpush1.msra.mxu0 0.0
  %589 = vmatprep.subr.mxu0 0.0
  %590 = vmatpush1.msra.mxu0 0.0
  %591 = vmatprep.subr.mxu0 0.0
  %592 = vmatpush1.msra.mxu0 0.0
  %593 = vmatprep.subr.mxu0 0.0
  %594 = vmatpush1.msra.mxu0 0.0
  %595 = vmatprep.subr.mxu0 0.0
  %596 = vmatpush1.msra.mxu0 0.0
  %597 = vmatprep.subr.mxu0 0.0
  %598 = vmatpush1.msra.mxu0 0.0
  %599 = vmatprep.subr.mxu0 0.0
  %600 = vmatpush1.msra.mxu0 0.0
  %601 = vmatprep.subr.mxu0 0.0
  %602 = vmatpush1.msra.mxu0 0.0
  %603 = vmatprep.subr.mxu0 0.0
  %604 = vmatpush1.msra.mxu0 0.0
  %605 = vmatprep.subr.mxu0 0.0
  %606 = vmatpush1.msra.mxu0 0.0
  %607 = vmatprep.subr.mxu0 0.0
  %608 = vmatpush1.msra.mxu0 0.0
  %609 = vmatprep.subr.mxu0 0.0
  %610 = vmatpush1.msra.mxu0 %v23
  %611 = vmatprep.subr.mxu0 0.0
  %612 = vmatpush1.msra.mxu0 %v22
  %613 = vmatprep.subr.mxu0 0.0
  %614 = vmatpush1.msra.mxu0 %v21
  %615 = vmatprep.subr.mxu0 0.0
  %616 = vmatpush1.msra.mxu0 %v20
  %617 = vmatprep.subr.mxu0 0.0
  %618 = vmatpush2.msra.mxu0 0.0
  %619 = vmatprep.subr.mxu0 0.0
  %620 = vmatpush2.msra.mxu0 0.0
  %621 = vmatprep.subr.mxu0 0.0
  %622 = vmatpush2.msra.mxu0 0.0
  %623 = vmatprep.subr.mxu0 0.0
  %624 = vmatpush2.msra.mxu0 0.0
  %625 = vmatprep.subr.mxu0 0.0
  %626 = vmatpush2.msra.mxu0 0.0
  %627 = vmatprep.subr.mxu0 0.0
  %628 = vmatpush2.msra.mxu0 0.0
  %629 = vmatprep.subr.mxu0 0.0
  %630 = vmatpush2.msra.mxu0 0.0
  %631 = vmatprep.subr.mxu0 0.0
  %632 = vmatpush2.msra.mxu0 0.0
  %633 = vmatprep.subr.mxu0 0.0
  %634 = vmatpush2.msra.mxu0 0.0
  %635 = vmatprep.subr.mxu0 0.0
  %636 = vmatpush2.msra.mxu0 0.0
  %637 = vmatprep.subr.mxu0 0.0
  %638 = vmatpush2.msra.mxu0 0.0
  %639 = vmatprep.subr.mxu0 0.0
  %640 = vmatpush2.msra.mxu0 0.0
  %641 = vmatprep.subr.mxu0 0.0
  %642 = vmatpush2.msra.mxu0 0.0
  %643 = vmatprep.subr.mxu0 0.0
  %644 = vmatpush2.msra.mxu0 0.0
  %645 = vmatprep.subr.mxu0 0.0
  %646 = vmatpush2.msra.mxu0 0.0
  %647 = vmatprep.subr.mxu0 0.0
  %648 = vmatpush2.msra.mxu0 0.0
  %649 = vmatprep.mubr.f32.mxu0 0.0
  %650 = vmatmul.mubr.f32.gmra.mxu0 %v583
  %v651 = vpop.f32.mrf.mxu0
  %v652 = vadd.f32 0.0, %v651
  %v653 = vpop.f32.mrf.mxu0
  %654 = vdwg.mxu0
  %655 = vmatprep.subr.mxu0 0.0
  %656 = vmatpush1.msra.mxu0 0.0
  %657 = vmatprep.subr.mxu0 0.0
  %658 = vmatpush1.msra.mxu0 0.0
  %659 = vmatprep.subr.mxu0 0.0
  %660 = vmatpush1.msra.mxu0 0.0
  %661 = vmatprep.subr.mxu0 0.0
  %662 = vmatpush1.msra.mxu0 0.0
  %663 = vmatprep.subr.mxu0 0.0
  %664 = vmatpush1.msra.mxu0 0.0
  %665 = vmatprep.subr.mxu0 0.0
  %666 = vmatpush1.msra.mxu0 0.0
  %667 = vmatprep.subr.mxu0 0.0
  %668 = vmatpush1.msra.mxu0 0.0
  %669 = vmatprep.subr.mxu0 0.0
  %670 = vmatpush1.msra.mxu0 0.0
  %671 = vmatprep.subr.mxu0 0.0
  %672 = vmatpush1.msra.mxu0 0.0
  %673 = vmatprep.subr.mxu0 0.0
  %674 = vmatpush1.msra.mxu0 0.0
  %675 = vmatprep.subr.mxu0 0.0
  %676 = vmatpush1.msra.mxu0 0.0
  %677 = vmatprep.subr.mxu0 0.0
  %678 = vmatpush1.msra.mxu0 0.0
  %679 = vmatprep.subr.mxu0 0.0
  %680 = vmatpush1.msra.mxu0 %v27
  %681 = vmatprep.subr.mxu0 0.0
  %682 = vmatpush1.msra.mxu0 %v26
  %683 = vmatprep.subr.mxu0 0.0
  %684 = vmatpush1.msra.mxu0 %v25
  %685 = vmatprep.subr.mxu0 0.0
  %686 = vmatpush1.msra.mxu0 %v24
  %687 = vmatprep.subr.mxu0 0.0
  %688 = vmatpush2.msra.mxu0 0.0
  %689 = vmatprep.subr.mxu0 0.0
  %690 = vmatpush2.msra.mxu0 0.0
  %691 = vmatprep.subr.mxu0 0.0
  %692 = vmatpush2.msra.mxu0 0.0
  %693 = vmatprep.subr.mxu0 0.0
  %694 = vmatpush2.msra.mxu0 0.0
  %695 = vmatprep.subr.mxu0 0.0
  %696 = vmatpush2.msra.mxu0 0.0
  %697 = vmatprep.subr.mxu0 0.0
  %698 = vmatpush2.msra.mxu0 0.0
  %699 = vmatprep.subr.mxu0 0.0
  %700 = vmatpush2.msra.mxu0 0.0
  %701 = vmatprep.subr.mxu0 0.0
  %702 = vmatpush2.msra.mxu0 0.0
  %703 = vmatprep.subr.mxu0 0.0
  %704 = vmatpush2.msra.mxu0 0.0
  %705 = vmatprep.subr.mxu0 0.0
  %706 = vmatpush2.msra.mxu0 0.0
  %707 = vmatprep.subr.mxu0 0.0
  %708 = vmatpush2.msra.mxu0 0.0
  %709 = vmatprep.subr.mxu0 0.0
  %710 = vmatpush2.msra.mxu0 0.0
  %711 = vmatprep.subr.mxu0 0.0
  %712 = vmatpush2.msra.mxu0 0.0
  %713 = vmatprep.subr.mxu0 0.0
  %714 = vmatpush2.msra.mxu0 0.0
  %715 = vmatprep.subr.mxu0 0.0
  %716 = vmatpush2.msra.mxu0 0.0
  %717 = vmatprep.subr.mxu0 0.0
  %718 = vmatpush2.msra.mxu0 0.0
  %719 = vmatprep.mubr.f32.mxu0 0.0
  %720 = vmatmul.mubr.f32.gmra.mxu0 %v583
  %v721 = vpop.f32.mrf.mxu0
  %v722 = vadd.f32 0.0, %v721
  %v723 = vpop.f32.mrf.mxu0
  %724 = vdwg.mxu0
  %v725 = vld [vmem:[#allocation2] sm:$0xff]
  %v726 = vadd.f32 %v725, %v652
  %v727 = vxor.u32 %v726, 2147483648
  %v728 = vmul.f32 %v727, 1.442695
  %v729 = vpow.pop %v728
  %v730 = vadd.f32 %v729, 1.0
  %v731 = vrcp.pop %v730
  %v732 = vmul.f32 1.0, %v731
  %v733 = vld [vmem:[#allocation3] sm:$0xff]
  %v734 = vadd.f32 %v733, %v722
  %v735 = vxor.u32 %v734, 2147483648
  %v736 = vmul.f32 %v735, 1.442695
  %v737 = vpow.pop %v736
  %v738 = vadd.f32 %v737, 1.0
  %v739 = vrcp.pop %v738
  %v740 = vmul.f32 1.0, %v739
  %v741 = vld [vmem:[#allocation4] sm:$0xff]
  %v742 = vlaneseq
  %v743 = vshrl.u32 %v742, 7
  %v744 = vsub.s32 0, %v743
  %v745 = vrot.slane %v39, %v744
  %746 = vmatprep.subr.mxu0 0.0
  %747 = vmatpush1.msra.mxu0 0.0
  %748 = vmatprep.subr.mxu0 0.0
  %749 = vmatpush1.msra.mxu0 0.0
  %750 = vmatprep.subr.mxu0 0.0
  %751 = vmatpush1.msra.mxu0 0.0
  %752 = vmatprep.subr.mxu0 0.0
  %753 = vmatpush1.msra.mxu0 0.0
  %754 = vmatprep.subr.mxu0 0.0
  %755 = vmatpush1.msra.mxu0 0.0
  %756 = vmatprep.subr.mxu0 0.0
  %757 = vmatpush1.msra.mxu0 0.0
  %758 = vmatprep.subr.mxu0 0.0
  %759 = vmatpush1.msra.mxu0 0.0
  %760 = vmatprep.subr.mxu0 0.0
  %761 = vmatpush1.msra.mxu0 0.0
  %762 = vmatprep.subr.mxu0 0.0
  %763 = vmatpush1.msra.mxu0 0.0
  %764 = vmatprep.subr.mxu0 0.0
  %765 = vmatpush1.msra.mxu0 0.0
  %766 = vmatprep.subr.mxu0 0.0
  %767 = vmatpush1.msra.mxu0 0.0
  %768 = vmatprep.subr.mxu0 0.0
  %769 = vmatpush1.msra.mxu0 0.0
  %770 = vmatprep.subr.mxu0 0.0
  %771 = vmatpush1.msra.mxu0 %v31
  %772 = vmatprep.subr.mxu0 0.0
  %773 = vmatpush1.msra.mxu0 %v30
  %774 = vmatprep.subr.mxu0 0.0
  %775 = vmatpush1.msra.mxu0 %v29
  %776 = vmatprep.subr.mxu0 0.0
  %777 = vmatpush1.msra.mxu0 %v28
  %778 = vmatprep.subr.mxu0 0.0
  %779 = vmatpush2.msra.mxu0 0.0
  %780 = vmatprep.subr.mxu0 0.0
  %781 = vmatpush2.msra.mxu0 0.0
  %782 = vmatprep.subr.mxu0 0.0
  %783 = vmatpush2.msra.mxu0 0.0
  %784 = vmatprep.subr.mxu0 0.0
  %785 = vmatpush2.msra.mxu0 0.0
  %786 = vmatprep.subr.mxu0 0.0
  %787 = vmatpush2.msra.mxu0 0.0
  %788 = vmatprep.subr.mxu0 0.0
  %789 = vmatpush2.msra.mxu0 0.0
  %790 = vmatprep.subr.mxu0 0.0
  %791 = vmatpush2.msra.mxu0 0.0
  %792 = vmatprep.subr.mxu0 0.0
  %793 = vmatpush2.msra.mxu0 0.0
  %794 = vmatprep.subr.mxu0 0.0
  %795 = vmatpush2.msra.mxu0 0.0
  %796 = vmatprep.subr.mxu0 0.0
  %797 = vmatpush2.msra.mxu0 0.0
  %798 = vmatprep.subr.mxu0 0.0
  %799 = vmatpush2.msra.mxu0 0.0
  %800 = vmatprep.subr.mxu0 0.0
  %801 = vmatpush2.msra.mxu0 0.0
  %802 = vmatprep.subr.mxu0 0.0
  %803 = vmatpush2.msra.mxu0 0.0
  %804 = vmatprep.subr.mxu0 0.0
  %805 = vmatpush2.msra.mxu0 0.0
  %806 = vmatprep.subr.mxu0 0.0
  %807 = vmatpush2.msra.mxu0 0.0
  %808 = vmatprep.subr.mxu0 0.0
  %809 = vmatpush2.msra.mxu0 0.0
  %810 = vmatprep.mubr.f32.mxu0 0.0
  %811 = vmatmul.mubr.f32.gmra.mxu0 %v583
  %v812 = vpop.f32.mrf.mxu0
  %v813 = vadd.f32 %v745, %v812
  %v814 = vpop.f32.mrf.mxu0
  %815 = vdwg.mxu0
  %v816 = vmul.f32 %v732, %v813
  %v817 = vadd.f32 %v741, %v816
  %v818 = vtanh.pop %v817
  %v819 = vsub.f32 1.0, %v740
  %v820 = vmul.f32 %v819, %v818
  %v821 = vmul.f32 %v740, %v581
  %v822 = vadd.f32 %v820, %v821
  %823 = vst.msk [vmem:[#allocation5] sm:$0xff] %vm227, %v822
  %v825 = vsel %vm227, %v822, 0
  %827 = vmatprep.subr.mxu0 0.0
  %828 = vmatpush1.msra.mxu0 0.0
  %829 = vmatprep.subr.mxu0 0.0
  %830 = vmatpush1.msra.mxu0 0.0
  %831 = vmatprep.subr.mxu0 0.0
  %832 = vmatpush1.msra.mxu0 0.0
  %833 = vmatprep.subr.mxu0 0.0
  %834 = vmatpush1.msra.mxu0 0.0
  %835 = vmatprep.subr.mxu0 0.0
  %836 = vmatpush1.msra.mxu0 0.0
  %837 = vmatprep.subr.mxu0 0.0
  %838 = vmatpush1.msra.mxu0 0.0
  %839 = vmatprep.subr.mxu0 0.0
  %840 = vmatpush1.msra.mxu0 0.0
  %841 = vmatprep.subr.mxu0 0.0
  %842 = vmatpush1.msra.mxu0 0.0
  %843 = vmatprep.subr.mxu0 0.0
  %844 = vmatpush1.msra.mxu0 0.0
  %845 = vmatprep.subr.mxu0 0.0
  %846 = vmatpush1.msra.mxu0 0.0
  %847 = vmatprep.subr.mxu0 0.0
  %848 = vmatpush1.msra.mxu0 0.0
  %849 = vmatprep.subr.mxu0 0.0
  %850 = vmatpush1.msra.mxu0 0.0
  %851 = vmatprep.subr.mxu0 0.0
  %852 = vmatpush1.msra.mxu0 %v23
  %853 = vmatprep.subr.mxu0 0.0
  %854 = vmatpush1.msra.mxu0 %v22
  %855 = vmatprep.subr.mxu0 0.0
  %856 = vmatpush1.msra.mxu0 %v21
  %857 = vmatprep.subr.mxu0 0.0
  %858 = vmatpush1.msra.mxu0 %v20
  %859 = vmatprep.subr.mxu0 0.0
  %860 = vmatpush2.msra.mxu0 0.0
  %861 = vmatprep.subr.mxu0 0.0
  %862 = vmatpush2.msra.mxu0 0.0
  %863 = vmatprep.subr.mxu0 0.0
  %864 = vmatpush2.msra.mxu0 0.0
  %865 = vmatprep.subr.mxu0 0.0
  %866 = vmatpush2.msra.mxu0 0.0
  %867 = vmatprep.subr.mxu0 0.0
  %868 = vmatpush2.msra.mxu0 0.0
  %869 = vmatprep.subr.mxu0 0.0
  %870 = vmatpush2.msra.mxu0 0.0
  %871 = vmatprep.subr.mxu0 0.0
  %872 = vmatpush2.msra.mxu0 0.0
  %873 = vmatprep.subr.mxu0 0.0
  %874 = vmatpush2.msra.mxu0 0.0
  %875 = vmatprep.subr.mxu0 0.0
  %876 = vmatpush2.msra.mxu0 0.0
  %877 = vmatprep.subr.mxu0 0.0
  %878 = vmatpush2.msra.mxu0 0.0
  %879 = vmatprep.subr.mxu0 0.0
  %880 = vmatpush2.msra.mxu0 0.0
  %881 = vmatprep.subr.mxu0 0.0
  %882 = vmatpush2.msra.mxu0 0.0
  %883 = vmatprep.subr.mxu0 0.0
  %884 = vmatpush2.msra.mxu0 0.0
  %885 = vmatprep.subr.mxu0 0.0
  %886 = vmatpush2.msra.mxu0 0.0
  %887 = vmatprep.subr.mxu0 0.0
  %888 = vmatpush2.msra.mxu0 0.0
  %889 = vmatprep.subr.mxu0 0.0
  %890 = vmatpush2.msra.mxu0 0.0
  %891 = vmatprep.mubr.f32.mxu0 0.0
  %892 = vmatmul.mubr.f32.gmra.mxu0 %v825
  %v893 = vpop.f32.mrf.mxu0
  %v894 = vadd.f32 0.0, %v893
  %v895 = vpop.f32.mrf.mxu0
  %896 = vdwg.mxu0
  %897 = vmatprep.subr.mxu0 0.0
  %898 = vmatpush1.msra.mxu0 0.0
  %899 = vmatprep.subr.mxu0 0.0
  %900 = vmatpush1.msra.mxu0 0.0
  %901 = vmatprep.subr.mxu0 0.0
  %902 = vmatpush1.msra.mxu0 0.0
  %903 = vmatprep.subr.mxu0 0.0
  %904 = vmatpush1.msra.mxu0 0.0
  %905 = vmatprep.subr.mxu0 0.0
  %906 = vmatpush1.msra.mxu0 0.0
  %907 = vmatprep.subr.mxu0 0.0
  %908 = vmatpush1.msra.mxu0 0.0
  %909 = vmatprep.subr.mxu0 0.0
  %910 = vmatpush1.msra.mxu0 0.0
  %911 = vmatprep.subr.mxu0 0.0
  %912 = vmatpush1.msra.mxu0 0.0
  %913 = vmatprep.subr.mxu0 0.0
  %914 = vmatpush1.msra.mxu0 0.0
  %915 = vmatprep.subr.mxu0 0.0
  %916 = vmatpush1.msra.mxu0 0.0
  %917 = vmatprep.subr.mxu0 0.0
  %918 = vmatpush1.msra.mxu0 0.0
  %919 = vmatprep.subr.mxu0 0.0
  %920 = vmatpush1.msra.mxu0 0.0
  %921 = vmatprep.subr.mxu0 0.0
  %922 = vmatpush1.msra.mxu0 %v27
  %923 = vmatprep.subr.mxu0 0.0
  %924 = vmatpush1.msra.mxu0 %v26
  %925 = vmatprep.subr.mxu0 0.0
  %926 = vmatpush1.msra.mxu0 %v25
  %927 = vmatprep.subr.mxu0 0.0
  %928 = vmatpush1.msra.mxu0 %v24
  %929 = vmatprep.subr.mxu0 0.0
  %930 = vmatpush2.msra.mxu0 0.0
  %931 = vmatprep.subr.mxu0 0.0
  %932 = vmatpush2.msra.mxu0 0.0
  %933 = vmatprep.subr.mxu0 0.0
  %934 = vmatpush2.msra.mxu0 0.0
  %935 = vmatprep.subr.mxu0 0.0
  %936 = vmatpush2.msra.mxu0 0.0
  %937 = vmatprep.subr.mxu0 0.0
  %938 = vmatpush2.msra.mxu0 0.0
  %939 = vmatprep.subr.mxu0 0.0
  %940 = vmatpush2.msra.mxu0 0.0
  %941 = vmatprep.subr.mxu0 0.0
  %942 = vmatpush2.msra.mxu0 0.0
  %943 = vmatprep.subr.mxu0 0.0
  %944 = vmatpush2.msra.mxu0 0.0
  %945 = vmatprep.subr.mxu0 0.0
  %946 = vmatpush2.msra.mxu0 0.0
  %947 = vmatprep.subr.mxu0 0.0
  %948 = vmatpush2.msra.mxu0 0.0
  %949 = vmatprep.subr.mxu0 0.0
  %950 = vmatpush2.msra.mxu0 0.0
  %951 = vmatprep.subr.mxu0 0.0
  %952 = vmatpush2.msra.mxu0 0.0
  %953 = vmatprep.subr.mxu0 0.0
  %954 = vmatpush2.msra.mxu0 0.0
  %955 = vmatprep.subr.mxu0 0.0
  %956 = vmatpush2.msra.mxu0 0.0
  %957 = vmatprep.subr.mxu0 0.0
  %958 = vmatpush2.msra.mxu0 0.0
  %959 = vmatprep.subr.mxu0 0.0
  %960 = vmatpush2.msra.mxu0 0.0
  %961 = vmatprep.mubr.f32.mxu0 0.0
  %962 = vmatmul.mubr.f32.gmra.mxu0 %v825
  %v963 = vpop.f32.mrf.mxu0
  %v964 = vadd.f32 0.0, %v963
  %v965 = vpop.f32.mrf.mxu0
  %966 = vdwg.mxu0
  %s967 = scalar_lea.vmem [#allocation2], 8
  %v968 = vld [vmem:[%s967] sm:$0xff]
  %v969 = vadd.f32 %v968, %v894
  %v970 = vxor.u32 %v969, 2147483648
  %v971 = vmul.f32 %v970, 1.442695
  %v972 = vpow.pop %v971
  %v973 = vadd.f32 %v972, 1.0
  %v974 = vrcp.pop %v973
  %v975 = vmul.f32 1.0, %v974
  %s976 = scalar_lea.vmem [#allocation3], 8
  %v977 = vld [vmem:[%s976] sm:$0xff]
  %v978 = vadd.f32 %v977, %v964
  %v979 = vxor.u32 %v978, 2147483648
  %v980 = vmul.f32 %v979, 1.442695
  %v981 = vpow.pop %v980
  %v982 = vadd.f32 %v981, 1.0
  %v983 = vrcp.pop %v982
  %v984 = vmul.f32 1.0, %v983
  %s985 = scalar_lea.vmem [#allocation4], 8
  %v986 = vld [vmem:[%s985] sm:$0xff]
  %987 = vmatprep.subr.mxu0 0.0
  %988 = vmatpush1.msra.mxu0 0.0
  %989 = vmatprep.subr.mxu0 0.0
  %990 = vmatpush1.msra.mxu0 0.0
  %991 = vmatprep.subr.mxu0 0.0
  %992 = vmatpush1.msra.mxu0 0.0
  %993 = vmatprep.subr.mxu0 0.0
  %994 = vmatpush1.msra.mxu0 0.0
  %995 = vmatprep.subr.mxu0 0.0
  %996 = vmatpush1.msra.mxu0 0.0
  %997 = vmatprep.subr.mxu0 0.0
  %998 = vmatpush1.msra.mxu0 0.0
  %999 = vmatprep.subr.mxu0 0.0
  %1000 = vmatpush1.msra.mxu0 0.0
  %1001 = vmatprep.subr.mxu0 0.0
  %1002 = vmatpush1.msra.mxu0 0.0
  %1003 = vmatprep.subr.mxu0 0.0
  %1004 = vmatpush1.msra.mxu0 0.0
  %1005 = vmatprep.subr.mxu0 0.0
  %1006 = vmatpush1.msra.mxu0 0.0
  %1007 = vmatprep.subr.mxu0 0.0
  %1008 = vmatpush1.msra.mxu0 0.0
  %1009 = vmatprep.subr.mxu0 0.0
  %1010 = vmatpush1.msra.mxu0 0.0
  %1011 = vmatprep.subr.mxu0 0.0
  %1012 = vmatpush1.msra.mxu0 %v31
  %1013 = vmatprep.subr.mxu0 0.0
  %1014 = vmatpush1.msra.mxu0 %v30
  %1015 = vmatprep.subr.mxu0 0.0
  %1016 = vmatpush1.msra.mxu0 %v29
  %1017 = vmatprep.subr.mxu0 0.0
  %1018 = vmatpush1.msra.mxu0 %v28
  %1019 = vmatprep.subr.mxu0 0.0
  %1020 = vmatpush2.msra.mxu0 0.0
  %1021 = vmatprep.subr.mxu0 0.0
  %1022 = vmatpush2.msra.mxu0 0.0
  %1023 = vmatprep.subr.mxu0 0.0
  %1024 = vmatpush2.msra.mxu0 0.0
  %1025 = vmatprep.subr.mxu0 0.0
  %1026 = vmatpush2.msra.mxu0 0.0
  %1027 = vmatprep.subr.mxu0 0.0
  %1028 = vmatpush2.msra.mxu0 0.0
  %1029 = vmatprep.subr.mxu0 0.0
  %1030 = vmatpush2.msra.mxu0 0.0
  %1031 = vmatprep.subr.mxu0 0.0
  %1032 = vmatpush2.msra.mxu0 0.0
  %1033 = vmatprep.subr.mxu0 0.0
  %1034 = vmatpush2.msra.mxu0 0.0
  %1035 = vmatprep.subr.mxu0 0.0
  %1036 = vmatpush2.msra.mxu0 0.0
  %1037 = vmatprep.subr.mxu0 0.0
  %1038 = vmatpush2.msra.mxu0 0.0
  %1039 = vmatprep.subr.mxu0 0.0
  %1040 = vmatpush2.msra.mxu0 0.0
  %1041 = vmatprep.subr.mxu0 0.0
  %1042 = vmatpush2.msra.mxu0 0.0
  %1043 = vmatprep.subr.mxu0 0.0
  %1044 = vmatpush2.msra.mxu0 0.0
  %1045 = vmatprep.subr.mxu0 0.0
  %1046 = vmatpush2.msra.mxu0 0.0
  %1047 = vmatprep.subr.mxu0 0.0
  %1048 = vmatpush2.msra.mxu0 0.0
  %1049 = vmatprep.subr.mxu0 0.0
  %1050 = vmatpush2.msra.mxu0 0.0
  %1051 = vmatprep.mubr.f32.mxu0 0.0
  %1052 = vmatmul.mubr.f32.gmra.mxu0 %v825
  %v1053 = vpop.f32.mrf.mxu0
  %v1054 = vadd.f32 %v745, %v1053
  %v1055 = vpop.f32.mrf.mxu0
  %1056 = vdwg.mxu0
  %v1057 = vmul.f32 %v975, %v1054
  %v1058 = vadd.f32 %v986, %v1057
  %v1059 = vtanh.pop %v1058
  %v1060 = vsub.f32 1.0, %v984
  %v1061 = vmul.f32 %v1060, %v1059
  %v1062 = vmul.f32 %v984, %v822
  %v1063 = vadd.f32 %v1061, %v1062
  %s1064 = scalar_lea.vmem [#allocation5], 8
  %1065 = vst.msk [vmem:[%s1064] sm:$0xff] %vm227, %v1063
  %v1067 = vsel %vm227, %v1063, 0
  %1069 = vmatprep.subr.mxu0 0.0
  %1070 = vmatpush1.msra.mxu0 0.0
  %1071 = vmatprep.subr.mxu0 0.0
  %1072 = vmatpush1.msra.mxu0 0.0
  %1073 = vmatprep.subr.mxu0 0.0
  %1074 = vmatpush1.msra.mxu0 0.0
  %1075 = vmatprep.subr.mxu0 0.0
  %1076 = vmatpush1.msra.mxu0 0.0
  %1077 = vmatprep.subr.mxu0 0.0
  %1078 = vmatpush1.msra.mxu0 0.0
  %1079 = vmatprep.subr.mxu0 0.0
  %1080 = vmatpush1.msra.mxu0 0.0
  %1081 = vmatprep.subr.mxu0 0.0
  %1082 = vmatpush1.msra.mxu0 0.0
  %1083 = vmatprep.subr.mxu0 0.0
  %1084 = vmatpush1.msra.mxu0 0.0
  %1085 = vmatprep.subr.mxu0 0.0
  %1086 = vmatpush1.msra.mxu0 0.0
  %1087 = vmatprep.subr.mxu0 0.0
  %1088 = vmatpush1.msra.mxu0 0.0
  %1089 = vmatprep.subr.mxu0 0.0
  %1090 = vmatpush1.msra.mxu0 0.0
  %1091 = vmatprep.subr.mxu0 0.0
  %1092 = vmatpush1.msra.mxu0 0.0
  %1093 = vmatprep.subr.mxu0 0.0
  %1094 = vmatpush1.msra.mxu0 %v23
  %1095 = vmatprep.subr.mxu0 0.0
  %1096 = vmatpush1.msra.mxu0 %v22
  %1097 = vmatprep.subr.mxu0 0.0
  %1098 = vmatpush1.msra.mxu0 %v21
  %1099 = vmatprep.subr.mxu0 0.0
  %1100 = vmatpush1.msra.mxu0 %v20
  %1101 = vmatprep.subr.mxu0 0.0
  %1102 = vmatpush2.msra.mxu0 0.0
  %1103 = vmatprep.subr.mxu0 0.0
  %1104 = vmatpush2.msra.mxu0 0.0
  %1105 = vmatprep.subr.mxu0 0.0
  %1106 = vmatpush2.msra.mxu0 0.0
  %1107 = vmatprep.subr.mxu0 0.0
  %1108 = vmatpush2.msra.mxu0 0.0
  %1109 = vmatprep.subr.mxu0 0.0
  %1110 = vmatpush2.msra.mxu0 0.0
  %1111 = vmatprep.subr.mxu0 0.0
  %1112 = vmatpush2.msra.mxu0 0.0
  %1113 = vmatprep.subr.mxu0 0.0
  %1114 = vmatpush2.msra.mxu0 0.0
  %1115 = vmatprep.subr.mxu0 0.0
  %1116 = vmatpush2.msra.mxu0 0.0
  %1117 = vmatprep.subr.mxu0 0.0
  %1118 = vmatpush2.msra.mxu0 0.0
  %1119 = vmatprep.subr.mxu0 0.0
  %1120 = vmatpush2.msra.mxu0 0.0
  %1121 = vmatprep.subr.mxu0 0.0
  %1122 = vmatpush2.msra.mxu0 0.0
  %1123 = vmatprep.subr.mxu0 0.0
  %1124 = vmatpush2.msra.mxu0 0.0
  %1125 = vmatprep.subr.mxu0 0.0
  %1126 = vmatpush2.msra.mxu0 0.0
  %1127 = vmatprep.subr.mxu0 0.0
  %1128 = vmatpush2.msra.mxu0 0.0
  %1129 = vmatprep.subr.mxu0 0.0
  %1130 = vmatpush2.msra.mxu0 0.0
  %1131 = vmatprep.subr.mxu0 0.0
  %1132 = vmatpush2.msra.mxu0 0.0
  %1133 = vmatprep.mubr.f32.mxu0 0.0
  %1134 = vmatmul.mubr.f32.gmra.mxu0 %v1067
  %v1135 = vpop.f32.mrf.mxu0
  %v1136 = vadd.f32 0.0, %v1135
  %v1137 = vpop.f32.mrf.mxu0
  %1138 = vdwg.mxu0
  %1139 = vmatprep.subr.mxu0 0.0
  %1140 = vmatpush1.msra.mxu0 0.0
  %1141 = vmatprep.subr.mxu0 0.0
  %1142 = vmatpush1.msra.mxu0 0.0
  %1143 = vmatprep.subr.mxu0 0.0
  %1144 = vmatpush1.msra.mxu0 0.0
  %1145 = vmatprep.subr.mxu0 0.0
  %1146 = vmatpush1.msra.mxu0 0.0
  %1147 = vmatprep.subr.mxu0 0.0
  %1148 = vmatpush1.msra.mxu0 0.0
  %1149 = vmatprep.subr.mxu0 0.0
  %1150 = vmatpush1.msra.mxu0 0.0
  %1151 = vmatprep.subr.mxu0 0.0
  %1152 = vmatpush1.msra.mxu0 0.0
  %1153 = vmatprep.subr.mxu0 0.0
  %1154 = vmatpush1.msra.mxu0 0.0
  %1155 = vmatprep.subr.mxu0 0.0
  %1156 = vmatpush1.msra.mxu0 0.0
  %1157 = vmatprep.subr.mxu0 0.0
  %1158 = vmatpush1.msra.mxu0 0.0
  %1159 = vmatprep.subr.mxu0 0.0
  %1160 = vmatpush1.msra.mxu0 0.0
  %1161 = vmatprep.subr.mxu0 0.0
  %1162 = vmatpush1.msra.mxu0 0.0
  %1163 = vmatprep.subr.mxu0 0.0
  %1164 = vmatpush1.msra.mxu0 %v27
  %1165 = vmatprep.subr.mxu0 0.0
  %1166 = vmatpush1.msra.mxu0 %v26
  %1167 = vmatprep.subr.mxu0 0.0
  %1168 = vmatpush1.msra.mxu0 %v25
  %1169 = vmatprep.subr.mxu0 0.0
  %1170 = vmatpush1.msra.mxu0 %v24
  %1171 = vmatprep.subr.mxu0 0.0
  %1172 = vmatpush2.msra.mxu0 0.0
  %1173 = vmatprep.subr.mxu0 0.0
  %1174 = vmatpush2.msra.mxu0 0.0
  %1175 = vmatprep.subr.mxu0 0.0
  %1176 = vmatpush2.msra.mxu0 0.0
  %1177 = vmatprep.subr.mxu0 0.0
  %1178 = vmatpush2.msra.mxu0 0.0
  %1179 = vmatprep.subr.mxu0 0.0
  %1180 = vmatpush2.msra.mxu0 0.0
  %1181 = vmatprep.subr.mxu0 0.0
  %1182 = vmatpush2.msra.mxu0 0.0
  %1183 = vmatprep.subr.mxu0 0.0
  %1184 = vmatpush2.msra.mxu0 0.0
  %1185 = vmatprep.subr.mxu0 0.0
  %1186 = vmatpush2.msra.mxu0 0.0
  %1187 = vmatprep.subr.mxu0 0.0
  %1188 = vmatpush2.msra.mxu0 0.0
  %1189 = vmatprep.subr.mxu0 0.0
  %1190 = vmatpush2.msra.mxu0 0.0
  %1191 = vmatprep.subr.mxu0 0.0
  %1192 = vmatpush2.msra.mxu0 0.0
  %1193 = vmatprep.subr.mxu0 0.0
  %1194 = vmatpush2.msra.mxu0 0.0
  %1195 = vmatprep.subr.mxu0 0.0
  %1196 = vmatpush2.msra.mxu0 0.0
  %1197 = vmatprep.subr.mxu0 0.0
  %1198 = vmatpush2.msra.mxu0 0.0
  %1199 = vmatprep.subr.mxu0 0.0
  %1200 = vmatpush2.msra.mxu0 0.0
  %1201 = vmatprep.subr.mxu0 0.0
  %1202 = vmatpush2.msra.mxu0 0.0
  %1203 = vmatprep.mubr.f32.mxu0 0.0
  %1204 = vmatmul.mubr.f32.gmra.mxu0 %v1067
  %v1205 = vpop.f32.mrf.mxu0
  %v1206 = vadd.f32 0.0, %v1205
  %v1207 = vpop.f32.mrf.mxu0
  %1208 = vdwg.mxu0
  %s1209 = scalar_lea.vmem [#allocation2], 16
  %v1210 = vld [vmem:[%s1209] sm:$0xff]
  %v1211 = vadd.f32 %v1210, %v1136
  %v1212 = vxor.u32 %v1211, 2147483648
  %v1213 = vmul.f32 %v1212, 1.442695
  %v1214 = vpow.pop %v1213
  %v1215 = vadd.f32 %v1214, 1.0
  %v1216 = vrcp.pop %v1215
  %v1217 = vmul.f32 1.0, %v1216
  %s1218 = scalar_lea.vmem [#allocation3], 16
  %v1219 = vld [vmem:[%s1218] sm:$0xff]
  %v1220 = vadd.f32 %v1219, %v1206
  %v1221 = vxor.u32 %v1220, 2147483648
  %v1222 = vmul.f32 %v1221, 1.442695
  %v1223 = vpow.pop %v1222
  %v1224 = vadd.f32 %v1223, 1.0
  %v1225 = vrcp.pop %v1224
  %v1226 = vmul.f32 1.0, %v1225
  %s1227 = scalar_lea.vmem [#allocation4], 16
  %v1228 = vld [vmem:[%s1227] sm:$0xff]
  %1229 = vmatprep.subr.mxu0 0.0
  %1230 = vmatpush1.msra.mxu0 0.0
  %1231 = vmatprep.subr.mxu0 0.0
  %1232 = vmatpush1.msra.mxu0 0.0
  %1233 = vmatprep.subr.mxu0 0.0
  %1234 = vmatpush1.msra.mxu0 0.0
  %1235 = vmatprep.subr.mxu0 0.0
  %1236 = vmatpush1.msra.mxu0 0.0
  %1237 = vmatprep.subr.mxu0 0.0
  %1238 = vmatpush1.msra.mxu0 0.0
  %1239 = vmatprep.subr.mxu0 0.0
  %1240 = vmatpush1.msra.mxu0 0.0
  %1241 = vmatprep.subr.mxu0 0.0
  %1242 = vmatpush1.msra.mxu0 0.0
  %1243 = vmatprep.subr.mxu0 0.0
  %1244 = vmatpush1.msra.mxu0 0.0
  %1245 = vmatprep.subr.mxu0 0.0
  %1246 = vmatpush1.msra.mxu0 0.0
  %1247 = vmatprep.subr.mxu0 0.0
  %1248 = vmatpush1.msra.mxu0 0.0
  %1249 = vmatprep.subr.mxu0 0.0
  %1250 = vmatpush1.msra.mxu0 0.0
  %1251 = vmatprep.subr.mxu0 0.0
  %1252 = vmatpush1.msra.mxu0 0.0
  %1253 = vmatprep.subr.mxu0 0.0
  %1254 = vmatpush1.msra.mxu0 %v31
  %1255 = vmatprep.subr.mxu0 0.0
  %1256 = vmatpush1.msra.mxu0 %v30
  %1257 = vmatprep.subr.mxu0 0.0
  %1258 = vmatpush1.msra.mxu0 %v29
  %1259 = vmatprep.subr.mxu0 0.0
  %1260 = vmatpush1.msra.mxu0 %v28
  %1261 = vmatprep.subr.mxu0 0.0
  %1262 = vmatpush2.msra.mxu0 0.0
  %1263 = vmatprep.subr.mxu0 0.0
  %1264 = vmatpush2.msra.mxu0 0.0
  %1265 = vmatprep.subr.mxu0 0.0
  %1266 = vmatpush2.msra.mxu0 0.0
  %1267 = vmatprep.subr.mxu0 0.0
  %1268 = vmatpush2.msra.mxu0 0.0
  %1269 = vmatprep.subr.mxu0 0.0
  %1270 = vmatpush2.msra.mxu0 0.0
  %1271 = vmatprep.subr.mxu0 0.0
  %1272 = vmatpush2.msra.mxu0 0.0
  %1273 = vmatprep.subr.mxu0 0.0
  %1274 = vmatpush2.msra.mxu0 0.0
  %1275 = vmatprep.subr.mxu0 0.0
  %1276 = vmatpush2.msra.mxu0 0.0
  %1277 = vmatprep.subr.mxu0 0.0
  %1278 = vmatpush2.msra.mxu0 0.0
  %1279 = vmatprep.subr.mxu0 0.0
  %1280 = vmatpush2.msra.mxu0 0.0
  %1281 = vmatprep.subr.mxu0 0.0
  %1282 = vmatpush2.msra.mxu0 0.0
  %1283 = vmatprep.subr.mxu0 0.0
  %1284 = vmatpush2.msra.mxu0 0.0
  %1285 = vmatprep.subr.mxu0 0.0
  %1286 = vmatpush2.msra.mxu0 0.0
  %1287 = vmatprep.subr.mxu0 0.0
  %1288 = vmatpush2.msra.mxu0 0.0
  %1289 = vmatprep.subr.mxu0 0.0
  %1290 = vmatpush2.msra.mxu0 0.0
  %1291 = vmatprep.subr.mxu0 0.0
  %1292 = vmatpush2.msra.mxu0 0.0
  %1293 = vmatprep.mubr.f32.mxu0 0.0
  %1294 = vmatmul.mubr.f32.gmra.mxu0 %v1067
  %v1295 = vpop.f32.mrf.mxu0
  %v1296 = vadd.f32 %v745, %v1295
  %v1297 = vpop.f32.mrf.mxu0
  %1298 = vdwg.mxu0
  %v1299 = vmul.f32 %v1217, %v1296
  %v1300 = vadd.f32 %v1228, %v1299
  %v1301 = vtanh.pop %v1300
  %v1302 = vsub.f32 1.0, %v1226
  %v1303 = vmul.f32 %v1302, %v1301
  %v1304 = vmul.f32 %v1226, %v1063
  %v1305 = vadd.f32 %v1303, %v1304
  %s1306 = scalar_lea.vmem [#allocation5], 16
  %1307 = vst.msk [vmem:[%s1306] sm:$0xff] %vm227, %v1305
  %v1309 = vsel %vm227, %v1305, 0
  %1311 = vmatprep.subr.mxu0 0.0
  %1312 = vmatpush1.msra.mxu0 0.0
  %1313 = vmatprep.subr.mxu0 0.0
  %1314 = vmatpush1.msra.mxu0 0.0
  %1315 = vmatprep.subr.mxu0 0.0
  %1316 = vmatpush1.msra.mxu0 0.0
  %1317 = vmatprep.subr.mxu0 0.0
  %1318 = vmatpush1.msra.mxu0 0.0
  %1319 = vmatprep.subr.mxu0 0.0
  %1320 = vmatpush1.msra.mxu0 0.0
  %1321 = vmatprep.subr.mxu0 0.0
  %1322 = vmatpush1.msra.mxu0 0.0
  %1323 = vmatprep.subr.mxu0 0.0
  %1324 = vmatpush1.msra.mxu0 0.0
  %1325 = vmatprep.subr.mxu0 0.0
  %1326 = vmatpush1.msra.mxu0 0.0
  %1327 = vmatprep.subr.mxu0 0.0
  %1328 = vmatpush1.msra.mxu0 0.0
  %1329 = vmatprep.subr.mxu0 0.0
  %1330 = vmatpush1.msra.mxu0 0.0
  %1331 = vmatprep.subr.mxu0 0.0
  %1332 = vmatpush1.msra.mxu0 0.0
  %1333 = vmatprep.subr.mxu0 0.0
  %1334 = vmatpush1.msra.mxu0 0.0
  %1335 = vmatprep.subr.mxu0 0.0
  %1336 = vmatpush1.msra.mxu0 %v23
  %1337 = vmatprep.subr.mxu0 0.0
  %1338 = vmatpush1.msra.mxu0 %v22
  %1339 = vmatprep.subr.mxu0 0.0
  %1340 = vmatpush1.msra.mxu0 %v21
  %1341 = vmatprep.subr.mxu0 0.0
  %1342 = vmatpush1.msra.mxu0 %v20
  %1343 = vmatprep.subr.mxu0 0.0
  %1344 = vmatpush2.msra.mxu0 0.0
  %1345 = vmatprep.subr.mxu0 0.0
  %1346 = vmatpush2.msra.mxu0 0.0
  %1347 = vmatprep.subr.mxu0 0.0
  %1348 = vmatpush2.msra.mxu0 0.0
  %1349 = vmatprep.subr.mxu0 0.0
  %1350 = vmatpush2.msra.mxu0 0.0
  %1351 = vmatprep.subr.mxu0 0.0
  %1352 = vmatpush2.msra.mxu0 0.0
  %1353 = vmatprep.subr.mxu0 0.0
  %1354 = vmatpush2.msra.mxu0 0.0
  %1355 = vmatprep.subr.mxu0 0.0
  %1356 = vmatpush2.msra.mxu0 0.0
  %1357 = vmatprep.subr.mxu0 0.0
  %1358 = vmatpush2.msra.mxu0 0.0
  %1359 = vmatprep.subr.mxu0 0.0
  %1360 = vmatpush2.msra.mxu0 0.0
  %1361 = vmatprep.subr.mxu0 0.0
  %1362 = vmatpush2.msra.mxu0 0.0
  %1363 = vmatprep.subr.mxu0 0.0
  %1364 = vmatpush2.msra.mxu0 0.0
  %1365 = vmatprep.subr.mxu0 0.0
  %1366 = vmatpush2.msra.mxu0 0.0
  %1367 = vmatprep.subr.mxu0 0.0
  %1368 = vmatpush2.msra.mxu0 0.0
  %1369 = vmatprep.subr.mxu0 0.0
  %1370 = vmatpush2.msra.mxu0 0.0
  %1371 = vmatprep.subr.mxu0 0.0
  %1372 = vmatpush2.msra.mxu0 0.0
  %1373 = vmatprep.subr.mxu0 0.0
  %1374 = vmatpush2.msra.mxu0 0.0
  %1375 = vmatprep.mubr.f32.mxu0 0.0
  %1376 = vmatmul.mubr.f32.gmra.mxu0 %v1309
  %v1377 = vpop.f32.mrf.mxu0
  %v1378 = vadd.f32 0.0, %v1377
  %v1379 = vpop.f32.mrf.mxu0
  %1380 = vdwg.mxu0
  %1381 = vmatprep.subr.mxu0 0.0
  %1382 = vmatpush1.msra.mxu0 0.0
  %1383 = vmatprep.subr.mxu0 0.0
  %1384 = vmatpush1.msra.mxu0 0.0
  %1385 = vmatprep.subr.mxu0 0.0
  %1386 = vmatpush1.msra.mxu0 0.0
  %1387 = vmatprep.subr.mxu0 0.0
  %1388 = vmatpush1.msra.mxu0 0.0
  %1389 = vmatprep.subr.mxu0 0.0
  %1390 = vmatpush1.msra.mxu0 0.0
  %1391 = vmatprep.subr.mxu0 0.0
  %1392 = vmatpush1.msra.mxu0 0.0
  %1393 = vmatprep.subr.mxu0 0.0
  %1394 = vmatpush1.msra.mxu0 0.0
  %1395 = vmatprep.subr.mxu0 0.0
  %1396 = vmatpush1.msra.mxu0 0.0
  %1397 = vmatprep.subr.mxu0 0.0
  %1398 = vmatpush1.msra.mxu0 0.0
  %1399 = vmatprep.subr.mxu0 0.0
  %1400 = vmatpush1.msra.mxu0 0.0
  %1401 = vmatprep.subr.mxu0 0.0
  %1402 = vmatpush1.msra.mxu0 0.0
  %1403 = vmatprep.subr.mxu0 0.0
  %1404 = vmatpush1.msra.mxu0 0.0
  %1405 = vmatprep.subr.mxu0 0.0
  %1406 = vmatpush1.msra.mxu0 %v27
  %1407 = vmatprep.subr.mxu0 0.0
  %1408 = vmatpush1.msra.mxu0 %v26
  %1409 = vmatprep.subr.mxu0 0.0
  %1410 = vmatpush1.msra.mxu0 %v25
  %1411 = vmatprep.subr.mxu0 0.0
  %1412 = vmatpush1.msra.mxu0 %v24
  %1413 = vmatprep.subr.mxu0 0.0
  %1414 = vmatpush2.msra.mxu0 0.0
  %1415 = vmatprep.subr.mxu0 0.0
  %1416 = vmatpush2.msra.mxu0 0.0
  %1417 = vmatprep.subr.mxu0 0.0
  %1418 = vmatpush2.msra.mxu0 0.0
  %1419 = vmatprep.subr.mxu0 0.0
  %1420 = vmatpush2.msra.mxu0 0.0
  %1421 = vmatprep.subr.mxu0 0.0
  %1422 = vmatpush2.msra.mxu0 0.0
  %1423 = vmatprep.subr.mxu0 0.0
  %1424 = vmatpush2.msra.mxu0 0.0
  %1425 = vmatprep.subr.mxu0 0.0
  %1426 = vmatpush2.msra.mxu0 0.0
  %1427 = vmatprep.subr.mxu0 0.0
  %1428 = vmatpush2.msra.mxu0 0.0
  %1429 = vmatprep.subr.mxu0 0.0
  %1430 = vmatpush2.msra.mxu0 0.0
  %1431 = vmatprep.subr.mxu0 0.0
  %1432 = vmatpush2.msra.mxu0 0.0
  %1433 = vmatprep.subr.mxu0 0.0
  %1434 = vmatpush2.msra.mxu0 0.0
  %1435 = vmatprep.subr.mxu0 0.0
  %1436 = vmatpush2.msra.mxu0 0.0
  %1437 = vmatprep.subr.mxu0 0.0
  %1438 = vmatpush2.msra.mxu0 0.0
  %1439 = vmatprep.subr.mxu0 0.0
  %1440 = vmatpush2.msra.mxu0 0.0
  %1441 = vmatprep.subr.mxu0 0.0
  %1442 = vmatpush2.msra.mxu0 0.0
  %1443 = vmatprep.subr.mxu0 0.0
  %1444 = vmatpush2.msra.mxu0 0.0
  %1445 = vmatprep.mubr.f32.mxu0 0.0
  %1446 = vmatmul.mubr.f32.gmra.mxu0 %v1309
  %v1447 = vpop.f32.mrf.mxu0
  %v1448 = vadd.f32 0.0, %v1447
  %v1449 = vpop.f32.mrf.mxu0
  %1450 = vdwg.mxu0
  %s1451 = scalar_lea.vmem [#allocation2], 24
  %v1452 = vld [vmem:[%s1451] sm:$0xff]
  %v1453 = vadd.f32 %v1452, %v1378
  %v1454 = vxor.u32 %v1453, 2147483648
  %v1455 = vmul.f32 %v1454, 1.442695
  %v1456 = vpow.pop %v1455
  %v1457 = vadd.f32 %v1456, 1.0
  %v1458 = vrcp.pop %v1457
  %v1459 = vmul.f32 1.0, %v1458
  %s1460 = scalar_lea.vmem [#allocation3], 24
  %v1461 = vld [vmem:[%s1460] sm:$0xff]
  %v1462 = vadd.f32 %v1461, %v1448
  %v1463 = vxor.u32 %v1462, 2147483648
  %v1464 = vmul.f32 %v1463, 1.442695
  %v1465 = vpow.pop %v1464
  %v1466 = vadd.f32 %v1465, 1.0
  %v1467 = vrcp.pop %v1466
  %v1468 = vmul.f32 1.0, %v1467
  %s1469 = scalar_lea.vmem [#allocation4], 24
  %v1470 = vld [vmem:[%s1469] sm:$0xff]
  %1471 = vmatprep.subr.mxu0 0.0
  %1472 = vmatpush1.msra.mxu0 0.0
  %1473 = vmatprep.subr.mxu0 0.0
  %1474 = vmatpush1.msra.mxu0 0.0
  %1475 = vmatprep.subr.mxu0 0.0
  %1476 = vmatpush1.msra.mxu0 0.0
  %1477 = vmatprep.subr.mxu0 0.0
  %1478 = vmatpush1.msra.mxu0 0.0
  %1479 = vmatprep.subr.mxu0 0.0
  %1480 = vmatpush1.msra.mxu0 0.0
  %1481 = vmatprep.subr.mxu0 0.0
  %1482 = vmatpush1.msra.mxu0 0.0
  %1483 = vmatprep.subr.mxu0 0.0
  %1484 = vmatpush1.msra.mxu0 0.0
  %1485 = vmatprep.subr.mxu0 0.0
  %1486 = vmatpush1.msra.mxu0 0.0
  %1487 = vmatprep.subr.mxu0 0.0
  %1488 = vmatpush1.msra.mxu0 0.0
  %1489 = vmatprep.subr.mxu0 0.0
  %1490 = vmatpush1.msra.mxu0 0.0
  %1491 = vmatprep.subr.mxu0 0.0
  %1492 = vmatpush1.msra.mxu0 0.0
  %1493 = vmatprep.subr.mxu0 0.0
  %1494 = vmatpush1.msra.mxu0 0.0
  %1495 = vmatprep.subr.mxu0 0.0
  %1496 = vmatpush1.msra.mxu0 %v31
  %1497 = vmatprep.subr.mxu0 0.0
  %1498 = vmatpush1.msra.mxu0 %v30
  %1499 = vmatprep.subr.mxu0 0.0
  %1500 = vmatpush1.msra.mxu0 %v29
  %1501 = vmatprep.subr.mxu0 0.0
  %1502 = vmatpush1.msra.mxu0 %v28
  %1503 = vmatprep.subr.mxu0 0.0
  %1504 = vmatpush2.msra.mxu0 0.0
  %1505 = vmatprep.subr.mxu0 0.0
  %1506 = vmatpush2.msra.mxu0 0.0
  %1507 = vmatprep.subr.mxu0 0.0
  %1508 = vmatpush2.msra.mxu0 0.0
  %1509 = vmatprep.subr.mxu0 0.0
  %1510 = vmatpush2.msra.mxu0 0.0
  %1511 = vmatprep.subr.mxu0 0.0
  %1512 = vmatpush2.msra.mxu0 0.0
  %1513 = vmatprep.subr.mxu0 0.0
  %1514 = vmatpush2.msra.mxu0 0.0
  %1515 = vmatprep.subr.mxu0 0.0
  %1516 = vmatpush2.msra.mxu0 0.0
  %1517 = vmatprep.subr.mxu0 0.0
  %1518 = vmatpush2.msra.mxu0 0.0
  %1519 = vmatprep.subr.mxu0 0.0
  %1520 = vmatpush2.msra.mxu0 0.0
  %1521 = vmatprep.subr.mxu0 0.0
  %1522 = vmatpush2.msra.mxu0 0.0
  %1523 = vmatprep.subr.mxu0 0.0
  %1524 = vmatpush2.msra.mxu0 0.0
  %1525 = vmatprep.subr.mxu0 0.0
  %1526 = vmatpush2.msra.mxu0 0.0
  %1527 = vmatprep.subr.mxu0 0.0
  %1528 = vmatpush2.msra.mxu0 0.0
  %1529 = vmatprep.subr.mxu0 0.0
  %1530 = vmatpush2.msra.mxu0 0.0
  %1531 = vmatprep.subr.mxu0 0.0
  %1532 = vmatpush2.msra.mxu0 0.0
  %1533 = vmatprep.subr.mxu0 0.0
  %1534 = vmatpush2.msra.mxu0 0.0
  %1535 = vmatprep.mubr.f32.mxu0 0.0
  %1536 = vmatmul.mubr.f32.gmra.mxu0 %v1309
  %v1537 = vpop.f32.mrf.mxu0
  %v1538 = vadd.f32 %v745, %v1537
  %v1539 = vpop.f32.mrf.mxu0
  %1540 = vdwg.mxu0
  %v1541 = vmul.f32 %v1459, %v1538
  %v1542 = vadd.f32 %v1470, %v1541
  %v1543 = vtanh.pop %v1542
  %v1544 = vsub.f32 1.0, %v1468
  %v1545 = vmul.f32 %v1544, %v1543
  %v1546 = vmul.f32 %v1468, %v1305
  %v1547 = vadd.f32 %v1545, %v1546
  %s1548 = scalar_lea.vmem [#allocation5], 24
  %1549 = vst.msk [vmem:[%s1548] sm:$0xff] %vm227, %v1547
  %v1551 = vsel %vm227, %v1547, 0
  %1553 = vmatprep.subr.mxu0 0.0
  %1554 = vmatpush1.msra.mxu0 0.0
  %1555 = vmatprep.subr.mxu0 0.0
  %1556 = vmatpush1.msra.mxu0 0.0
  %1557 = vmatprep.subr.mxu0 0.0
  %1558 = vmatpush1.msra.mxu0 0.0
  %1559 = vmatprep.subr.mxu0 0.0
  %1560 = vmatpush1.msra.mxu0 0.0
  %1561 = vmatprep.subr.mxu0 0.0
  %1562 = vmatpush1.msra.mxu0 0.0
  %1563 = vmatprep.subr.mxu0 0.0
  %1564 = vmatpush1.msra.mxu0 0.0
  %1565 = vmatprep.subr.mxu0 0.0
  %1566 = vmatpush1.msra.mxu0 0.0
  %1567 = vmatprep.subr.mxu0 0.0
  %1568 = vmatpush1.msra.mxu0 0.0
  %1569 = vmatprep.subr.mxu0 0.0
  %1570 = vmatpush1.msra.mxu0 0.0
  %1571 = vmatprep.subr.mxu0 0.0
  %1572 = vmatpush1.msra.mxu0 0.0
  %1573 = vmatprep.subr.mxu0 0.0
  %1574 = vmatpush1.msra.mxu0 0.0
  %1575 = vmatprep.subr.mxu0 0.0
  %1576 = vmatpush1.msra.mxu0 0.0
  %1577 = vmatprep.subr.mxu0 0.0
  %1578 = vmatpush1.msra.mxu0 %v23
  %1579 = vmatprep.subr.mxu0 0.0
  %1580 = vmatpush1.msra.mxu0 %v22
  %1581 = vmatprep.subr.mxu0 0.0
  %1582 = vmatpush1.msra.mxu0 %v21
  %1583 = vmatprep.subr.mxu0 0.0
  %1584 = vmatpush1.msra.mxu0 %v20
  %1585 = vmatprep.subr.mxu0 0.0
  %1586 = vmatpush2.msra.mxu0 0.0
  %1587 = vmatprep.subr.mxu0 0.0
  %1588 = vmatpush2.msra.mxu0 0.0
  %1589 = vmatprep.subr.mxu0 0.0
  %1590 = vmatpush2.msra.mxu0 0.0
  %1591 = vmatprep.subr.mxu0 0.0
  %1592 = vmatpush2.msra.mxu0 0.0
  %1593 = vmatprep.subr.mxu0 0.0
  %1594 = vmatpush2.msra.mxu0 0.0
  %1595 = vmatprep.subr.mxu0 0.0
  %1596 = vmatpush2.msra.mxu0 0.0
  %1597 = vmatprep.subr.mxu0 0.0
  %1598 = vmatpush2.msra.mxu0 0.0
  %1599 = vmatprep.subr.mxu0 0.0
  %1600 = vmatpush2.msra.mxu0 0.0
  %1601 = vmatprep.subr.mxu0 0.0
  %1602 = vmatpush2.msra.mxu0 0.0
  %1603 = vmatprep.subr.mxu0 0.0
  %1604 = vmatpush2.msra.mxu0 0.0
  %1605 = vmatprep.subr.mxu0 0.0
  %1606 = vmatpush2.msra.mxu0 0.0
  %1607 = vmatprep.subr.mxu0 0.0
  %1608 = vmatpush2.msra.mxu0 0.0
  %1609 = vmatprep.subr.mxu0 0.0
  %1610 = vmatpush2.msra.mxu0 0.0
  %1611 = vmatprep.subr.mxu0 0.0
  %1612 = vmatpush2.msra.mxu0 0.0
  %1613 = vmatprep.subr.mxu0 0.0
  %1614 = vmatpush2.msra.mxu0 0.0
  %1615 = vmatprep.subr.mxu0 0.0
  %1616 = vmatpush2.msra.mxu0 0.0
  %1617 = vmatprep.mubr.f32.mxu0 0.0
  %1618 = vmatmul.mubr.f32.gmra.mxu0 %v1551
  %v1619 = vpop.f32.mrf.mxu0
  %v1620 = vadd.f32 0.0, %v1619
  %v1621 = vpop.f32.mrf.mxu0
  %1622 = vdwg.mxu0
  %1623 = vmatprep.subr.mxu0 0.0
  %1624 = vmatpush1.msra.mxu0 0.0
  %1625 = vmatprep.subr.mxu0 0.0
  %1626 = vmatpush1.msra.mxu0 0.0
  %1627 = vmatprep.subr.mxu0 0.0
  %1628 = vmatpush1.msra.mxu0 0.0
  %1629 = vmatprep.subr.mxu0 0.0
  %1630 = vmatpush1.msra.mxu0 0.0
  %1631 = vmatprep.subr.mxu0 0.0
  %1632 = vmatpush1.msra.mxu0 0.0
  %1633 = vmatprep.subr.mxu0 0.0
  %1634 = vmatpush1.msra.mxu0 0.0
  %1635 = vmatprep.subr.mxu0 0.0
  %1636 = vmatpush1.msra.mxu0 0.0
  %1637 = vmatprep.subr.mxu0 0.0
  %1638 = vmatpush1.msra.mxu0 0.0
  %1639 = vmatprep.subr.mxu0 0.0
  %1640 = vmatpush1.msra.mxu0 0.0
  %1641 = vmatprep.subr.mxu0 0.0
  %1642 = vmatpush1.msra.mxu0 0.0
  %1643 = vmatprep.subr.mxu0 0.0
  %1644 = vmatpush1.msra.mxu0 0.0
  %1645 = vmatprep.subr.mxu0 0.0
  %1646 = vmatpush1.msra.mxu0 0.0
  %1647 = vmatprep.subr.mxu0 0.0
  %1648 = vmatpush1.msra.mxu0 %v27
  %1649 = vmatprep.subr.mxu0 0.0
  %1650 = vmatpush1.msra.mxu0 %v26
  %1651 = vmatprep.subr.mxu0 0.0
  %1652 = vmatpush1.msra.mxu0 %v25
  %1653 = vmatprep.subr.mxu0 0.0
  %1654 = vmatpush1.msra.mxu0 %v24
  %1655 = vmatprep.subr.mxu0 0.0
  %1656 = vmatpush2.msra.mxu0 0.0
  %1657 = vmatprep.subr.mxu0 0.0
  %1658 = vmatpush2.msra.mxu0 0.0
  %1659 = vmatprep.subr.mxu0 0.0
  %1660 = vmatpush2.msra.mxu0 0.0
  %1661 = vmatprep.subr.mxu0 0.0
  %1662 = vmatpush2.msra.mxu0 0.0
  %1663 = vmatprep.subr.mxu0 0.0
  %1664 = vmatpush2.msra.mxu0 0.0
  %1665 = vmatprep.subr.mxu0 0.0
  %1666 = vmatpush2.msra.mxu0 0.0
  %1667 = vmatprep.subr.mxu0 0.0
  %1668 = vmatpush2.msra.mxu0 0.0
  %1669 = vmatprep.subr.mxu0 0.0
  %1670 = vmatpush2.msra.mxu0 0.0
  %1671 = vmatprep.subr.mxu0 0.0
  %1672 = vmatpush2.msra.mxu0 0.0
  %1673 = vmatprep.subr.mxu0 0.0
  %1674 = vmatpush2.msra.mxu0 0.0
  %1675 = vmatprep.subr.mxu0 0.0
  %1676 = vmatpush2.msra.mxu0 0.0
  %1677 = vmatprep.subr.mxu0 0.0
  %1678 = vmatpush2.msra.mxu0 0.0
  %1679 = vmatprep.subr.mxu0 0.0
  %1680 = vmatpush2.msra.mxu0 0.0
  %1681 = vmatprep.subr.mxu0 0.0
  %1682 = vmatpush2.msra.mxu0 0.0
  %1683 = vmatprep.subr.mxu0 0.0
  %1684 = vmatpush2.msra.mxu0 0.0
  %1685 = vmatprep.subr.mxu0 0.0
  %1686 = vmatpush2.msra.mxu0 0.0
  %1687 = vmatprep.mubr.f32.mxu0 0.0
  %1688 = vmatmul.mubr.f32.gmra.mxu0 %v1551
  %v1689 = vpop.f32.mrf.mxu0
  %v1690 = vadd.f32 0.0, %v1689
  %v1691 = vpop.f32.mrf.mxu0
  %1692 = vdwg.mxu0
  %s1693 = scalar_lea.vmem [#allocation2], 32
  %v1694 = vld [vmem:[%s1693] sm:$0xff]
  %v1695 = vadd.f32 %v1694, %v1620
  %v1696 = vxor.u32 %v1695, 2147483648
  %v1697 = vmul.f32 %v1696, 1.442695
  %v1698 = vpow.pop %v1697
  %v1699 = vadd.f32 %v1698, 1.0
  %v1700 = vrcp.pop %v1699
  %v1701 = vmul.f32 1.0, %v1700
  %s1702 = scalar_lea.vmem [#allocation3], 32
  %v1703 = vld [vmem:[%s1702] sm:$0xff]
  %v1704 = vadd.f32 %v1703, %v1690
  %v1705 = vxor.u32 %v1704, 2147483648
  %v1706 = vmul.f32 %v1705, 1.442695
  %v1707 = vpow.pop %v1706
  %v1708 = vadd.f32 %v1707, 1.0
  %v1709 = vrcp.pop %v1708
  %v1710 = vmul.f32 1.0, %v1709
  %s1711 = scalar_lea.vmem [#allocation4], 32
  %v1712 = vld [vmem:[%s1711] sm:$0xff]
  %1713 = vmatprep.subr.mxu0 0.0
  %1714 = vmatpush1.msra.mxu0 0.0
  %1715 = vmatprep.subr.mxu0 0.0
  %1716 = vmatpush1.msra.mxu0 0.0
  %1717 = vmatprep.subr.mxu0 0.0
  %1718 = vmatpush1.msra.mxu0 0.0
  %1719 = vmatprep.subr.mxu0 0.0
  %1720 = vmatpush1.msra.mxu0 0.0
  %1721 = vmatprep.subr.mxu0 0.0
  %1722 = vmatpush1.msra.mxu0 0.0
  %1723 = vmatprep.subr.mxu0 0.0
  %1724 = vmatpush1.msra.mxu0 0.0
  %1725 = vmatprep.subr.mxu0 0.0
  %1726 = vmatpush1.msra.mxu0 0.0
  %1727 = vmatprep.subr.mxu0 0.0
  %1728 = vmatpush1.msra.mxu0 0.0
  %1729 = vmatprep.subr.mxu0 0.0
  %1730 = vmatpush1.msra.mxu0 0.0
  %1731 = vmatprep.subr.mxu0 0.0
  %1732 = vmatpush1.msra.mxu0 0.0
  %1733 = vmatprep.subr.mxu0 0.0
  %1734 = vmatpush1.msra.mxu0 0.0
  %1735 = vmatprep.subr.mxu0 0.0
  %1736 = vmatpush1.msra.mxu0 0.0
  %1737 = vmatprep.subr.mxu0 0.0
  %1738 = vmatpush1.msra.mxu0 %v31
  %1739 = vmatprep.subr.mxu0 0.0
  %1740 = vmatpush1.msra.mxu0 %v30
  %1741 = vmatprep.subr.mxu0 0.0
  %1742 = vmatpush1.msra.mxu0 %v29
  %1743 = vmatprep.subr.mxu0 0.0
  %1744 = vmatpush1.msra.mxu0 %v28
  %1745 = vmatprep.subr.mxu0 0.0
  %1746 = vmatpush2.msra.mxu0 0.0
  %1747 = vmatprep.subr.mxu0 0.0
  %1748 = vmatpush2.msra.mxu0 0.0
  %1749 = vmatprep.subr.mxu0 0.0
  %1750 = vmatpush2.msra.mxu0 0.0
  %1751 = vmatprep.subr.mxu0 0.0
  %1752 = vmatpush2.msra.mxu0 0.0
  %1753 = vmatprep.subr.mxu0 0.0
  %1754 = vmatpush2.msra.mxu0 0.0
  %1755 = vmatprep.subr.mxu0 0.0
  %1756 = vmatpush2.msra.mxu0 0.0
  %1757 = vmatprep.subr.mxu0 0.0
  %1758 = vmatpush2.msra.mxu0 0.0
  %1759 = vmatprep.subr.mxu0 0.0
  %1760 = vmatpush2.msra.mxu0 0.0
  %1761 = vmatprep.subr.mxu0 0.0
  %1762 = vmatpush2.msra.mxu0 0.0
  %1763 = vmatprep.subr.mxu0 0.0
  %1764 = vmatpush2.msra.mxu0 0.0
  %1765 = vmatprep.subr.mxu0 0.0
  %1766 = vmatpush2.msra.mxu0 0.0
  %1767 = vmatprep.subr.mxu0 0.0
  %1768 = vmatpush2.msra.mxu0 0.0
  %1769 = vmatprep.subr.mxu0 0.0
  %1770 = vmatpush2.msra.mxu0 0.0
  %1771 = vmatprep.subr.mxu0 0.0
  %1772 = vmatpush2.msra.mxu0 0.0
  %1773 = vmatprep.subr.mxu0 0.0
  %1774 = vmatpush2.msra.mxu0 0.0
  %1775 = vmatprep.subr.mxu0 0.0
  %1776 = vmatpush2.msra.mxu0 0.0
  %1777 = vmatprep.mubr.f32.mxu0 0.0
  %1778 = vmatmul.mubr.f32.gmra.mxu0 %v1551
  %v1779 = vpop.f32.mrf.mxu0
  %v1780 = vadd.f32 %v745, %v1779
  %v1781 = vpop.f32.mrf.mxu0
  %1782 = vdwg.mxu0
  %v1783 = vmul.f32 %v1701, %v1780
  %v1784 = vadd.f32 %v1712, %v1783
  %v1785 = vtanh.pop %v1784
  %v1786 = vsub.f32 1.0, %v1710
  %v1787 = vmul.f32 %v1786, %v1785
  %v1788 = vmul.f32 %v1710, %v1547
  %v1789 = vadd.f32 %v1787, %v1788
  %s1790 = scalar_lea.vmem [#allocation5], 32
  %1791 = vst.msk [vmem:[%s1790] sm:$0xff] %vm227, %v1789
  %v1793 = vsel %vm227, %v1789, 0
  %1795 = vmatprep.subr.mxu0 0.0
  %1796 = vmatpush1.msra.mxu0 0.0
  %1797 = vmatprep.subr.mxu0 0.0
  %1798 = vmatpush1.msra.mxu0 0.0
  %1799 = vmatprep.subr.mxu0 0.0
  %1800 = vmatpush1.msra.mxu0 0.0
  %1801 = vmatprep.subr.mxu0 0.0
  %1802 = vmatpush1.msra.mxu0 0.0
  %1803 = vmatprep.subr.mxu0 0.0
  %1804 = vmatpush1.msra.mxu0 0.0
  %1805 = vmatprep.subr.mxu0 0.0
  %1806 = vmatpush1.msra.mxu0 0.0
  %1807 = vmatprep.subr.mxu0 0.0
  %1808 = vmatpush1.msra.mxu0 0.0
  %1809 = vmatprep.subr.mxu0 0.0
  %1810 = vmatpush1.msra.mxu0 0.0
  %1811 = vmatprep.subr.mxu0 0.0
  %1812 = vmatpush1.msra.mxu0 0.0
  %1813 = vmatprep.subr.mxu0 0.0
  %1814 = vmatpush1.msra.mxu0 0.0
  %1815 = vmatprep.subr.mxu0 0.0
  %1816 = vmatpush1.msra.mxu0 0.0
  %1817 = vmatprep.subr.mxu0 0.0
  %1818 = vmatpush1.msra.mxu0 0.0
  %1819 = vmatprep.subr.mxu0 0.0
  %1820 = vmatpush1.msra.mxu0 %v23
  %1821 = vmatprep.subr.mxu0 0.0
  %1822 = vmatpush1.msra.mxu0 %v22
  %1823 = vmatprep.subr.mxu0 0.0
  %1824 = vmatpush1.msra.mxu0 %v21
  %1825 = vmatprep.subr.mxu0 0.0
  %1826 = vmatpush1.msra.mxu0 %v20
  %1827 = vmatprep.subr.mxu0 0.0
  %1828 = vmatpush2.msra.mxu0 0.0
  %1829 = vmatprep.subr.mxu0 0.0
  %1830 = vmatpush2.msra.mxu0 0.0
  %1831 = vmatprep.subr.mxu0 0.0
  %1832 = vmatpush2.msra.mxu0 0.0
  %1833 = vmatprep.subr.mxu0 0.0
  %1834 = vmatpush2.msra.mxu0 0.0
  %1835 = vmatprep.subr.mxu0 0.0
  %1836 = vmatpush2.msra.mxu0 0.0
  %1837 = vmatprep.subr.mxu0 0.0
  %1838 = vmatpush2.msra.mxu0 0.0
  %1839 = vmatprep.subr.mxu0 0.0
  %1840 = vmatpush2.msra.mxu0 0.0
  %1841 = vmatprep.subr.mxu0 0.0
  %1842 = vmatpush2.msra.mxu0 0.0
  %1843 = vmatprep.subr.mxu0 0.0
  %1844 = vmatpush2.msra.mxu0 0.0
  %1845 = vmatprep.subr.mxu0 0.0
  %1846 = vmatpush2.msra.mxu0 0.0
  %1847 = vmatprep.subr.mxu0 0.0
  %1848 = vmatpush2.msra.mxu0 0.0
  %1849 = vmatprep.subr.mxu0 0.0
  %1850 = vmatpush2.msra.mxu0 0.0
  %1851 = vmatprep.subr.mxu0 0.0
  %1852 = vmatpush2.msra.mxu0 0.0
  %1853 = vmatprep.subr.mxu0 0.0
  %1854 = vmatpush2.msra.mxu0 0.0
  %1855 = vmatprep.subr.mxu0 0.0
  %1856 = vmatpush2.msra.mxu0 0.0
  %1857 = vmatprep.subr.mxu0 0.0
  %1858 = vmatpush2.msra.mxu0 0.0
  %1859 = vmatprep.mubr.f32.mxu0 0.0
  %1860 = vmatmul.mubr.f32.gmra.mxu0 %v1793
  %v1861 = vpop.f32.mrf.mxu0
  %v1862 = vadd.f32 0.0, %v1861
  %v1863 = vpop.f32.mrf.mxu0
  %1864 = vdwg.mxu0
  %1865 = vmatprep.subr.mxu0 0.0
  %1866 = vmatpush1.msra.mxu0 0.0
  %1867 = vmatprep.subr.mxu0 0.0
  %1868 = vmatpush1.msra.mxu0 0.0
  %1869 = vmatprep.subr.mxu0 0.0
  %1870 = vmatpush1.msra.mxu0 0.0
  %1871 = vmatprep.subr.mxu0 0.0
  %1872 = vmatpush1.msra.mxu0 0.0
  %1873 = vmatprep.subr.mxu0 0.0
  %1874 = vmatpush1.msra.mxu0 0.0
  %1875 = vmatprep.subr.mxu0 0.0
  %1876 = vmatpush1.msra.mxu0 0.0
  %1877 = vmatprep.subr.mxu0 0.0
  %1878 = vmatpush1.msra.mxu0 0.0
  %1879 = vmatprep.subr.mxu0 0.0
  %1880 = vmatpush1.msra.mxu0 0.0
  %1881 = vmatprep.subr.mxu0 0.0
  %1882 = vmatpush1.msra.mxu0 0.0
  %1883 = vmatprep.subr.mxu0 0.0
  %1884 = vmatpush1.msra.mxu0 0.0
  %1885 = vmatprep.subr.mxu0 0.0
  %1886 = vmatpush1.msra.mxu0 0.0
  %1887 = vmatprep.subr.mxu0 0.0
  %1888 = vmatpush1.msra.mxu0 0.0
  %1889 = vmatprep.subr.mxu0 0.0
  %1890 = vmatpush1.msra.mxu0 %v27
  %1891 = vmatprep.subr.mxu0 0.0
  %1892 = vmatpush1.msra.mxu0 %v26
  %1893 = vmatprep.subr.mxu0 0.0
  %1894 = vmatpush1.msra.mxu0 %v25
  %1895 = vmatprep.subr.mxu0 0.0
  %1896 = vmatpush1.msra.mxu0 %v24
  %1897 = vmatprep.subr.mxu0 0.0
  %1898 = vmatpush2.msra.mxu0 0.0
  %1899 = vmatprep.subr.mxu0 0.0
  %1900 = vmatpush2.msra.mxu0 0.0
  %1901 = vmatprep.subr.mxu0 0.0
  %1902 = vmatpush2.msra.mxu0 0.0
  %1903 = vmatprep.subr.mxu0 0.0
  %1904 = vmatpush2.msra.mxu0 0.0
  %1905 = vmatprep.subr.mxu0 0.0
  %1906 = vmatpush2.msra.mxu0 0.0
  %1907 = vmatprep.subr.mxu0 0.0
  %1908 = vmatpush2.msra.mxu0 0.0
  %1909 = vmatprep.subr.mxu0 0.0
  %1910 = vmatpush2.msra.mxu0 0.0
  %1911 = vmatprep.subr.mxu0 0.0
  %1912 = vmatpush2.msra.mxu0 0.0
  %1913 = vmatprep.subr.mxu0 0.0
  %1914 = vmatpush2.msra.mxu0 0.0
  %1915 = vmatprep.subr.mxu0 0.0
  %1916 = vmatpush2.msra.mxu0 0.0
  %1917 = vmatprep.subr.mxu0 0.0
  %1918 = vmatpush2.msra.mxu0 0.0
  %1919 = vmatprep.subr.mxu0 0.0
  %1920 = vmatpush2.msra.mxu0 0.0
  %1921 = vmatprep.subr.mxu0 0.0
  %1922 = vmatpush2.msra.mxu0 0.0
  %1923 = vmatprep.subr.mxu0 0.0
  %1924 = vmatpush2.msra.mxu0 0.0
  %1925 = vmatprep.subr.mxu0 0.0
  %1926 = vmatpush2.msra.mxu0 0.0
  %1927 = vmatprep.subr.mxu0 0.0
  %1928 = vmatpush2.msra.mxu0 0.0
  %1929 = vmatprep.mubr.f32.mxu0 0.0
  %1930 = vmatmul.mubr.f32.gmra.mxu0 %v1793
  %v1931 = vpop.f32.mrf.mxu0
  %v1932 = vadd.f32 0.0, %v1931
  %v1933 = vpop.f32.mrf.mxu0
  %1934 = vdwg.mxu0
  %s1935 = scalar_lea.vmem [#allocation2], 40
  %v1936 = vld [vmem:[%s1935] sm:$0xff]
  %v1937 = vadd.f32 %v1936, %v1862
  %v1938 = vxor.u32 %v1937, 2147483648
  %v1939 = vmul.f32 %v1938, 1.442695
  %v1940 = vpow.pop %v1939
  %v1941 = vadd.f32 %v1940, 1.0
  %v1942 = vrcp.pop %v1941
  %v1943 = vmul.f32 1.0, %v1942
  %s1944 = scalar_lea.vmem [#allocation3], 40
  %v1945 = vld [vmem:[%s1944] sm:$0xff]
  %v1946 = vadd.f32 %v1945, %v1932
  %v1947 = vxor.u32 %v1946, 2147483648
  %v1948 = vmul.f32 %v1947, 1.442695
  %v1949 = vpow.pop %v1948
  %v1950 = vadd.f32 %v1949, 1.0
  %v1951 = vrcp.pop %v1950
  %v1952 = vmul.f32 1.0, %v1951
  %s1953 = scalar_lea.vmem [#allocation4], 40
  %v1954 = vld [vmem:[%s1953] sm:$0xff]
  %1955 = vmatprep.subr.mxu0 0.0
  %1956 = vmatpush1.msra.mxu0 0.0
  %1957 = vmatprep.subr.mxu0 0.0
  %1958 = vmatpush1.msra.mxu0 0.0
  %1959 = vmatprep.subr.mxu0 0.0
  %1960 = vmatpush1.msra.mxu0 0.0
  %1961 = vmatprep.subr.mxu0 0.0
  %1962 = vmatpush1.msra.mxu0 0.0
  %1963 = vmatprep.subr.mxu0 0.0
  %1964 = vmatpush1.msra.mxu0 0.0
  %1965 = vmatprep.subr.mxu0 0.0
  %1966 = vmatpush1.msra.mxu0 0.0
  %1967 = vmatprep.subr.mxu0 0.0
  %1968 = vmatpush1.msra.mxu0 0.0
  %1969 = vmatprep.subr.mxu0 0.0
  %1970 = vmatpush1.msra.mxu0 0.0
  %1971 = vmatprep.subr.mxu0 0.0
  %1972 = vmatpush1.msra.mxu0 0.0
  %1973 = vmatprep.subr.mxu0 0.0
  %1974 = vmatpush1.msra.mxu0 0.0
  %1975 = vmatprep.subr.mxu0 0.0
  %1976 = vmatpush1.msra.mxu0 0.0
  %1977 = vmatprep.subr.mxu0 0.0
  %1978 = vmatpush1.msra.mxu0 0.0
  %1979 = vmatprep.subr.mxu0 0.0
  %1980 = vmatpush1.msra.mxu0 %v31
  %1981 = vmatprep.subr.mxu0 0.0
  %1982 = vmatpush1.msra.mxu0 %v30
  %1983 = vmatprep.subr.mxu0 0.0
  %1984 = vmatpush1.msra.mxu0 %v29
  %1985 = vmatprep.subr.mxu0 0.0
  %1986 = vmatpush1.msra.mxu0 %v28
  %1987 = vmatprep.subr.mxu0 0.0
  %1988 = vmatpush2.msra.mxu0 0.0
  %1989 = vmatprep.subr.mxu0 0.0
  %1990 = vmatpush2.msra.mxu0 0.0
  %1991 = vmatprep.subr.mxu0 0.0
  %1992 = vmatpush2.msra.mxu0 0.0
  %1993 = vmatprep.subr.mxu0 0.0
  %1994 = vmatpush2.msra.mxu0 0.0
  %1995 = vmatprep.subr.mxu0 0.0
  %1996 = vmatpush2.msra.mxu0 0.0
  %1997 = vmatprep.subr.mxu0 0.0
  %1998 = vmatpush2.msra.mxu0 0.0
  %1999 = vmatprep.subr.mxu0 0.0
  %2000 = vmatpush2.msra.mxu0 0.0
  %2001 = vmatprep.subr.mxu0 0.0
  %2002 = vmatpush2.msra.mxu0 0.0
  %2003 = vmatprep.subr.mxu0 0.0
  %2004 = vmatpush2.msra.mxu0 0.0
  %2005 = vmatprep.subr.mxu0 0.0
  %2006 = vmatpush2.msra.mxu0 0.0
  %2007 = vmatprep.subr.mxu0 0.0
  %2008 = vmatpush2.msra.mxu0 0.0
  %2009 = vmatprep.subr.mxu0 0.0
  %2010 = vmatpush2.msra.mxu0 0.0
  %2011 = vmatprep.subr.mxu0 0.0
  %2012 = vmatpush2.msra.mxu0 0.0
  %2013 = vmatprep.subr.mxu0 0.0
  %2014 = vmatpush2.msra.mxu0 0.0
  %2015 = vmatprep.subr.mxu0 0.0
  %2016 = vmatpush2.msra.mxu0 0.0
  %2017 = vmatprep.subr.mxu0 0.0
  %2018 = vmatpush2.msra.mxu0 0.0
  %2019 = vmatprep.mubr.f32.mxu0 0.0
  %2020 = vmatmul.mubr.f32.gmra.mxu0 %v1793
  %v2021 = vpop.f32.mrf.mxu0
  %v2022 = vadd.f32 %v745, %v2021
  %v2023 = vpop.f32.mrf.mxu0
  %2024 = vdwg.mxu0
  %v2025 = vmul.f32 %v1943, %v2022
  %v2026 = vadd.f32 %v1954, %v2025
  %v2027 = vtanh.pop %v2026
  %v2028 = vsub.f32 1.0, %v1952
  %v2029 = vmul.f32 %v2028, %v2027
  %v2030 = vmul.f32 %v1952, %v1789
  %v2031 = vadd.f32 %v2029, %v2030
  %s2032 = scalar_lea.vmem [#allocation5], 40
  %2033 = vst.msk [vmem:[%s2032] sm:$0xff] %vm227, %v2031
  %v2035 = vsel %vm227, %v2031, 0
  %2037 = vmatprep.subr.mxu0 0.0
  %2038 = vmatpush1.msra.mxu0 0.0
  %2039 = vmatprep.subr.mxu0 0.0
  %2040 = vmatpush1.msra.mxu0 0.0
  %2041 = vmatprep.subr.mxu0 0.0
  %2042 = vmatpush1.msra.mxu0 0.0
  %2043 = vmatprep.subr.mxu0 0.0
  %2044 = vmatpush1.msra.mxu0 0.0
  %2045 = vmatprep.subr.mxu0 0.0
  %2046 = vmatpush1.msra.mxu0 0.0
  %2047 = vmatprep.subr.mxu0 0.0
  %2048 = vmatpush1.msra.mxu0 0.0
  %2049 = vmatprep.subr.mxu0 0.0
  %2050 = vmatpush1.msra.mxu0 0.0
  %2051 = vmatprep.subr.mxu0 0.0
  %2052 = vmatpush1.msra.mxu0 0.0
  %2053 = vmatprep.subr.mxu0 0.0
  %2054 = vmatpush1.msra.mxu0 0.0
  %2055 = vmatprep.subr.mxu0 0.0
  %2056 = vmatpush1.msra.mxu0 0.0
  %2057 = vmatprep.subr.mxu0 0.0
  %2058 = vmatpush1.msra.mxu0 0.0
  %2059 = vmatprep.subr.mxu0 0.0
  %2060 = vmatpush1.msra.mxu0 0.0
  %2061 = vmatprep.subr.mxu0 0.0
  %2062 = vmatpush1.msra.mxu0 %v23
  %2063 = vmatprep.subr.mxu0 0.0
  %2064 = vmatpush1.msra.mxu0 %v22
  %2065 = vmatprep.subr.mxu0 0.0
  %2066 = vmatpush1.msra.mxu0 %v21
  %2067 = vmatprep.subr.mxu0 0.0
  %2068 = vmatpush1.msra.mxu0 %v20
  %2069 = vmatprep.subr.mxu0 0.0
  %2070 = vmatpush2.msra.mxu0 0.0
  %2071 = vmatprep.subr.mxu0 0.0
  %2072 = vmatpush2.msra.mxu0 0.0
  %2073 = vmatprep.subr.mxu0 0.0
  %2074 = vmatpush2.msra.mxu0 0.0
  %2075 = vmatprep.subr.mxu0 0.0
  %2076 = vmatpush2.msra.mxu0 0.0
  %2077 = vmatprep.subr.mxu0 0.0
  %2078 = vmatpush2.msra.mxu0 0.0
  %2079 = vmatprep.subr.mxu0 0.0
  %2080 = vmatpush2.msra.mxu0 0.0
  %2081 = vmatprep.subr.mxu0 0.0
  %2082 = vmatpush2.msra.mxu0 0.0
  %2083 = vmatprep.subr.mxu0 0.0
  %2084 = vmatpush2.msra.mxu0 0.0
  %2085 = vmatprep.subr.mxu0 0.0
  %2086 = vmatpush2.msra.mxu0 0.0
  %2087 = vmatprep.subr.mxu0 0.0
  %2088 = vmatpush2.msra.mxu0 0.0
  %2089 = vmatprep.subr.mxu0 0.0
  %2090 = vmatpush2.msra.mxu0 0.0
  %2091 = vmatprep.subr.mxu0 0.0
  %2092 = vmatpush2.msra.mxu0 0.0
  %2093 = vmatprep.subr.mxu0 0.0
  %2094 = vmatpush2.msra.mxu0 0.0
  %2095 = vmatprep.subr.mxu0 0.0
  %2096 = vmatpush2.msra.mxu0 0.0
  %2097 = vmatprep.subr.mxu0 0.0
  %2098 = vmatpush2.msra.mxu0 0.0
  %2099 = vmatprep.subr.mxu0 0.0
  %2100 = vmatpush2.msra.mxu0 0.0
  %2101 = vmatprep.mubr.f32.mxu0 0.0
  %2102 = vmatmul.mubr.f32.gmra.mxu0 %v2035
  %v2103 = vpop.f32.mrf.mxu0
  %v2104 = vadd.f32 0.0, %v2103
  %v2105 = vpop.f32.mrf.mxu0
  %2106 = vdwg.mxu0
  %2107 = vmatprep.subr.mxu0 0.0
  %2108 = vmatpush1.msra.mxu0 0.0
  %2109 = vmatprep.subr.mxu0 0.0
  %2110 = vmatpush1.msra.mxu0 0.0
  %2111 = vmatprep.subr.mxu0 0.0
  %2112 = vmatpush1.msra.mxu0 0.0
  %2113 = vmatprep.subr.mxu0 0.0
  %2114 = vmatpush1.msra.mxu0 0.0
  %2115 = vmatprep.subr.mxu0 0.0
  %2116 = vmatpush1.msra.mxu0 0.0
  %2117 = vmatprep.subr.mxu0 0.0
  %2118 = vmatpush1.msra.mxu0 0.0
  %2119 = vmatprep.subr.mxu0 0.0
  %2120 = vmatpush1.msra.mxu0 0.0
  %2121 = vmatprep.subr.mxu0 0.0
  %2122 = vmatpush1.msra.mxu0 0.0
  %2123 = vmatprep.subr.mxu0 0.0
  %2124 = vmatpush1.msra.mxu0 0.0
  %2125 = vmatprep.subr.mxu0 0.0
  %2126 = vmatpush1.msra.mxu0 0.0
  %2127 = vmatprep.subr.mxu0 0.0
  %2128 = vmatpush1.msra.mxu0 0.0
  %2129 = vmatprep.subr.mxu0 0.0
  %2130 = vmatpush1.msra.mxu0 0.0
  %2131 = vmatprep.subr.mxu0 0.0
  %2132 = vmatpush1.msra.mxu0 %v27
  %2133 = vmatprep.subr.mxu0 0.0
  %2134 = vmatpush1.msra.mxu0 %v26
  %2135 = vmatprep.subr.mxu0 0.0
  %2136 = vmatpush1.msra.mxu0 %v25
  %2137 = vmatprep.subr.mxu0 0.0
  %2138 = vmatpush1.msra.mxu0 %v24
  %2139 = vmatprep.subr.mxu0 0.0
  %2140 = vmatpush2.msra.mxu0 0.0
  %2141 = vmatprep.subr.mxu0 0.0
  %2142 = vmatpush2.msra.mxu0 0.0
  %2143 = vmatprep.subr.mxu0 0.0
  %2144 = vmatpush2.msra.mxu0 0.0
  %2145 = vmatprep.subr.mxu0 0.0
  %2146 = vmatpush2.msra.mxu0 0.0
  %2147 = vmatprep.subr.mxu0 0.0
  %2148 = vmatpush2.msra.mxu0 0.0
  %2149 = vmatprep.subr.mxu0 0.0
  %2150 = vmatpush2.msra.mxu0 0.0
  %2151 = vmatprep.subr.mxu0 0.0
  %2152 = vmatpush2.msra.mxu0 0.0
  %2153 = vmatprep.subr.mxu0 0.0
  %2154 = vmatpush2.msra.mxu0 0.0
  %2155 = vmatprep.subr.mxu0 0.0
  %2156 = vmatpush2.msra.mxu0 0.0
  %2157 = vmatprep.subr.mxu0 0.0
  %2158 = vmatpush2.msra.mxu0 0.0
  %2159 = vmatprep.subr.mxu0 0.0
  %2160 = vmatpush2.msra.mxu0 0.0
  %2161 = vmatprep.subr.mxu0 0.0
  %2162 = vmatpush2.msra.mxu0 0.0
  %2163 = vmatprep.subr.mxu0 0.0
  %2164 = vmatpush2.msra.mxu0 0.0
  %2165 = vmatprep.subr.mxu0 0.0
  %2166 = vmatpush2.msra.mxu0 0.0
  %2167 = vmatprep.subr.mxu0 0.0
  %2168 = vmatpush2.msra.mxu0 0.0
  %2169 = vmatprep.subr.mxu0 0.0
  %2170 = vmatpush2.msra.mxu0 0.0
  %2171 = vmatprep.mubr.f32.mxu0 0.0
  %2172 = vmatmul.mubr.f32.gmra.mxu0 %v2035
  %v2173 = vpop.f32.mrf.mxu0
  %v2174 = vadd.f32 0.0, %v2173
  %v2175 = vpop.f32.mrf.mxu0
  %2176 = vdwg.mxu0
  %s2177 = scalar_lea.vmem [#allocation2], 48
  %v2178 = vld [vmem:[%s2177] sm:$0xff]
  %v2179 = vadd.f32 %v2178, %v2104
  %v2180 = vxor.u32 %v2179, 2147483648
  %v2181 = vmul.f32 %v2180, 1.442695
  %v2182 = vpow.pop %v2181
  %v2183 = vadd.f32 %v2182, 1.0
  %v2184 = vrcp.pop %v2183
  %v2185 = vmul.f32 1.0, %v2184
  %s2186 = scalar_lea.vmem [#allocation3], 48
  %v2187 = vld [vmem:[%s2186] sm:$0xff]
  %v2188 = vadd.f32 %v2187, %v2174
  %v2189 = vxor.u32 %v2188, 2147483648
  %v2190 = vmul.f32 %v2189, 1.442695
  %v2191 = vpow.pop %v2190
  %v2192 = vadd.f32 %v2191, 1.0
  %v2193 = vrcp.pop %v2192
  %v2194 = vmul.f32 1.0, %v2193
  %s2195 = scalar_lea.vmem [#allocation4], 48
  %v2196 = vld [vmem:[%s2195] sm:$0xff]
  %2197 = vmatprep.subr.mxu0 0.0
  %2198 = vmatpush1.msra.mxu0 0.0
  %2199 = vmatprep.subr.mxu0 0.0
  %2200 = vmatpush1.msra.mxu0 0.0
  %2201 = vmatprep.subr.mxu0 0.0
  %2202 = vmatpush1.msra.mxu0 0.0
  %2203 = vmatprep.subr.mxu0 0.0
  %2204 = vmatpush1.msra.mxu0 0.0
  %2205 = vmatprep.subr.mxu0 0.0
  %2206 = vmatpush1.msra.mxu0 0.0
  %2207 = vmatprep.subr.mxu0 0.0
  %2208 = vmatpush1.msra.mxu0 0.0
  %2209 = vmatprep.subr.mxu0 0.0
  %2210 = vmatpush1.msra.mxu0 0.0
  %2211 = vmatprep.subr.mxu0 0.0
  %2212 = vmatpush1.msra.mxu0 0.0
  %2213 = vmatprep.subr.mxu0 0.0
  %2214 = vmatpush1.msra.mxu0 0.0
  %2215 = vmatprep.subr.mxu0 0.0
  %2216 = vmatpush1.msra.mxu0 0.0
  %2217 = vmatprep.subr.mxu0 0.0
  %2218 = vmatpush1.msra.mxu0 0.0
  %2219 = vmatprep.subr.mxu0 0.0
  %2220 = vmatpush1.msra.mxu0 0.0
  %2221 = vmatprep.subr.mxu0 0.0
  %2222 = vmatpush1.msra.mxu0 %v31
  %2223 = vmatprep.subr.mxu0 0.0
  %2224 = vmatpush1.msra.mxu0 %v30
  %2225 = vmatprep.subr.mxu0 0.0
  %2226 = vmatpush1.msra.mxu0 %v29
  %2227 = vmatprep.subr.mxu0 0.0
  %2228 = vmatpush1.msra.mxu0 %v28
  %2229 = vmatprep.subr.mxu0 0.0
  %2230 = vmatpush2.msra.mxu0 0.0
  %2231 = vmatprep.subr.mxu0 0.0
  %2232 = vmatpush2.msra.mxu0 0.0
  %2233 = vmatprep.subr.mxu0 0.0
  %2234 = vmatpush2.msra.mxu0 0.0
  %2235 = vmatprep.subr.mxu0 0.0
  %2236 = vmatpush2.msra.mxu0 0.0
  %2237 = vmatprep.subr.mxu0 0.0
  %2238 = vmatpush2.msra.mxu0 0.0
  %2239 = vmatprep.subr.mxu0 0.0
  %2240 = vmatpush2.msra.mxu0 0.0
  %2241 = vmatprep.subr.mxu0 0.0
  %2242 = vmatpush2.msra.mxu0 0.0
  %2243 = vmatprep.subr.mxu0 0.0
  %2244 = vmatpush2.msra.mxu0 0.0
  %2245 = vmatprep.subr.mxu0 0.0
  %2246 = vmatpush2.msra.mxu0 0.0
  %2247 = vmatprep.subr.mxu0 0.0
  %2248 = vmatpush2.msra.mxu0 0.0
  %2249 = vmatprep.subr.mxu0 0.0
  %2250 = vmatpush2.msra.mxu0 0.0
  %2251 = vmatprep.subr.mxu0 0.0
  %2252 = vmatpush2.msra.mxu0 0.0
  %2253 = vmatprep.subr.mxu0 0.0
  %2254 = vmatpush2.msra.mxu0 0.0
  %2255 = vmatprep.subr.mxu0 0.0
  %2256 = vmatpush2.msra.mxu0 0.0
  %2257 = vmatprep.subr.mxu0 0.0
  %2258 = vmatpush2.msra.mxu0 0.0
  %2259 = vmatprep.subr.mxu0 0.0
  %2260 = vmatpush2.msra.mxu0 0.0
  %2261 = vmatprep.mubr.f32.mxu0 0.0
  %2262 = vmatmul.mubr.f32.gmra.mxu0 %v2035
  %v2263 = vpop.f32.mrf.mxu0
  %v2264 = vadd.f32 %v745, %v2263
  %v2265 = vpop.f32.mrf.mxu0
  %2266 = vdwg.mxu0
  %v2267 = vmul.f32 %v2185, %v2264
  %v2268 = vadd.f32 %v2196, %v2267
  %v2269 = vtanh.pop %v2268
  %v2270 = vsub.f32 1.0, %v2194
  %v2271 = vmul.f32 %v2270, %v2269
  %v2272 = vmul.f32 %v2194, %v2031
  %v2273 = vadd.f32 %v2271, %v2272
  %s2274 = scalar_lea.vmem [#allocation5], 48
  %2275 = vst.msk [vmem:[%s2274] sm:$0xff] %vm227, %v2273
  %v2277 = vsel %vm227, %v2273, 0
  %2279 = vmatprep.subr.mxu0 0.0
  %2280 = vmatpush1.msra.mxu0 0.0
  %2281 = vmatprep.subr.mxu0 0.0
  %2282 = vmatpush1.msra.mxu0 0.0
  %2283 = vmatprep.subr.mxu0 0.0
  %2284 = vmatpush1.msra.mxu0 0.0
  %2285 = vmatprep.subr.mxu0 0.0
  %2286 = vmatpush1.msra.mxu0 0.0
  %2287 = vmatprep.subr.mxu0 0.0
  %2288 = vmatpush1.msra.mxu0 0.0
  %2289 = vmatprep.subr.mxu0 0.0
  %2290 = vmatpush1.msra.mxu0 0.0
  %2291 = vmatprep.subr.mxu0 0.0
  %2292 = vmatpush1.msra.mxu0 0.0
  %2293 = vmatprep.subr.mxu0 0.0
  %2294 = vmatpush1.msra.mxu0 0.0
  %2295 = vmatprep.subr.mxu0 0.0
  %2296 = vmatpush1.msra.mxu0 0.0
  %2297 = vmatprep.subr.mxu0 0.0
  %2298 = vmatpush1.msra.mxu0 0.0
  %2299 = vmatprep.subr.mxu0 0.0
  %2300 = vmatpush1.msra.mxu0 0.0
  %2301 = vmatprep.subr.mxu0 0.0
  %2302 = vmatpush1.msra.mxu0 0.0
  %2303 = vmatprep.subr.mxu0 0.0
  %2304 = vmatpush1.msra.mxu0 %v23
  %2305 = vmatprep.subr.mxu0 0.0
  %2306 = vmatpush1.msra.mxu0 %v22
  %2307 = vmatprep.subr.mxu0 0.0
  %2308 = vmatpush1.msra.mxu0 %v21
  %2309 = vmatprep.subr.mxu0 0.0
  %2310 = vmatpush1.msra.mxu0 %v20
  %2311 = vmatprep.subr.mxu0 0.0
  %2312 = vmatpush2.msra.mxu0 0.0
  %2313 = vmatprep.subr.mxu0 0.0
  %2314 = vmatpush2.msra.mxu0 0.0
  %2315 = vmatprep.subr.mxu0 0.0
  %2316 = vmatpush2.msra.mxu0 0.0
  %2317 = vmatprep.subr.mxu0 0.0
  %2318 = vmatpush2.msra.mxu0 0.0
  %2319 = vmatprep.subr.mxu0 0.0
  %2320 = vmatpush2.msra.mxu0 0.0
  %2321 = vmatprep.subr.mxu0 0.0
  %2322 = vmatpush2.msra.mxu0 0.0
  %2323 = vmatprep.subr.mxu0 0.0
  %2324 = vmatpush2.msra.mxu0 0.0
  %2325 = vmatprep.subr.mxu0 0.0
  %2326 = vmatpush2.msra.mxu0 0.0
  %2327 = vmatprep.subr.mxu0 0.0
  %2328 = vmatpush2.msra.mxu0 0.0
  %2329 = vmatprep.subr.mxu0 0.0
  %2330 = vmatpush2.msra.mxu0 0.0
  %2331 = vmatprep.subr.mxu0 0.0
  %2332 = vmatpush2.msra.mxu0 0.0
  %2333 = vmatprep.subr.mxu0 0.0
  %2334 = vmatpush2.msra.mxu0 0.0
  %2335 = vmatprep.subr.mxu0 0.0
  %2336 = vmatpush2.msra.mxu0 0.0
  %2337 = vmatprep.subr.mxu0 0.0
  %2338 = vmatpush2.msra.mxu0 0.0
  %2339 = vmatprep.subr.mxu0 0.0
  %2340 = vmatpush2.msra.mxu0 0.0
  %2341 = vmatprep.subr.mxu0 0.0
  %2342 = vmatpush2.msra.mxu0 0.0
  %2343 = vmatprep.mubr.f32.mxu0 0.0
  %2344 = vmatmul.mubr.f32.gmra.mxu0 %v2277
  %v2345 = vpop.f32.mrf.mxu0
  %v2346 = vadd.f32 0.0, %v2345
  %v2347 = vpop.f32.mrf.mxu0
  %2348 = vdwg.mxu0
  %2349 = vmatprep.subr.mxu0 0.0
  %2350 = vmatpush1.msra.mxu0 0.0
  %2351 = vmatprep.subr.mxu0 0.0
  %2352 = vmatpush1.msra.mxu0 0.0
  %2353 = vmatprep.subr.mxu0 0.0
  %2354 = vmatpush1.msra.mxu0 0.0
  %2355 = vmatprep.subr.mxu0 0.0
  %2356 = vmatpush1.msra.mxu0 0.0
  %2357 = vmatprep.subr.mxu0 0.0
  %2358 = vmatpush1.msra.mxu0 0.0
  %2359 = vmatprep.subr.mxu0 0.0
  %2360 = vmatpush1.msra.mxu0 0.0
  %2361 = vmatprep.subr.mxu0 0.0
  %2362 = vmatpush1.msra.mxu0 0.0
  %2363 = vmatprep.subr.mxu0 0.0
  %2364 = vmatpush1.msra.mxu0 0.0
  %2365 = vmatprep.subr.mxu0 0.0
  %2366 = vmatpush1.msra.mxu0 0.0
  %2367 = vmatprep.subr.mxu0 0.0
  %2368 = vmatpush1.msra.mxu0 0.0
  %2369 = vmatprep.subr.mxu0 0.0
  %2370 = vmatpush1.msra.mxu0 0.0
  %2371 = vmatprep.subr.mxu0 0.0
  %2372 = vmatpush1.msra.mxu0 0.0
  %2373 = vmatprep.subr.mxu0 0.0
  %2374 = vmatpush1.msra.mxu0 %v27
  %2375 = vmatprep.subr.mxu0 0.0
  %2376 = vmatpush1.msra.mxu0 %v26
  %2377 = vmatprep.subr.mxu0 0.0
  %2378 = vmatpush1.msra.mxu0 %v25
  %2379 = vmatprep.subr.mxu0 0.0
  %2380 = vmatpush1.msra.mxu0 %v24
  %2381 = vmatprep.subr.mxu0 0.0
  %2382 = vmatpush2.msra.mxu0 0.0
  %2383 = vmatprep.subr.mxu0 0.0
  %2384 = vmatpush2.msra.mxu0 0.0
  %2385 = vmatprep.subr.mxu0 0.0
  %2386 = vmatpush2.msra.mxu0 0.0
  %2387 = vmatprep.subr.mxu0 0.0
  %2388 = vmatpush2.msra.mxu0 0.0
  %2389 = vmatprep.subr.mxu0 0.0
  %2390 = vmatpush2.msra.mxu0 0.0
  %2391 = vmatprep.subr.mxu0 0.0
  %2392 = vmatpush2.msra.mxu0 0.0
  %2393 = vmatprep.subr.mxu0 0.0
  %2394 = vmatpush2.msra.mxu0 0.0
  %2395 = vmatprep.subr.mxu0 0.0
  %2396 = vmatpush2.msra.mxu0 0.0
  %2397 = vmatprep.subr.mxu0 0.0
  %2398 = vmatpush2.msra.mxu0 0.0
  %2399 = vmatprep.subr.mxu0 0.0
  %2400 = vmatpush2.msra.mxu0 0.0
  %2401 = vmatprep.subr.mxu0 0.0
  %2402 = vmatpush2.msra.mxu0 0.0
  %2403 = vmatprep.subr.mxu0 0.0
  %2404 = vmatpush2.msra.mxu0 0.0
  %2405 = vmatprep.subr.mxu0 0.0
  %2406 = vmatpush2.msra.mxu0 0.0
  %2407 = vmatprep.subr.mxu0 0.0
  %2408 = vmatpush2.msra.mxu0 0.0
  %2409 = vmatprep.subr.mxu0 0.0
  %2410 = vmatpush2.msra.mxu0 0.0
  %2411 = vmatprep.subr.mxu0 0.0
  %2412 = vmatpush2.msra.mxu0 0.0
  %2413 = vmatprep.mubr.f32.mxu0 0.0
  %2414 = vmatmul.mubr.f32.gmra.mxu0 %v2277
  %v2415 = vpop.f32.mrf.mxu0
  %v2416 = vadd.f32 0.0, %v2415
  %v2417 = vpop.f32.mrf.mxu0
  %2418 = vdwg.mxu0
  %s2419 = scalar_lea.vmem [#allocation2], 56
  %v2420 = vld [vmem:[%s2419] sm:$0xff]
  %v2421 = vadd.f32 %v2420, %v2346
  %v2422 = vxor.u32 %v2421, 2147483648
  %v2423 = vmul.f32 %v2422, 1.442695
  %v2424 = vpow.pop %v2423
  %v2425 = vadd.f32 %v2424, 1.0
  %v2426 = vrcp.pop %v2425
  %v2427 = vmul.f32 1.0, %v2426
  %s2428 = scalar_lea.vmem [#allocation3], 56
  %v2429 = vld [vmem:[%s2428] sm:$0xff]
  %v2430 = vadd.f32 %v2429, %v2416
  %v2431 = vxor.u32 %v2430, 2147483648
  %v2432 = vmul.f32 %v2431, 1.442695
  %v2433 = vpow.pop %v2432
  %v2434 = vadd.f32 %v2433, 1.0
  %v2435 = vrcp.pop %v2434
  %v2436 = vmul.f32 1.0, %v2435
  %s2437 = scalar_lea.vmem [#allocation4], 56
  %v2438 = vld [vmem:[%s2437] sm:$0xff]
  %2439 = vmatprep.subr.mxu0 0.0
  %2440 = vmatpush1.msra.mxu0 0.0
  %2441 = vmatprep.subr.mxu0 0.0
  %2442 = vmatpush1.msra.mxu0 0.0
  %2443 = vmatprep.subr.mxu0 0.0
  %2444 = vmatpush1.msra.mxu0 0.0
  %2445 = vmatprep.subr.mxu0 0.0
  %2446 = vmatpush1.msra.mxu0 0.0
  %2447 = vmatprep.subr.mxu0 0.0
  %2448 = vmatpush1.msra.mxu0 0.0
  %2449 = vmatprep.subr.mxu0 0.0
  %2450 = vmatpush1.msra.mxu0 0.0
  %2451 = vmatprep.subr.mxu0 0.0
  %2452 = vmatpush1.msra.mxu0 0.0
  %2453 = vmatprep.subr.mxu0 0.0
  %2454 = vmatpush1.msra.mxu0 0.0
  %2455 = vmatprep.subr.mxu0 0.0
  %2456 = vmatpush1.msra.mxu0 0.0
  %2457 = vmatprep.subr.mxu0 0.0
  %2458 = vmatpush1.msra.mxu0 0.0
  %2459 = vmatprep.subr.mxu0 0.0
  %2460 = vmatpush1.msra.mxu0 0.0
  %2461 = vmatprep.subr.mxu0 0.0
  %2462 = vmatpush1.msra.mxu0 0.0
  %2463 = vmatprep.subr.mxu0 0.0
  %2464 = vmatpush1.msra.mxu0 %v31
  %2465 = vmatprep.subr.mxu0 0.0
  %2466 = vmatpush1.msra.mxu0 %v30
  %2467 = vmatprep.subr.mxu0 0.0
  %2468 = vmatpush1.msra.mxu0 %v29
  %2469 = vmatprep.subr.mxu0 0.0
  %2470 = vmatpush1.msra.mxu0 %v28
  %2471 = vmatprep.subr.mxu0 0.0
  %2472 = vmatpush2.msra.mxu0 0.0
  %2473 = vmatprep.subr.mxu0 0.0
  %2474 = vmatpush2.msra.mxu0 0.0
  %2475 = vmatprep.subr.mxu0 0.0
  %2476 = vmatpush2.msra.mxu0 0.0
  %2477 = vmatprep.subr.mxu0 0.0
  %2478 = vmatpush2.msra.mxu0 0.0
  %2479 = vmatprep.subr.mxu0 0.0
  %2480 = vmatpush2.msra.mxu0 0.0
  %2481 = vmatprep.subr.mxu0 0.0
  %2482 = vmatpush2.msra.mxu0 0.0
  %2483 = vmatprep.subr.mxu0 0.0
  %2484 = vmatpush2.msra.mxu0 0.0
  %2485 = vmatprep.subr.mxu0 0.0
  %2486 = vmatpush2.msra.mxu0 0.0
  %2487 = vmatprep.subr.mxu0 0.0
  %2488 = vmatpush2.msra.mxu0 0.0
  %2489 = vmatprep.subr.mxu0 0.0
  %2490 = vmatpush2.msra.mxu0 0.0
  %2491 = vmatprep.subr.mxu0 0.0
  %2492 = vmatpush2.msra.mxu0 0.0
  %2493 = vmatprep.subr.mxu0 0.0
  %2494 = vmatpush2.msra.mxu0 0.0
  %2495 = vmatprep.subr.mxu0 0.0
  %2496 = vmatpush2.msra.mxu0 0.0
  %2497 = vmatprep.subr.mxu0 0.0
  %2498 = vmatpush2.msra.mxu0 0.0
  %2499 = vmatprep.subr.mxu0 0.0
  %2500 = vmatpush2.msra.mxu0 0.0
  %2501 = vmatprep.subr.mxu0 0.0
  %2502 = vmatpush2.msra.mxu0 0.0
  %2503 = vmatprep.mubr.f32.mxu0 0.0
  %2504 = vmatmul.mubr.f32.gmra.mxu0 %v2277
  %v2505 = vpop.f32.mrf.mxu0
  %v2506 = vadd.f32 %v745, %v2505
  %v2507 = vpop.f32.mrf.mxu0
  %2508 = vdwg.mxu0
  %v2509 = vmul.f32 %v2427, %v2506
  %v2510 = vadd.f32 %v2438, %v2509
  %v2511 = vtanh.pop %v2510
  %v2512 = vsub.f32 1.0, %v2436
  %v2513 = vmul.f32 %v2512, %v2511
  %v2514 = vmul.f32 %v2436, %v2273
  %v2515 = vadd.f32 %v2513, %v2514
  %s2516 = scalar_lea.vmem [#allocation5], 56
  %2517 = vst.msk [vmem:[%s2516] sm:$0xff] %vm227, %v2515
  %2518 = vst.msk [vmem:[%s5] sm:$0xff] %vm227, %v2515
  %v2519 = vld [vmem:[#allocation5] sm:$0xff]
  %v2520 = vld [vmem:[#allocation5 + $0x8] sm:$0xff]
  %v2521 = vld [vmem:[#allocation5 + $0x10] sm:$0xff]
  %v2522 = vld [vmem:[#allocation5 + $0x18] sm:$0xff]
  %v2523 = vld [vmem:[#allocation5 + $0x20] sm:$0xff]
  %v2524 = vld [vmem:[#allocation5 + $0x28] sm:$0xff]
  %v2525 = vld [vmem:[#allocation5 + $0x30] sm:$0xff]
  %v2526 = vld [vmem:[#allocation5 + $0x38] sm:$0xff]
  %v2527 = vlaneseq
  %v2528 = vshrl.u32 %v2527, 7
  %v2529 = vsub.s32 0, %v2528
  %v2530 = vrot.slane %v40, %v2529
  %v2532 = vsel %vm227, %v2519, 0
  %v2535 = vsel %vm227, %v2520, 0
  %v2538 = vsel %vm227, %v2521, 0
  %v2541 = vsel %vm227, %v2522, 0
  %v2544 = vsel %vm227, %v2523, 0
  %v2547 = vsel %vm227, %v2524, 0
  %v2550 = vsel %vm227, %v2525, 0
  %v2553 = vsel %vm227, %v2526, 0
  %v2556 = vsel %vm227, %v35, 0
  %2558 = vmatprep.subr.mxu0 0.0
  %2559 = vmatpush1.xpose.msra.mxu0 0.0
  %2560 = vmatprep.subr.mxu0 0.0
  %2561 = vmatpush1.xpose.msra.mxu0 0.0
  %2562 = vmatprep.subr.mxu0 0.0
  %2563 = vmatpush1.xpose.msra.mxu0 0.0
  %2564 = vmatprep.subr.mxu0 0.0
  %2565 = vmatpush1.xpose.msra.mxu0 0.0
  %2566 = vmatprep.subr.mxu0 0.0
  %2567 = vmatpush1.xpose.msra.mxu0 0.0
  %2568 = vmatprep.subr.mxu0 0.0
  %2569 = vmatpush1.xpose.msra.mxu0 0.0
  %2570 = vmatprep.subr.mxu0 0.0
  %2571 = vmatpush1.xpose.msra.mxu0 0.0
  %2572 = vmatprep.subr.mxu0 0.0
  %2573 = vmatpush1.xpose.msra.mxu0 0.0
  %2574 = vmatprep.subr.mxu0 0.0
  %2575 = vmatpush1.xpose.msra.mxu0 0.0
  %2576 = vmatprep.subr.mxu0 0.0
  %2577 = vmatpush1.xpose.msra.mxu0 0.0
  %2578 = vmatprep.subr.mxu0 0.0
  %2579 = vmatpush1.xpose.msra.mxu0 0.0
  %2580 = vmatprep.subr.mxu0 0.0
  %2581 = vmatpush1.xpose.msra.mxu0 0.0
  %2582 = vmatprep.subr.mxu0 0.0
  %2583 = vmatpush1.xpose.msra.mxu0 0.0
  %2584 = vmatprep.subr.mxu0 0.0
  %2585 = vmatpush1.xpose.msra.mxu0 0.0
  %2586 = vmatprep.subr.mxu0 0.0
  %2587 = vmatpush1.xpose.msra.mxu0 0.0
  %2588 = vmatprep.subr.mxu0 0.0
  %2589 = vmatpush1.xpose.msra.mxu0 %v2556
  %2590 = vmatprep.subr.mxu0 0.0
  %2591 = vmatpush2.xpose.msra.mxu0 0.0
  %2592 = vmatprep.subr.mxu0 0.0
  %2593 = vmatpush2.xpose.msra.mxu0 0.0
  %2594 = vmatprep.subr.mxu0 0.0
  %2595 = vmatpush2.xpose.msra.mxu0 0.0
  %2596 = vmatprep.subr.mxu0 0.0
  %2597 = vmatpush2.xpose.msra.mxu0 0.0
  %2598 = vmatprep.subr.mxu0 0.0
  %2599 = vmatpush2.xpose.msra.mxu0 0.0
  %2600 = vmatprep.subr.mxu0 0.0
  %2601 = vmatpush2.xpose.msra.mxu0 0.0
  %2602 = vmatprep.subr.mxu0 0.0
  %2603 = vmatpush2.xpose.msra.mxu0 0.0
  %2604 = vmatprep.subr.mxu0 0.0
  %2605 = vmatpush2.xpose.msra.mxu0 0.0
  %2606 = vmatprep.subr.mxu0 0.0
  %2607 = vmatpush2.xpose.msra.mxu0 0.0
  %2608 = vmatprep.subr.mxu0 0.0
  %2609 = vmatpush2.xpose.msra.mxu0 0.0
  %2610 = vmatprep.subr.mxu0 0.0
  %2611 = vmatpush2.xpose.msra.mxu0 0.0
  %2612 = vmatprep.subr.mxu0 0.0
  %2613 = vmatpush2.xpose.msra.mxu0 0.0
  %2614 = vmatprep.subr.mxu0 0.0
  %2615 = vmatpush2.xpose.msra.mxu0 0.0
  %2616 = vmatprep.subr.mxu0 0.0
  %2617 = vmatpush2.xpose.msra.mxu0 0.0
  %2618 = vmatprep.subr.mxu0 0.0
  %2619 = vmatpush2.xpose.msra.mxu0 0.0
  %2620 = vmatprep.subr.mxu0 0.0
  %2621 = vmatpush2.xpose.msra.mxu0 0.0
  %2622 = vmatprep.mubr.f32.mxu0 0.0
  %2623 = vmatmul.mubr.f32.gmra.mxu0 %v2532
  %v2624 = vpop.f32.mrf.mxu0
  %v2625 = vadd.f32 %v2530, %v2624
  %v2626 = vpop.f32.mrf.mxu0
  %2627 = vmatprep.mubr.f32.mxu0 0.0
  %2628 = vmatmul.mubr.f32.gmra.mxu0 %v2535
  %v2629 = vpop.f32.mrf.mxu0
  %v2630 = vadd.f32 %v2530, %v2629
  %v2631 = vpop.f32.mrf.mxu0
  %2632 = vmatprep.mubr.f32.mxu0 0.0
  %2633 = vmatmul.mubr.f32.gmra.mxu0 %v2538
  %v2634 = vpop.f32.mrf.mxu0
  %v2635 = vadd.f32 %v2530, %v2634
  %v2636 = vpop.f32.mrf.mxu0
  %2637 = vmatprep.mubr.f32.mxu0 0.0
  %2638 = vmatmul.mubr.f32.gmra.mxu0 %v2541
  %v2639 = vpop.f32.mrf.mxu0
  %v2640 = vadd.f32 %v2530, %v2639
  %v2641 = vpop.f32.mrf.mxu0
  %2642 = vmatprep.mubr.f32.mxu0 0.0
  %2643 = vmatmul.mubr.f32.gmra.mxu0 %v2544
  %v2644 = vpop.f32.mrf.mxu0
  %v2645 = vadd.f32 %v2530, %v2644
  %v2646 = vpop.f32.mrf.mxu0
  %2647 = vmatprep.mubr.f32.mxu0 0.0
  %2648 = vmatmul.mubr.f32.gmra.mxu0 %v2547
  %v2649 = vpop.f32.mrf.mxu0
  %v2650 = vadd.f32 %v2530, %v2649
  %v2651 = vpop.f32.mrf.mxu0
  %2652 = vmatprep.mubr.f32.mxu0 0.0
  %2653 = vmatmul.mubr.f32.gmra.mxu0 %v2550
  %v2654 = vpop.f32.mrf.mxu0
  %v2655 = vadd.f32 %v2530, %v2654
  %v2656 = vpop.f32.mrf.mxu0
  %2657 = vmatprep.mubr.f32.mxu0 0.0
  %2658 = vmatmul.mubr.f32.gmra.mxu0 %v2553
  %v2659 = vpop.f32.mrf.mxu0
  %v2660 = vadd.f32 %v2530, %v2659
  %v2661 = vpop.f32.mrf.mxu0
  %2662 = vdwg.mxu0
  %s2663 = scalar_lea.vmem %s4, 128
  %2664 = vst.msk [vmem:[%s2663] sm:$0xff] %vm107, %v2625
  %2665 = vst.msk [vmem:[%s2663 + $0x8] sm:$0xff] %vm107, %v2630
  %2666 = vst.msk [vmem:[%s2663 + $0x10] sm:$0xff] %vm107, %v2635
  %2667 = vst.msk [vmem:[%s2663 + $0x18] sm:$0xff] %vm107, %v2640
  %2668 = vst.msk [vmem:[%s2663 + $0x20] sm:$0xff] %vm107, %v2645
  %2669 = vst.msk [vmem:[%s2663 + $0x28] sm:$0xff] %vm107, %v2650
  %2670 = vst.msk [vmem:[%s2663 + $0x30] sm:$0xff] %vm107, %v2655
  %2671 = vst.msk [vmem:[%s2663 + $0x38] sm:$0xff] %vm107, %v2660
  // Predicated region
  $region18: #{decoder_forward.1} parent=0 // pred_check
    _
  $region19: #{decoder_forward.1} parent=0 // pred_check_branch
    %2673 = sbr.rel (0) target = $region21
  $region20: #{decoder_forward.1} parent=0 // pred_region
    _
  $region21: #{decoder_forward.1} parent=0 // pred_fallthru
    _
  // Predicated region
  $region22: #{decoder_forward.1} parent=0 // pred_check
    _
  $region23: #{decoder_forward.1} parent=0 // pred_check_branch
    %2675 = sbr.rel (0) target = $region25
  $region24: #{decoder_forward.1} parent=0 // pred_region
    _
  $region25: #{decoder_forward.1} parent=0 // pred_fallthru
    _
  // Predicated region
  $region26: #{decoder_forward.1} parent=0 // pred_check
    _
  $region27: #{decoder_forward.1} parent=0 // pred_check_branch
    %2677 = sbr.rel (0) target = $region29
  $region28: #{decoder_forward.1} parent=0 // pred_region
    _
  $region29: #{decoder_forward.1} parent=0 // pred_fallthru
    _
  // Predicated region
  $region30: #{decoder_forward.1} parent=0 // pred_check
    _
  $region31: #{decoder_forward.1} parent=0 // pred_check_branch
    %2679 = sbr.rel (0) target = $region33
  $region32: #{decoder_forward.1} parent=0 // pred_region
    _
  $region33: #{decoder_forward.1} parent=0 // pred_fallthru
    _

</llo_original>
